<compile_context>
chip_gen: v6e
topology: v6e:2x2x1
jax: 0.10.0
libtpu: 0.0.40
codegen_flags: <defaults>
</compile_context>

<pallas_src>
import functools

import jax
import jax.numpy as jnp
from jax.experimental import pallas as pl
from jax.experimental.pallas import tpu as pltpu

NC = 80                     # number of classes (YOLOv5 default) -> no = NC + 5
EPS = 1e-5                  # nn.BatchNorm2d default eps
LANE = 128                  # lane width; all channel dims are padded to this
NEG_BIG = -1e30             # -inf surrogate for max-pool border padding (bf16-safe)


def _cdiv(a, b):
    return -(-a // b)


def _cp(c):
    """Channel count padded up to a multiple of 128 (lane-dense)."""
    return ((c + LANE - 1) // LANE) * LANE


def _seg(c):
    return [(c, _cp(c))]


def autopad(k, p=None):
    return k // 2 if p is None else p


# ---------------------------------------------------------------------------
# Generation-aware sizing
# ---------------------------------------------------------------------------
def _vmem_capacity_bytes():
    try:
        return int(pltpu.get_tpu_info().vmem_capacity_bytes)
    except Exception:
        return 64 * 1024 * 1024          # conservative (v7x-class) fallback


def _is_narrow_mxu():
    # v2-v5 TensorCores have 128-wide MXUs; v6e/v7x are 256-wide.
    try:
        kind = jax.devices()[0].device_kind.lower()
        return any(t in kind for t in ("v2", "v3", "v4", "v5"))
    except Exception:
        return False


_VMEM_CAP = _vmem_capacity_bytes()
VMEM_LIMIT = min(int(_VMEM_CAP * 0.75), 100 * 1024 * 1024)   # 96MiB on 128MiB parts, 48MiB on v7x
TILE_BUDGET = min(int(_VMEM_CAP * 0.35), 28 * 1024 * 1024)   # per-step working-set target
WIDE_MXU = not _is_narrow_mxu()


def _cparams(*sem):
    return pltpu.CompilerParams(dimension_semantics=sem,
                                vmem_limit_bytes=VMEM_LIMIT)


def _pick_tile(M):
    """M tile for the 1x1-conv / detect-head matmuls: prefer TM >= 256 (pad M up),
    >= 2 programs when M allows; never drop below TM=8."""
    if M >= 1024:
        tm = 512
    elif M > 256:
        tm = 256
    else:
        tm = max(8, ((M + 7) // 8) * 8)
        return tm, tm
    return tm, _cdiv(M, tm) * tm


def _pick_tn(Np):
    if WIDE_MXU and Np % 256 == 0:
        return 256
    return 128 if Np % 128 == 0 else Np


def _pick_tk(Kp):
    for tk in (512, 256, 128):
        if Kp % tk == 0:
            return min(tk, Kp)
    return Kp


# ---------------------------------------------------------------------------
# Pallas kernels
# ---------------------------------------------------------------------------
def _mm_affine_kernel(x_ref, w_ref, g_ref, b_ref, o_ref, acc_ref, *, silu):
    """1x1 conv tile with K grid axis: y = (x @ w) * gamma + beta ; optional SiLU."""
    @pl.when(pl.program_id(2) == 0)
    def _():
        acc_ref[...] = jnp.zeros_like(acc_ref)

    acc_ref[...] += jnp.dot(x_ref[...], w_ref[...], preferred_element_type=jnp.float32)

    @pl.when(pl.program_id(2) == pl.num_programs(2) - 1)
    def _():
        y = acc_ref[...] * g_ref[...] + b_ref[...]
        if silu:
            y = y * jax.nn.sigmoid(y)
        o_ref[...] = y.astype(o_ref.dtype)


def _convkxk_kernel(x_ref, w_ref, g_ref, b_ref, o_ref, *, groups, cinp, th, wo, silu):
    """Fused kxk conv + BN affine + SiLU on one (image, H-tile).

    x_ref: (1, th+halo, Wq, P*cinp) phase-packed (space-to-depth) bf16 input tile
    w_ref: (G, Kmax, Np) bf16 grouped taps;  g/b: (1, Np) f32;  o_ref: (1, th, wo, Np)
    groups: static tuple of (q, t, ph_lo, ph_hi) tap groups.
    """
    npad = w_ref.shape[2]
    acc = jnp.zeros((th * wo, npad), jnp.float32)
    for gi, (q, t, lo, hi) in enumerate(groups):
        kg = (hi - lo) * cinp
        patch = x_ref[0, q:q + th, t:t + wo, lo * cinp:hi * cinp]
        acc = acc + jnp.dot(patch.reshape(th * wo, kg), w_ref[gi, 0:kg, :],
                            preferred_element_type=jnp.float32)
    y = acc * g_ref[...] + b_ref[...]
    if silu:
        y = y * jax.nn.sigmoid(y)
    o_ref[0] = y.reshape(th, wo, npad).astype(o_ref.dtype)


def _sppf_kernel(x_ref, w_ref, g_ref, b_ref, o_ref, *, k, th, w, wide):
    """Fused SPPF on one (image, H-tile): 3 cascaded kxk stride-1 max pools computed
    as valid separable pooling over a NEG_BIG pre-padded tile (no in-kernel concat
    padding), then the concat + cv2 1x1 conv + BN + SiLU folded into partial dots."""
    pad = k // 2
    halo = 3 * pad
    cp = x_ref.shape[3]
    v = x_ref[0]                                   # (th+2*halo, w+2*halo, cp)

    def pool(u):
        hh = u.shape[0] - (k - 1)
        r = u[0:hh]
        for d in range(1, k):
            r = jnp.maximum(r, u[d:d + hh])
        ww = u.shape[1] - (k - 1)
        c = r[:, 0:ww]
        for d in range(1, k):
            c = jnp.maximum(c, r[:, d:d + ww])
        return c

    y1 = pool(v)
    y2 = pool(y1)
    y3 = pool(y2)
    xc = v[halo:halo + th, halo:halo + w].reshape(th * w, cp)
    y1c = y1[2 * pad:2 * pad + th, 2 * pad:2 * pad + w].reshape(th * w, cp)
    y2c = y2[pad:pad + th, pad:pad + w].reshape(th * w, cp)
    y3c = y3[0:th, 0:w].reshape(th * w, cp)
    if wide:   # two K=2*cp dots fill the 256-wide v6e/v7x MXU
        acc = (jnp.dot(jnp.concatenate([xc, y1c], axis=-1), w_ref[0],
                       preferred_element_type=jnp.float32)
               + jnp.dot(jnp.concatenate([y2c, y3c], axis=-1), w_ref[1],
                         preferred_element_type=jnp.float32))
    else:      # four native K=128 dots (v5e 4x128^2 MXU)
        acc = (jnp.dot(xc, w_ref[0], preferred_element_type=jnp.float32)
               + jnp.dot(y1c, w_ref[1], preferred_element_type=jnp.float32)
               + jnp.dot(y2c, w_ref[2], preferred_element_type=jnp.float32)
               + jnp.dot(y3c, w_ref[3], preferred_element_type=jnp.float32))
    y = acc * g_ref[...] + b_ref[...]
    y = y * jax.nn.sigmoid(y)
    o_ref[0] = y.reshape(th, w, w_ref.shape[2]).astype(o_ref.dtype)


def _detect_head_kernel(x_ref, w_ref, b_ref, a_ref, raw_ref, dec_ref,
                        *, no, na, stride, nx, ny, tm, tn):
    """Detect head: 1x1 conv (+bias) with the YOLO sigmoid/grid decode fused into the
    epilogue.  Grid offsets rebuilt from iota; anchors*stride live in SMEM."""
    y = jnp.dot(x_ref[...], w_ref[...], preferred_element_type=jnp.float32) + b_ref[...]
    raw_ref[...] = y.astype(raw_ref.dtype)          # raw (pre-sigmoid) features, bf16

    row = jax.lax.broadcasted_iota(jnp.int32, (tm, tn), 0) + pl.program_id(0) * tm
    col = jax.lax.broadcasted_iota(jnp.int32, (tm, tn), 1) + pl.program_id(1) * tn

    # f32 floor-div decode is exact while B*ny*nx < 2^24 (always true for YOLO maps).
    colf = col.astype(jnp.float32)
    a = jnp.floor(colf / float(no)).astype(jnp.int32)
    o = col - a * no
    rowf = row.astype(jnp.float32)
    xq = jnp.floor(rowf / float(nx))
    gx = rowf - xq * float(nx) - 0.5
    gy = xq - jnp.floor(xq / float(ny)) * float(ny) - 0.5

    s_ = jax.nn.sigmoid(y)
    aw = a_ref[2 * (na - 1)]
    ah = a_ref[2 * (na - 1) + 1]
    for ai in range(na - 2, -1, -1):
        aw = jnp.where(a == ai, a_ref[2 * ai], aw)
        ah = jnp.where(a == ai, a_ref[2 * ai + 1], ah)

    xy = jnp.where(o == 0, s_ * 2.0 + gx, s_ * 2.0 + gy) * stride
    wh = (s_ * 2.0) ** 2 * jnp.where(o == 2, aw, ah)
    dec_ref[...] = jnp.where(o < 2, xy, jnp.where(o < 4, wh, s_))


# ---------------------------------------------------------------------------
# Pallas wrappers (NHWC, channel-padded, bf16 activations)
# ---------------------------------------------------------------------------
def _conv1x1(p, x, silu=True):
    B, H, W, Kp = x.shape
    w = p['w']                                     # (Kp, Np) bf16
    Np = w.shape[1]
    M = B * H * W
    TM, Mp = _pick_tile(M)
    TN = _pick_tn(Np)
    TK = _pick_tk(Kp)
    x2d = x.reshape(M, Kp)
    if Mp != M:
        x2d = jnp.pad(x2d, ((0, Mp - M), (0, 0)))
    out = pl.pallas_call(
        functools.partial(_mm_affine_kernel, silu=silu),
        out_shape=jax.ShapeDtypeStruct((Mp, Np), jnp.bfloat16),
        grid=(Mp // TM, Np // TN, Kp // TK),
        in_specs=[
            pl.BlockSpec((TM, TK), lambda i, j, kk: (i, kk)),
            pl.BlockSpec((TK, TN), lambda i, j, kk: (kk, j)),
            pl.BlockSpec((1, TN), lambda i, j, kk: (0, j)),
            pl.BlockSpec((1, TN), lambda i, j, kk: (0, j)),
        ],
        out_specs=pl.BlockSpec((TM, TN), lambda i, j, kk: (i, j)),
        scratch_shapes=[pltpu.VMEM((TM, TN), jnp.float32)],
        compiler_params=_cparams("parallel", "parallel", "arbitrary"),
    )(x2d, w, p['gamma'], p['beta'])
    if Mp != M:
        out = out[:M]
    return out.reshape(B, H, W, Np)


def _convkxk(p, x, silu=True):
    B, H, W, cinp = x.shape
    k, s, pad = p['k'], p['s'], p['p']
    P = s * s
    Ho = (H + 2 * pad - k) // s + 1
    Wo = (W + 2 * pad - k) // s + 1
    halo = (k - 1) // s
    Wq = Wo + halo
    Np = p['w'].shape[2]
    kmax = p['w'].shape[1]

    # H-tile size under the per-step VMEM budget (whole image when it fits).
    in_row = Wq * P * cinp * 2
    other_row = 2 * Wo * Np * 2 + Wo * Np * 4 + Wo * kmax * 2
    TH = Ho
    while TH > 8 and 2 * (TH + halo) * in_row + TH * other_row > TILE_BUDGET:
        TH = _cdiv(TH, 2)
    nH = _cdiv(Ho, TH)

    Hq = nH * TH + halo
    pb = s * Hq - H - pad
    pr = s * Wq - W - pad
    assert pb >= 0 and pr >= 0
    xp = jnp.pad(x, ((0, 0), (pad, pb), (pad, pr), (0, 0)))
    # Space-to-depth phase packing along the channel (lane) axis: K = s*s*cinp.
    # TODO(synk): fold this repack (and the NCHW preamble) into a Pallas repack
    # kernel / strided in-kernel reads to save one HBM round trip per stride-2 conv.
    xp = (xp.reshape(B, Hq, s, Wq, s, cinp)
            .transpose(0, 1, 3, 2, 4, 5)
            .reshape(B, Hq, Wq, P * cinp))
    if nH == 1:
        xt = xp.reshape(B, TH + halo, Wq, P * cinp)
    else:                                          # duplicate the halo rows per tile
        xt = jnp.concatenate(
            [xp[:, h * TH:h * TH + TH + halo][:, None] for h in range(nH)], axis=1)
        xt = xt.reshape(B * nH, TH + halo, Wq, P * cinp)

    out = pl.pallas_call(
        functools.partial(_convkxk_kernel, groups=p['groups'], cinp=cinp,
                          th=TH, wo=Wo, silu=silu),
        out_shape=jax.ShapeDtypeStruct((B * nH, TH, Wo, Np), jnp.bfloat16),
        grid=(B * nH,),
        in_specs=[
            pl.BlockSpec((1, TH + halo, Wq, P * cinp), lambda g: (g, 0, 0, 0)),
            pl.BlockSpec(p['w'].shape, lambda g: (0, 0, 0)),
            pl.BlockSpec((1, Np), lambda g: (0, 0)),
            pl.BlockSpec((1, Np), lambda g: (0, 0)),
        ],
        out_specs=pl.BlockSpec((1, TH, Wo, Np), lambda g: (g, 0, 0, 0)),
        compiler_params=_cparams("parallel"),
    )(xt, p['w'], p['gamma'], p['beta'])
    out = out.reshape(B, nH * TH, Wo, Np)
    if nH * TH != Ho:
        out = out[:, :Ho]
    return out


def conv_forward(p, x, silu=True):
    """Conv(c1,c2,k,s) + BatchNorm2d + SiLU (fused, eval mode), NHWC padded channels."""
    if p['k'] == 1:
        return _conv1x1(p, x, silu)
    return _convkxk(p, x, silu)


def sppf_forward(p, x):
    x = conv_forward(p['cv1'], x)                  # (B, H, W, 128) bf16
    B, H, W, cp = x.shape
    k = p['k']
    halo = 3 * (k // 2)                            # receptive field of 3 cascaded pools
    Np = p['w2'].shape[2]

    in_row = (W + 2 * halo) * cp * 2
    other_row = 2 * W * Np * 2 + W * Np * 4 + 4 * (W + 2 * halo) * cp * 2
    TH = H
    while TH > 8 and 2 * (TH + 2 * halo) * in_row + TH * other_row > TILE_BUDGET:
        TH = _cdiv(TH, 2)
    nH = _cdiv(H, TH)

    # NEG_BIG (== -inf for the pool) border padding done ONCE here; interior H-tile
    # boundaries get real halo rows, image borders get NEG_BIG.
    xp = jnp.pad(x, ((0, 0), (halo, halo + nH * TH - H), (halo, halo), (0, 0)),
                 constant_values=NEG_BIG)
    if nH == 1:
        xt = xp
    else:
        xt = jnp.concatenate(
            [xp[:, h * TH:h * TH + TH + 2 * halo][:, None] for h in range(nH)], axis=1)
        xt = xt.reshape(B * nH, TH + 2 * halo, W + 2 * halo, cp)

    out = pl.pallas_call(
        functools.partial(_sppf_kernel, k=k, th=TH, w=W, wide=(p['w2'].shape[0] == 2)),
        out_shape=jax.ShapeDtypeStruct((B * nH, TH, W, Np), jnp.bfloat16),
        grid=(B * nH,),
        in_specs=[
            pl.BlockSpec((1, TH + 2 * halo, W + 2 * halo, cp), lambda g: (g, 0, 0, 0)),
            pl.BlockSpec(p['w2'].shape, lambda g: (0, 0, 0)),
            pl.BlockSpec((1, Np), lambda g: (0, 0)),
            pl.BlockSpec((1, Np), lambda g: (0, 0)),
        ],
        out_specs=pl.BlockSpec((1, TH, W, Np), lambda g: (g, 0, 0, 0)),
        compiler_params=_cparams("parallel"),
    )(xt, p['w2'], p['gamma2'], p['beta2'])
    out = out.reshape(B, nH * TH, W, Np)
    if nH * TH != H:
        out = out[:, :H]
    return out


def bottleneck_forward(p, x):
    y = conv_forward(p['cv2'], conv_forward(p['cv1'], x))
    return x + y if p['add'] else y


def c3_forward(p, x):
    a = conv_forward(p['cv1'], x)
    for bp in p['m']:
        a = bottleneck_forward(bp, a)
    b = conv_forward(p['cv2'], x)
    # channel-dim (lane) concat of two 128-padded blocks; cv3's weight was packed
    # to match this padded layout at init time.
    return conv_forward(p['cv3'], jnp.concatenate([a, b], axis=-1))


def detect_forward(p, xs, strides):
    na, no = p['na'], p['no']
    z, feats = [], []
    for i, x in enumerate(xs):
        B, ny, nx, Cp = x.shape
        head = p['m'][i]
        Np = head['w'].shape[1]
        M = B * ny * nx
        TM, Mp = _pick_tile(M)
        TN = _pick_tn(Np)
        x2d = x.reshape(M, Cp)
        if Mp != M:
            x2d = jnp.pad(x2d, ((0, Mp - M), (0, 0)))
        a_sm = (p['anchors'][i] * strides[i]).reshape(-1).astype(jnp.float32)
        a_sm = jnp.pad(a_sm, (0, 8 - a_sm.shape[0]))

        raw, dec = pl.pallas_call(
            functools.partial(_detect_head_kernel, no=no, na=na,
                              stride=float(strides[i]), nx=nx, ny=ny, tm=TM, tn=TN),
            out_shape=(jax.ShapeDtypeStruct((Mp, Np), jnp.bfloat16),
                       jax.ShapeDtypeStruct((Mp, Np), jnp.float32)),
            grid=(Mp // TM, Np // TN),
            in_specs=[
                pl.BlockSpec((TM, Cp), lambda mi, ni: (mi, 0)),
                pl.BlockSpec((Cp, TN), lambda mi, ni: (0, ni)),
                pl.BlockSpec((1, TN), lambda mi, ni: (0, ni)),
                pl.BlockSpec(memory_space=pltpu.MemorySpace.SMEM),
            ],
            out_specs=(pl.BlockSpec((TM, TN), lambda mi, ni: (mi, ni)),
                       pl.BlockSpec((TM, TN), lambda mi, ni: (mi, ni))),
            compiler_params=_cparams("parallel", "parallel"),
        )(x2d, head['w'], head['b'], a_sm)

        if Mp != M:
            raw, dec = raw[:M], dec[:M]
        nreal = na * no
        # TODO(synk): fold this permute into the kernel's out BlockSpec / store pattern.
        raw = raw[:, :nreal].reshape(B, ny, nx, na, no).transpose(0, 3, 1, 2, 4)
        dec = (dec[:, :nreal].reshape(B, ny, nx, na, no)
               .transpose(0, 3, 1, 2, 4).reshape(B, na * ny * nx, no))
        feats.append(raw)
        z.append(dec)
    # eval, export=False -> (cat(z, 1), x)
    return jnp.concatenate(z, axis=1), feats


def detection_model_forward(params, im):
    # NCHW f32 -> NHWC, channel-padded to 128, bf16 (one transpose for the whole net)
    # TODO(synk): fuse this preamble into the first conv's Pallas kernel.
    x = jnp.transpose(im, (0, 2, 3, 1))
    B, H, W, C = x.shape
    x = jnp.pad(x, ((0, 0), (0, 0), (0, 0), (0, _cp(C) - C))).astype(jnp.bfloat16)

    x = conv_forward(params['c0'], x)
    x = conv_forward(params['c1'], x)
    x = c3_forward(params['c2'], x)
    x = conv_forward(params['c3'], x)
    p3 = c3_forward(params['c4'], x)
    x = conv_forward(params['c5'], p3)
    p4 = sppf_forward(params['c6'], x)
    return detect_forward(params['detect'], [p3, p4], params['strides'])


# ---------------------------------------------------------------------------
# Parameter initialization (deterministic, synthetic; padded/packed at init)
# ---------------------------------------------------------------------------
def _bn_affine(key, c2):
    kg, kb, km, kv = jax.random.split(key, 4)
    bn_w = 1.0 + 0.1 * jax.random.normal(kg, (c2,), jnp.float32)
    bn_b = 0.05 * jax.random.normal(kb, (c2,), jnp.float32)
    mean = 0.05 * jax.random.normal(km, (c2,), jnp.float32)
    var = 1.0 + 0.1 * jax.random.uniform(kv, (c2,), jnp.float32)
    gamma = bn_w / jnp.sqrt(var + EPS)
    beta = bn_b - mean * gamma
    return gamma, beta


def _pad_affine(v, c2, c2p):
    return jnp.zeros((1, c2p), jnp.float32).at[0, :c2].set(v)


def _tap_groups(k, s, wide):
    """Static tap grouping.  wide=True fuses all taps sharing the same output-space
    offset (q, t) into one K = n_phases*cinp dot; wide=False keeps one dot per tap."""
    groups = []
    if wide and s > 1:
        qmax = (k - 1) // s + 1
        for q in range(qmax):
            for t in range(qmax):
                taps, hi = [], 0
                for dy in range(q * s, min(q * s + s, k)):
                    for dx in range(t * s, min(t * s + s, k)):
                        ph = (dy % s) * s + (dx % s)
                        taps.append((dy, dx, ph))
                        hi = max(hi, ph + 1)
                groups.append((q, t, 0, hi, tuple(taps)))
    else:
        for dy in range(k):
            for dx in range(k):
                ph = (dy % s) * s + (dx % s)
                groups.append((dy // s, dx // s, ph, ph + 1, ((dy, dx, ph),)))
    return groups


def init_conv(key, in_segs, c2, k=1, s=1, p=None):
    p = autopad(k, p)
    c1 = sum(r for r, _ in in_segs)
    c2p = _cp(c2)
    kw, kbn = jax.random.split(key)
    w = jax.random.normal(kw, (c2, c1, k, k), jnp.float32) * (2.0 / (c1 * k * k)) ** 0.5
    gamma, beta = _bn_affine(kbn, c2)
    out = {'k': k, 's': s, 'p': p, 'c2': c2, 'c2p': c2p,
           'gamma': _pad_affine(gamma, c2, c2p),
           'beta': _pad_affine(beta, c2, c2p)}
    if k == 1:
        Kp = sum(pp for _, pp in in_segs)
        wp = jnp.zeros((Kp, c2p), jnp.float32)
        off_r = off_p = 0
        for real, padded in in_segs:
            wp = wp.at[off_p:off_p + real, :c2].set(w[:, off_r:off_r + real, 0, 0].T)
            off_r += real
            off_p += padded
        out['w'] = wp.astype(jnp.bfloat16)
    else:
        assert len(in_segs) == 1
        cinp = in_segs[0][1]
        groups = _tap_groups(k, s, WIDE_MXU)
        kmax = max(hi - lo for _, _, lo, hi, _ in groups) * cinp
        wp = jnp.zeros((len(groups), kmax, c2p), jnp.float32)
        for gi, (q, t, lo, hi, taps) in enumerate(groups):
            for dy, dx, ph in taps:
                off = (ph - lo) * cinp
                wp = wp.at[gi, off:off + c1, :c2].set(w[:, :, dy, dx].T)
        out['w'] = wp.astype(jnp.bfloat16)
        out['groups'] = tuple((q, t, lo, hi) for q, t, lo, hi, _ in groups)
        out['cinp'] = cinp
    return out


def init_bottleneck(key, c1, c2, e=1.0):
    c_ = int(c2 * e)
    k1, k2 = jax.random.split(key)
    return {'cv1': init_conv(k1, _seg(c1), c_, 1, 1),
            'cv2': init_conv(k2, _seg(c_), c2, 3, 1),
            'add': c1 == c2}


def init_c3(key, c1, c2, n=1, e=0.5):
    c_ = int(c2 * e)
    keys = jax.random.split(key, 3 + n)
    return {'cv1': init_conv(keys[0], _seg(c1), c_, 1, 1),
            'cv2': init_conv(keys[1], _seg(c1), c_, 1, 1),
            'cv3': init_conv(keys[2], _seg(c_) + _seg(c_), c2, 1, 1),
            'm': [init_bottleneck(keys[3 + i], c_, c_, e=1.0) for i in range(n)]}


def init_sppf(key, c1, c2, k=5):
    c_ = c1 // 2
    k1, kw, kbn = jax.random.split(key, 3)
    cv1 = init_conv(k1, _seg(c1), c_, 1, 1)
    cp_, c2p = _cp(c_), _cp(c2)
    w = jax.random.normal(kw, (c2, 4 * c_), jnp.float32) * (2.0 / (4 * c_)) ** 0.5
    gamma, beta = _bn_affine(kbn, c2)
    if WIDE_MXU:                                   # cv2 as 2 dots of K = 2*cp_
        wp = jnp.zeros((2, 2 * cp_, c2p), jnp.float32)
        for g in range(4):
            wp = wp.at[g // 2, (g % 2) * cp_:(g % 2) * cp_ + c_, :c2].set(
                w[:, g * c_:(g + 1) * c_].T)
    else:                                          # 4 native K=128 dots
        wp = jnp.zeros((4, cp_, c2p), jnp.float32)
        for g in range(4):
            wp = wp.at[g, :c_, :c2].set(w[:, g * c_:(g + 1) * c_].T)
    return {'cv1': cv1, 'w2': wp.astype(jnp.bfloat16),
            'gamma2': _pad_affine(gamma, c2, c2p),
            'beta2': _pad_affine(beta, c2, c2p), 'k': k}


def init_detect(key, nc, anchors, ch):
    na = anchors.shape[1]
    no = nc + 5
    heads = []
    keys = jax.random.split(key, len(ch))
    for kk, c in zip(keys, ch):
        kw, kb = jax.random.split(kk)
        cp_, nop = _cp(c), _cp(no * na)
        w = jax.random.normal(kw, (no * na, c), jnp.float32) * (1.0 / c) ** 0.5
        b = 0.01 * jax.random.normal(kb, (no * na,), jnp.float32)
        wp = jnp.zeros((cp_, nop), jnp.float32).at[:c, :no * na].set(w.T)
        heads.append({'w': wp.astype(jnp.bfloat16),
                      'b': jnp.zeros((1, nop), jnp.float32).at[0, :no * na].set(b)})
    return {'m': heads, 'anchors': anchors, 'nc': nc, 'na': na, 'no': no}


def init_model(key):
    ks = jax.random.split(key, 8)
    anchors = jnp.array([[[1.25, 1.625], [2.0, 3.75], [4.125, 2.875]],
                         [[1.875, 3.8125], [3.875, 2.8125], [3.6875, 7.4375]]],
                        jnp.float32)
    return {
        'c0': init_conv(ks[0], _seg(3), 8, 3, 2),       # /2
        'c1': init_conv(ks[1], _seg(8), 16, 3, 2),      # /4
        'c2': init_c3(ks[2], 16, 16, n=1),
        'c3': init_conv(ks[3], _seg(16), 32, 3, 2),     # /8   -> P3
        'c4': init_c3(ks[4], 32, 32, n=1),
        'c5': init_conv(ks[5], _seg(32), 64, 3, 2),     # /16  -> P4
        'c6': init_sppf(ks[6], 64, 64, 5),
        'detect': init_detect(ks[7], NC, anchors, ch=(32, 64)),
        'strides': (8.0, 16.0),
    }


# ---------------------------------------------------------------------------
# DetectMultiBackend equivalent
# ---------------------------------------------------------------------------
class DetectMultiBackendPallas:
    """JAX/Pallas equivalent of DetectMultiBackend (pt=True path)."""

    def __init__(self, params, fp16=False):
        self.params = params
        self.fp16 = fp16
        self.pt = True
        self.stride = max(int(max(params['strides'])), 32)
        self.names = {i: f'class{i}' for i in range(NC)}

    def __call__(self, im, augment=False, visualize=False):
        # TODO(synk): augment=True TTA path (scale_img / flips) not implemented.
        if self.fp16 and im.dtype != jnp.float16:
            im = im.astype(jnp.float16)
        y = detection_model_forward(self.params, im)    # (pred, [x0, x1])
        return [y[0], y[1]]


if __name__ == "__main__":
    key = jax.random.PRNGKey(0)
    k_param, k_in = jax.random.split(key)
    params = init_model(k_param)
    model = DetectMultiBackendPallas(params, fp16=False)

    im = jax.random.uniform(k_in, (2, 3, 32, 32), jnp.float32)   # NCHW image batch
    out = model(im)
    out = jax.block_until_ready(out)

    pred, feats = out[0], out[1]
    assert pred.shape == (2, 3 * 4 * 4 + 3 * 2 * 2, NC + 5)
    assert feats[0].shape == (2, 3, 4, 4, NC + 5)
    assert feats[1].shape == (2, 3, 2, 2, NC + 5)
    assert bool(jnp.isfinite(pred).all())
    print("KERNEL_OK")
</pallas_src>

<mosaic_0001>
module attributes {stable_mosaic.version = 11 : i64} {
  func.func @_convkxk_kernel(%arg0: i32, %arg1: memref<1x17x17x512xbf16, #tpu.memory_space<vmem>>, %arg2: memref<4x512x128xbf16, #tpu.memory_space<vmem>>, %arg3: memref<1x128xf32, #tpu.memory_space<vmem>>, %arg4: memref<1x128xf32, #tpu.memory_space<vmem>>, %arg5: memref<1x16x16x128xbf16, #tpu.memory_space<vmem>>) attributes {dimension_semantics = [#tpu.dimension_semantics<parallel>], iteration_bounds = array<i64: 2>, scalar_prefetch = 0 : i64, scratch_operands = 0 : i64, tpu.core_type = #tpu.core_type<tc>, window_params = [{transform_indices = @transform_0, window_bounds = array<i64: 1, 17, 17, 512>}, {pipeline_mode = #tpu.pipeline_mode<synchronous>, transform_indices = @transform_1, window_bounds = array<i64: 4, 512, 128>}, {pipeline_mode = #tpu.pipeline_mode<synchronous>, transform_indices = @transform_2, window_bounds = array<i64: 1, 128>}, {pipeline_mode = #tpu.pipeline_mode<synchronous>, transform_indices = @transform_3, window_bounds = array<i64: 1, 128>}, {transform_indices = @transform_4, window_bounds = array<i64: 1, 16, 16, 128>}]} {
    %cst = arith.constant 0.000000e+00 : f32
    %0 = vector.broadcast %cst : f32 to vector<256x128xf32>
    %c0 = arith.constant 0 : index
    %c0_0 = arith.constant 0 : index
    %c0_1 = arith.constant 0 : index
    %c0_2 = arith.constant 0 : index
    %1 = vector.load %arg1[%c0, %c0_0, %c0_1, %c0_2] : memref<1x17x17x512xbf16, #tpu.memory_space<vmem>>, vector<1x16x16x512xbf16>
    %2 = vector.shape_cast %1 : vector<1x16x16x512xbf16> to vector<16x16x512xbf16>
    %3 = vector.shape_cast %2 : vector<16x16x512xbf16> to vector<256x512xbf16>
    %c0_3 = arith.constant 0 : index
    %c0_4 = arith.constant 0 : index
    %c0_5 = arith.constant 0 : index
    %4 = vector.load %arg2[%c0_3, %c0_4, %c0_5] : memref<4x512x128xbf16, #tpu.memory_space<vmem>>, vector<1x512x128xbf16>
    %5 = vector.shape_cast %4 : vector<1x512x128xbf16> to vector<512x128xbf16>
    %cst_6 = arith.constant dense<0.000000e+00> : vector<256x128xf32>
    %6 = tpu.matmul %3, %5, %cst_6 {dimension_numbers = #tpu.dot_dimension_numbers<[1], [0], [0], [1], [0, 0, 1, 1], [], []>} : vector<256x512xbf16>, vector<512x128xbf16>, vector<256x128xf32> -> vector<256x128xf32>
    %7 = arith.addf %0, %6 : vector<256x128xf32>
    %c0_7 = arith.constant 0 : index
    %c0_8 = arith.constant 0 : index
    %c1 = arith.constant 1 : index
    %c0_9 = arith.constant 0 : index
    %8 = vector.load %arg1[%c0_7, %c0_8, %c1, %c0_9] : memref<1x17x17x512xbf16, #tpu.memory_space<vmem>>, vector<1x16x16x384xbf16>
    %9 = vector.shape_cast %8 : vector<1x16x16x384xbf16> to vector<16x16x384xbf16>
    %10 = vector.shape_cast %9 : vector<16x16x384xbf16> to vector<256x384xbf16>
    %c1_10 = arith.constant 1 : index
    %c0_11 = arith.constant 0 : index
    %c0_12 = arith.constant 0 : index
    %11 = vector.load %arg2[%c1_10, %c0_11, %c0_12] : memref<4x512x128xbf16, #tpu.memory_space<vmem>>, vector<1x384x128xbf16>
    %12 = vector.shape_cast %11 : vector<1x384x128xbf16> to vector<384x128xbf16>
    %cst_13 = arith.constant dense<0.000000e+00> : vector<256x128xf32>
    %13 = tpu.matmul %10, %12, %cst_13 {dimension_numbers = #tpu.dot_dimension_numbers<[1], [0], [0], [1], [0, 0, 1, 1], [], []>} : vector<256x384xbf16>, vector<384x128xbf16>, vector<256x128xf32> -> vector<256x128xf32>
    %14 = arith.addf %7, %13 : vector<256x128xf32>
    %c0_14 = arith.constant 0 : index
    %c1_15 = arith.constant 1 : index
    %c0_16 = arith.constant 0 : index
    %c0_17 = arith.constant 0 : index
    %15 = vector.load %arg1[%c0_14, %c1_15, %c0_16, %c0_17] : memref<1x17x17x512xbf16, #tpu.memory_space<vmem>>, vector<1x16x16x256xbf16>
    %16 = vector.shape_cast %15 : vector<1x16x16x256xbf16> to vector<16x16x256xbf16>
    %17 = vector.shape_cast %16 : vector<16x16x256xbf16> to vector<256x256xbf16>
    %c2 = arith.constant 2 : index
    %c0_18 = arith.constant 0 : index
    %c0_19 = arith.constant 0 : index
    %18 = vector.load %arg2[%c2, %c0_18, %c0_19] : memref<4x512x128xbf16, #tpu.memory_space<vmem>>, vector<1x256x128xbf16>
    %19 = vector.shape_cast %18 : vector<1x256x128xbf16> to vector<256x128xbf16>
    %cst_20 = arith.constant dense<0.000000e+00> : vector<256x128xf32>
    %20 = tpu.matmul %17, %19, %cst_20 {dimension_numbers = #tpu.dot_dimension_numbers<[1], [0], [0], [1], [0, 0, 1, 1], [], []>} : vector<256x256xbf16>, vector<256x128xbf16>, vector<256x128xf32> -> vector<256x128xf32>
    %21 = arith.addf %14, %20 : vector<256x128xf32>
    %c0_21 = arith.constant 0 : index
    %c1_22 = arith.constant 1 : index
    %c1_23 = arith.constant 1 : index
    %c0_24 = arith.constant 0 : index
    %22 = vector.load %arg1[%c0_21, %c1_22, %c1_23, %c0_24] : memref<1x17x17x512xbf16, #tpu.memory_space<vmem>>, vector<1x16x16x128xbf16>
    %23 = vector.shape_cast %22 : vector<1x16x16x128xbf16> to vector<16x16x128xbf16>
    %24 = vector.shape_cast %23 : vector<16x16x128xbf16> to vector<256x128xbf16>
    %c3 = arith.constant 3 : index
    %c0_25 = arith.constant 0 : index
    %c0_26 = arith.constant 0 : index
    %25 = vector.load %arg2[%c3, %c0_25, %c0_26] : memref<4x512x128xbf16, #tpu.memory_space<vmem>>, vector<1x128x128xbf16>
    %26 = vector.shape_cast %25 : vector<1x128x128xbf16> to vector<128x128xbf16>
    %cst_27 = arith.constant dense<0.000000e+00> : vector<256x128xf32>
    %27 = tpu.matmul %24, %26, %cst_27 {dimension_numbers = #tpu.dot_dimension_numbers<[1], [0], [0], [1], [0, 0, 1, 1], [], []>} : vector<256x128xbf16>, vector<128x128xbf16>, vector<256x128xf32> -> vector<256x128xf32>
    %28 = arith.addf %21, %27 : vector<256x128xf32>
    %c0_28 = arith.constant 0 : index
    %c0_29 = arith.constant 0 : index
    %29 = vector.load %arg3[%c0_28, %c0_29] : memref<1x128xf32, #tpu.memory_space<vmem>>, vector<1x128xf32>
    %30 = vector.broadcast %29 : vector<1x128xf32> to vector<256x128xf32>
    %31 = arith.mulf %28, %30 : vector<256x128xf32>
    %c0_30 = arith.constant 0 : index
    %c0_31 = arith.constant 0 : index
    %32 = vector.load %arg4[%c0_30, %c0_31] : memref<1x128xf32, #tpu.memory_space<vmem>>, vector<1x128xf32>
    %33 = vector.broadcast %32 : vector<1x128xf32> to vector<256x128xf32>
    %34 = arith.addf %31, %33 : vector<256x128xf32>
    %35 = arith.negf %34 : vector<256x128xf32>
    %36 = math.exp %35 : vector<256x128xf32>
    %cst_32 = arith.constant 1.000000e+00 : f32
    %37 = vector.broadcast %cst_32 : f32 to vector<256x128xf32>
    %38 = arith.addf %37, %36 : vector<256x128xf32>
    %39 = arith.divf %37, %38 : vector<256x128xf32>
    %40 = arith.mulf %34, %39 : vector<256x128xf32>
    %41 = vector.shape_cast %40 : vector<256x128xf32> to vector<16x16x128xf32>
    %42 = arith.truncf %41 : vector<16x16x128xf32> to vector<16x16x128xbf16>
    %c0_33 = arith.constant 0 : index
    %c0_34 = arith.constant 0 : index
    %c0_35 = arith.constant 0 : index
    %c0_36 = arith.constant 0 : index
    %43 = vector.load %arg5[%c0_33, %c0_34, %c0_35, %c0_36] : memref<1x16x16x128xbf16, #tpu.memory_space<vmem>>, vector<1x16x16x128xbf16>
    %44 = vector.shape_cast %43 : vector<1x16x16x128xbf16> to vector<16x16x128xbf16>
    %45 = vector.shape_cast %42 : vector<16x16x128xbf16> to vector<1x16x16x128xbf16>
    tpu.vector_store %arg5[%c0_33, %c0_34, %c0_35, %c0_36], %45 {strides = array<i32>} : memref<1x16x16x128xbf16, #tpu.memory_space<vmem>>, vector<1x16x16x128xbf16>,
    return
  }
  func.func @transform_0(%arg0: i32) -> (i32, i32, i32, i32) {
    %c0_i32 = arith.constant 0 : i32
    %c0_i32_0 = arith.constant 0 : i32
    %c0_i32_1 = arith.constant 0 : i32
    %c0_i32_2 = arith.constant 0 : i32
    return %arg0, %c0_i32, %c0_i32_0, %c0_i32_1 : i32, i32, i32, i32
  }
  func.func @transform_1(%arg0: i32) -> (i32, i32, i32) {
    %c0_i32 = arith.constant 0 : i32
    %c0_i32_0 = arith.constant 0 : i32
    %c0_i32_1 = arith.constant 0 : i32
    %c0_i32_2 = arith.constant 0 : i32
    return %c0_i32, %c0_i32_0, %c0_i32_1 : i32, i32, i32
  }
  func.func @transform_2(%arg0: i32) -> (i32, i32) {
    %c0_i32 = arith.constant 0 : i32
    %c0_i32_0 = arith.constant 0 : i32
    %c0_i32_1 = arith.constant 0 : i32
    return %c0_i32, %c0_i32_0 : i32, i32
  }
  func.func @transform_3(%arg0: i32) -> (i32, i32) {
    %c0_i32 = arith.constant 0 : i32
    %c0_i32_0 = arith.constant 0 : i32
    %c0_i32_1 = arith.constant 0 : i32
    return %c0_i32, %c0_i32_0 : i32, i32
  }
  func.func @transform_4(%arg0: i32) -> (i32, i32, i32, i32) {
    %c0_i32 = arith.constant 0 : i32
    %c0_i32_0 = arith.constant 0 : i32
    %c0_i32_1 = arith.constant 0 : i32
    %c0_i32_2 = arith.constant 0 : i32
    return %arg0, %c0_i32, %c0_i32_0, %c0_i32_1 : i32, i32, i32, i32
  }
}

</mosaic_0001>

<llo_original>
// kernel: tpu_custom_call.1
$region0: #{tpu_custom_call.1}
  #allocation0 [shape = 'u32[]', space=smem, size = 0x4, offset = 0x4, fixed_abs, tag = 'smem constant byte address 0x4 - core index']
  #allocation1 [shape = 'u32[144,128]{1,0:T(1,128)}', space=vmem, size = 0x12000, scoped, tag = 'internal scratch']
  %s0 = inlined_call_operand.vmem [shape: bf16[2,17,17,512], index: 0, kind: input, shape index: {}]
  %s1 = inlined_call_operand.vmem [shape: bf16[4,512,128], index: 1, kind: input, shape index: {}]
  %s2 = inlined_call_operand.vmem [shape: f32[1,128], index: 2, kind: input, shape index: {}]
  %s3 = inlined_call_operand.vmem [shape: f32[1,128], index: 3, kind: input, shape index: {}]
  %s4 = inlined_call_operand.hbm [shape: bf16[2,16,16,128], index: 4, kind: output, shape index: {}]
  %s5 = sld [smem:[#allocation0]]
  $region49: #{tpu_custom_call.1} parent=0
    _
  %s7 = ssub.s32 1, %s5
  %s8 = scalar_select 0, %s7, %s5
  $region1: #{tpu_custom_call.1} parent=0
    #allocation2 [shape = 'u8[131072]{0}', space=vmem, size = 0x20000, scoped, tag = 'output window, operand 0']
    #allocation3 [shape = 's32[2]{0}', space=sflag, size = 0x8, scoped, tag = 'scoped memory for tpu_custom_call.1']
    %9 = vsyncpa [#allocation3], 0
    %s10 = scalar_lea.sflag [#allocation3], 1
    %11 = vsyncpa %s10, 0
    loop: start=0, step=1, limit=4
    $region2: #{tpu_custom_call.1} parent=1 // loop_pre_header
      _
    $region3: #{tpu_custom_call.1} parent=1 // loop_header
      %s13 = sphi 0, %s17
      %p14 = scmp.ge.s32.totalorder %s13, 4
      %s23 = sphi 0, %s25
      %s26 = sphi 0, %s23
      %s27 = sphi 0, %s26
      %s43 = sphi 0, %s27
      %s47 = sphi 0, %s47
      %s49 = sphi 0, %s47
      %s50 = sphi 0, %s49
      %s64 = sphi 0, %s50
      %s68 = sphi 0, %s68
      %s70 = sphi 0, %s68
      %s71 = sphi 0, %s70
      %s85 = sphi 0, %s71
      %s89 = sphi 0, %s89
      %s91 = sphi 0, %s89
      %s92 = sphi 0, %s91
      %s106 = sphi 0, %s92
      %s112 = sphi 0, %s114
      %s115 = sphi 0, %s112
      %s116 = sphi 0, %s115
      %s132 = sphi 0, %s116
    $region4: #{tpu_custom_call.1} parent=1 // loop_header_branch
      %16 = sbr.rel (%p14) target = $region8
    $region5: #{tpu_custom_call.1} parent=1 // loop_body
      %s18 = ssub.s32 %s13, 1
      %s19 = ssub.s32 %s13, 2
      %s20 = sadd.s32 %s13, 1
      %s21 = ssub.s32 %s13, %s20
      %p22 = scmp.eq.s32.totalorder %s21, 0
      %s24 = sadd.s32 %s23, 1
      %s25 = scalar_select %p22, %s23, %s24
      %p28 = pneg %p22
      %p29 = scmp.eq.s32.totalorder %s13, 1
      %p30 = por %p28, %p29
      %p31 = scmp.ne.s32.totalorder %s23, %s26
      %p32 = scmp.eq.s32.totalorder %s13, 0
      %p33 = por %p31, %p32
      %p34 = scmp.ne.s32.totalorder %s23, %s26
      %p35 = scmp.eq.s32.totalorder %s18, 1
      %p36 = por %p34, %p35
      %p37 = scmp.ne.s32.totalorder %s26, %s27
      %p38 = scmp.eq.s32.totalorder %s18, 0
      %p39 = por %p37, %p38
      %p40 = scmp.ne.s32.totalorder %s26, %s27
      %p41 = scmp.eq.s32.totalorder %s19, 1
      %p42 = por %p40, %p41
      %p44 = scmp.ne.s32.totalorder %s27, %s43
      %p45 = scmp.eq.s32.totalorder %s19, 0
      %p46 = por %p44, %p45
      %s48 = sadd.s32 %s47, 1
      %p51 = scmp.eq.s32.totalorder %s13, 1
      %p52 = scmp.ne.s32.totalorder %s47, %s49
      %p53 = scmp.eq.s32.totalorder %s13, 0
      %p54 = por %p52, %p53
      %p55 = scmp.ne.s32.totalorder %s47, %s49
      %p56 = scmp.eq.s32.totalorder %s18, 1
      %p57 = por %p55, %p56
      %p58 = scmp.ne.s32.totalorder %s49, %s50
      %p59 = scmp.eq.s32.totalorder %s18, 0
      %p60 = por %p58, %p59
      %p61 = scmp.ne.s32.totalorder %s49, %s50
      %p62 = scmp.eq.s32.totalorder %s19, 1
      %p63 = por %p61, %p62
      %p65 = scmp.ne.s32.totalorder %s50, %s64
      %p66 = scmp.eq.s32.totalorder %s19, 0
      %p67 = por %p65, %p66
      %s69 = sadd.s32 %s68, 1
      %p72 = scmp.eq.s32.totalorder %s13, 1
      %p73 = scmp.ne.s32.totalorder %s68, %s70
      %p74 = scmp.eq.s32.totalorder %s13, 0
      %p75 = por %p73, %p74
      %p76 = scmp.ne.s32.totalorder %s68, %s70
      %p77 = scmp.eq.s32.totalorder %s18, 1
      %p78 = por %p76, %p77
      %p79 = scmp.ne.s32.totalorder %s70, %s71
      %p80 = scmp.eq.s32.totalorder %s18, 0
      %p81 = por %p79, %p80
      %p82 = scmp.ne.s32.totalorder %s70, %s71
      %p83 = scmp.eq.s32.totalorder %s19, 1
      %p84 = por %p82, %p83
      %p86 = scmp.ne.s32.totalorder %s71, %s85
      %p87 = scmp.eq.s32.totalorder %s19, 0
      %p88 = por %p86, %p87
      %s90 = sadd.s32 %s89, 1
      %p93 = scmp.eq.s32.totalorder %s13, 1
      %p94 = scmp.ne.s32.totalorder %s89, %s91
      %p95 = scmp.eq.s32.totalorder %s13, 0
      %p96 = por %p94, %p95
      %p97 = scmp.ne.s32.totalorder %s89, %s91
      %p98 = scmp.eq.s32.totalorder %s18, 1
      %p99 = por %p97, %p98
      %p100 = scmp.ne.s32.totalorder %s91, %s92
      %p101 = scmp.eq.s32.totalorder %s18, 0
      %p102 = por %p100, %p101
      %p103 = scmp.ne.s32.totalorder %s91, %s92
      %p104 = scmp.eq.s32.totalorder %s19, 1
      %p105 = por %p103, %p104
      %p107 = scmp.ne.s32.totalorder %s92, %s106
      %p108 = scmp.eq.s32.totalorder %s19, 0
      %p109 = por %p107, %p108
      %s110 = ssub.s32 %s13, %s20
      %p111 = scmp.eq.s32.totalorder %s110, 0
      %s113 = sadd.s32 %s112, 1
      %s114 = scalar_select %p111, %s112, %s113
      %p117 = pneg %p111
      %p118 = scmp.eq.s32.totalorder %s13, 1
      %p119 = por %p117, %p118
      %p120 = scmp.ne.s32.totalorder %s112, %s115
      %p121 = scmp.eq.s32.totalorder %s13, 0
      %p122 = por %p120, %p121
      %p123 = scmp.ne.s32.totalorder %s112, %s115
      %p124 = scmp.eq.s32.totalorder %s18, 1
      %p125 = por %p123, %p124
      %p126 = scmp.ne.s32.totalorder %s115, %s116
      %p127 = scmp.eq.s32.totalorder %s18, 0
      %p128 = por %p126, %p127
      %p129 = scmp.ne.s32.totalorder %s115, %s116
      %p130 = scmp.eq.s32.totalorder %s19, 1
      %p131 = por %p129, %p130
      %p133 = scmp.ne.s32.totalorder %s116, %s132
      %p134 = scmp.eq.s32.totalorder %s19, 0
      %p135 = por %p133, %p134
      %p136 = scmp.le.s32.totalorder 1, %s13
      %p137 = scmp.lt.s32.totalorder %s13, 3
      %p138 = pnand %p136, %p137
      %p139 = pneg %p138
      // Predicated region
      $region9: #{tpu_custom_call.1} parent=5 // pred_check
        _
      $region10: #{tpu_custom_call.1} parent=5 // pred_check_branch
        %141 = sbr.rel (%p138) target = $region12
      $region11: #{tpu_custom_call.1} parent=5 // pred_region
        %s142 = ssub.s32 %s13, 1
        // Predicated region
        $region13: #{tpu_custom_call.1} parent=11 // pred_check
          %p143 = pneg %p60
        $region14: #{tpu_custom_call.1} parent=11 // pred_check_branch
          %145 = sbr.rel (%p143) target = $region16
        $region15: #{tpu_custom_call.1} parent=11 // pred_region
          _
        $region16: #{tpu_custom_call.1} parent=11 // pred_fallthru
          _
        // Predicated region
        $region17: #{tpu_custom_call.1} parent=11 // pred_check
          %p146 = pneg %p81
        $region18: #{tpu_custom_call.1} parent=11 // pred_check_branch
          %148 = sbr.rel (%p146) target = $region20
        $region19: #{tpu_custom_call.1} parent=11 // pred_region
          _
        $region20: #{tpu_custom_call.1} parent=11 // pred_fallthru
          _
        // Predicated region
        $region21: #{tpu_custom_call.1} parent=11 // pred_check
          %p149 = pneg %p102
        $region22: #{tpu_custom_call.1} parent=11 // pred_check_branch
          %151 = sbr.rel (%p149) target = $region24
        $region23: #{tpu_custom_call.1} parent=11 // pred_region
          _
        $region24: #{tpu_custom_call.1} parent=11 // pred_fallthru
          _
      $region12: #{tpu_custom_call.1} parent=5 // pred_fallthru
        _
      %p152 = scmp.lt.s32.totalorder %s13, 2
      // Predicated region
      $region25: #{tpu_custom_call.1} parent=5 // pred_check
        %p153 = pneg %p152
      $region26: #{tpu_custom_call.1} parent=5 // pred_check_branch
        %155 = sbr.rel (%p153) target = $region28
      $region27: #{tpu_custom_call.1} parent=5 // pred_region
        // Predicated region
        $region29: #{tpu_custom_call.1} parent=27 // pred_check
          %p156 = pneg %p33
        $region30: #{tpu_custom_call.1} parent=27 // pred_check_branch
          %158 = sbr.rel (%p156) target = $region32
        $region31: #{tpu_custom_call.1} parent=27 // pred_region
          %p159 = scmp.lt.s32.totalorder %s13, 1
          %s160 = scalar_select %p159, %s13, 1
          %s161 = smul.addr %s160, 204
          %s162 = smul.addr %s161, 4
          %s163 = scalar_lea.vmem %s0, %s162
        $region32: #{tpu_custom_call.1} parent=27 // pred_fallthru
          _
      $region28: #{tpu_custom_call.1} parent=5 // pred_fallthru
        _
      %p164 = scmp.le.s32.totalorder 1, %s13
      %p165 = scmp.lt.s32.totalorder %s13, 3
      %p166 = pnand %p164, %p165
      %p167 = pneg %p166
      // Predicated region
      $region33: #{tpu_custom_call.1} parent=5 // pred_check
        _
      $region34: #{tpu_custom_call.1} parent=5 // pred_check_branch
        %169 = sbr.rel (%p166) target = $region36
      $region35: #{tpu_custom_call.1} parent=5 // pred_region
        %s170 = ssub.s32 %s13, 1
        %p171 = scmp.lt.s32.totalorder %s18, 1
        %s172 = scalar_select %p171, %s18, 1
        %s173 = smul.addr %s172, 204
        %s174 = smul.addr %s173, 4
        %s175 = scalar_lea.vmem %s0, %s174
        %p176 = pneg %p39
        %p177 = pneg %p36
        %p178 = pneg %p60
        %p179 = pneg %p57
        %p180 = pneg %p81
        %p181 = pneg %p78
        %p182 = pneg %p102
        %p183 = pneg %p99
        %p184 = pneg %p128
        %p185 = pneg %p125
        %s186 = sand.u32 %s115, 1
        %s187 = scalar_lea.sflag [#allocation3], %s186
        %s188 = sand.u32 %s115, 1
        %s189 = smul.addr %s188, 128
        %s190 = scalar_lea.vmem [#allocation2], %s189
        %p191 = scmp.lt.s32.totalorder %s18, 1
        %s192 = scalar_select %p191, %s18, 1
        %s193 = smul.addr %s192, 204
        %s194 = smul.addr %s193, 4
        %s195 = scalar_lea.vmem %s0, %s194
        %v197 = vld [vmem:[%s195] sm:$0xff]
        %v198 = vld [vmem:[%s195 + $0x8] sm:$0xff]
        %v199 = vld [vmem:[%s195 + $0x10] sm:$0xff]
        %v200 = vld [vmem:[%s195 + $0x18] sm:$0xff]
        %v201 = vld [vmem:[%s195 + $0x30] sm:$0xff]
        %v202 = vld [vmem:[%s195 + $0x38] sm:$0xff]
        %v203 = vld [vmem:[%s195 + $0x40] sm:$0xff]
        %v204 = vld [vmem:[%s195 + $0x48] sm:$0xff]
        %v205 = vld [vmem:[%s195 + $0x60] sm:$0xff]
        %v206 = vld [vmem:[%s195 + $0x68] sm:$0xff]
        %v207 = vld [vmem:[%s195 + $0x70] sm:$0xff]
        %v208 = vld [vmem:[%s195 + $0x78] sm:$0xff]
        %v209 = vld [vmem:[%s195 + $0x90] sm:$0xff]
        %v210 = vld [vmem:[%s195 + $0x98] sm:$0xff]
        %v211 = vld [vmem:[%s195 + $0xa0] sm:$0xff]
        %v212 = vld [vmem:[%s195 + $0xa8] sm:$0xff]
        %v213 = vld [vmem:[%s195 + $0xc0] sm:$0xff]
        %v214 = vld [vmem:[%s195 + $0xc8] sm:$0xff]
        %v215 = vld [vmem:[%s195 + $0xd0] sm:$0xff]
        %v216 = vld [vmem:[%s195 + $0xd8] sm:$0xff]
        %v217 = vld [vmem:[%s195 + $0xf0] sm:$0xff]
        %v218 = vld [vmem:[%s195 + $0xf8] sm:$0xff]
        %v219 = vld [vmem:[%s195 + $0x100] sm:$0xff]
        %v220 = vld [vmem:[%s195 + $0x108] sm:$0xff]
        %v221 = vld [vmem:[%s195 + $0x120] sm:$0xff]
        %v222 = vld [vmem:[%s195 + $0x128] sm:$0xff]
        %v223 = vld [vmem:[%s195 + $0x130] sm:$0xff]
        %v224 = vld [vmem:[%s195 + $0x138] sm:$0xff]
        %v225 = vld [vmem:[%s195 + $0x150] sm:$0xff]
        %v226 = vld [vmem:[%s195 + $0x158] sm:$0xff]
        %v227 = vld [vmem:[%s195 + $0x160] sm:$0xff]
        %v228 = vld [vmem:[%s195 + $0x168] sm:$0xff]
        %v229 = vld [vmem:[%s195 + $0x180] sm:$0xff]
        %v230 = vld [vmem:[%s195 + $0x188] sm:$0xff]
        %v231 = vld [vmem:[%s195 + $0x190] sm:$0xff]
        %v232 = vld [vmem:[%s195 + $0x198] sm:$0xff]
        %v233 = vld [vmem:[%s195 + $0x1b0] sm:$0xff]
        %v234 = vld [vmem:[%s195 + $0x1b8] sm:$0xff]
        %v235 = vld [vmem:[%s195 + $0x1c0] sm:$0xff]
        %v236 = vld [vmem:[%s195 + $0x1c8] sm:$0xff]
        %v237 = vld [vmem:[%s195 + $0x1e0] sm:$0xff]
        %v238 = vld [vmem:[%s195 + $0x1e8] sm:$0xff]
        %v239 = vld [vmem:[%s195 + $0x1f0] sm:$0xff]
        %v240 = vld [vmem:[%s195 + $0x1f8] sm:$0xff]
        %v241 = vld [vmem:[%s195 + $0x210] sm:$0xff]
        %v242 = vld [vmem:[%s195 + $0x218] sm:$0xff]
        %v243 = vld [vmem:[%s195 + $0x220] sm:$0xff]
        %v244 = vld [vmem:[%s195 + $0x228] sm:$0xff]
        %v245 = vld [vmem:[%s195 + $0x240] sm:$0xff]
        %v246 = vld [vmem:[%s195 + $0x248] sm:$0xff]
        %v247 = vld [vmem:[%s195 + $0x250] sm:$0xff]
        %v248 = vld [vmem:[%s195 + $0x258] sm:$0xff]
        %v249 = vld [vmem:[%s195 + $0x270] sm:$0xff]
        %v250 = vld [vmem:[%s195 + $0x278] sm:$0xff]
        %v251 = vld [vmem:[%s195 + $0x280] sm:$0xff]
        %v252 = vld [vmem:[%s195 + $0x288] sm:$0xff]
        %v253 = vld [vmem:[%s195 + $0x2a0] sm:$0xff]
        %v254 = vld [vmem:[%s195 + $0x2a8] sm:$0xff]
        %v255 = vld [vmem:[%s195 + $0x2b0] sm:$0xff]
        %v256 = vld [vmem:[%s195 + $0x2b8] sm:$0xff]
        %v257 = vld [vmem:[%s195 + $0x2d0] sm:$0xff]
        %v258 = vld [vmem:[%s195 + $0x2d8] sm:$0xff]
        %v259 = vld [vmem:[%s195 + $0x2e0] sm:$0xff]
        %v260 = vld [vmem:[%s195 + $0x2e8] sm:$0xff]
        %v261 = vld [vmem:[%s1] sm:$0xf]
        %v262 = vld [vmem:[%s1 + $0x4] sm:$0xf]
        %v263 = vld [vmem:[%s1 + $0x8] sm:$0xf]
        %v264 = vld [vmem:[%s1 + $0xc] sm:$0xf]
        %v265 = vld [vmem:[%s1 + $0x10] sm:$0xf]
        %v266 = vld [vmem:[%s1 + $0x14] sm:$0xf]
        %v267 = vld [vmem:[%s1 + $0x18] sm:$0xf]
        %v268 = vld [vmem:[%s1 + $0x1c] sm:$0xf]
        %v269 = vld [vmem:[%s1 + $0x20] sm:$0xf]
        %v270 = vld [vmem:[%s1 + $0x24] sm:$0xf]
        %v271 = vld [vmem:[%s1 + $0x28] sm:$0xf]
        %v272 = vld [vmem:[%s1 + $0x2c] sm:$0xf]
        %v273 = vld [vmem:[%s1 + $0x30] sm:$0xf]
        %v274 = vld [vmem:[%s1 + $0x34] sm:$0xf]
        %v275 = vld [vmem:[%s1 + $0x38] sm:$0xf]
        %v276 = vld [vmem:[%s1 + $0x3c] sm:$0xf]
        %v277 = vld [vmem:[%s1 + $0x40] sm:$0xf]
        %v278 = vld [vmem:[%s1 + $0x44] sm:$0xf]
        %v279 = vld [vmem:[%s1 + $0x48] sm:$0xf]
        %v280 = vld [vmem:[%s1 + $0x4c] sm:$0xf]
        %v281 = vld [vmem:[%s1 + $0x50] sm:$0xf]
        %v282 = vld [vmem:[%s1 + $0x54] sm:$0xf]
        %v283 = vld [vmem:[%s1 + $0x58] sm:$0xf]
        %v284 = vld [vmem:[%s1 + $0x5c] sm:$0xf]
        %v285 = vld [vmem:[%s1 + $0x60] sm:$0xf]
        %v286 = vld [vmem:[%s1 + $0x64] sm:$0xf]
        %v287 = vld [vmem:[%s1 + $0x68] sm:$0xf]
        %v288 = vld [vmem:[%s1 + $0x6c] sm:$0xf]
        %v289 = vld [vmem:[%s1 + $0x70] sm:$0xf]
        %v290 = vld [vmem:[%s1 + $0x74] sm:$0xf]
        %v291 = vld [vmem:[%s1 + $0x78] sm:$0xf]
        %v292 = vld [vmem:[%s1 + $0x7c] sm:$0xf]
        %v293 = vld [vmem:[%s1 + $0x80] sm:$0xf]
        %v294 = vld [vmem:[%s1 + $0x84] sm:$0xf]
        %v295 = vld [vmem:[%s1 + $0x88] sm:$0xf]
        %v296 = vld [vmem:[%s1 + $0x8c] sm:$0xf]
        %v297 = vld [vmem:[%s1 + $0x90] sm:$0xf]
        %v298 = vld [vmem:[%s1 + $0x94] sm:$0xf]
        %v299 = vld [vmem:[%s1 + $0x98] sm:$0xf]
        %v300 = vld [vmem:[%s1 + $0x9c] sm:$0xf]
        %v301 = vld [vmem:[%s1 + $0xa0] sm:$0xf]
        %v302 = vld [vmem:[%s1 + $0xa4] sm:$0xf]
        %v303 = vld [vmem:[%s1 + $0xa8] sm:$0xf]
        %v304 = vld [vmem:[%s1 + $0xac] sm:$0xf]
        %v305 = vld [vmem:[%s1 + $0xb0] sm:$0xf]
        %v306 = vld [vmem:[%s1 + $0xb4] sm:$0xf]
        %v307 = vld [vmem:[%s1 + $0xb8] sm:$0xf]
        %v308 = vld [vmem:[%s1 + $0xbc] sm:$0xf]
        %v309 = vld [vmem:[%s1 + $0xc0] sm:$0xf]
        %v310 = vld [vmem:[%s1 + $0xc4] sm:$0xf]
        %v311 = vld [vmem:[%s1 + $0xc8] sm:$0xf]
        %v312 = vld [vmem:[%s1 + $0xcc] sm:$0xf]
        %v313 = vld [vmem:[%s1 + $0xd0] sm:$0xf]
        %v314 = vld [vmem:[%s1 + $0xd4] sm:$0xf]
        %v315 = vld [vmem:[%s1 + $0xd8] sm:$0xf]
        %v316 = vld [vmem:[%s1 + $0xdc] sm:$0xf]
        %v317 = vld [vmem:[%s1 + $0xe0] sm:$0xf]
        %v318 = vld [vmem:[%s1 + $0xe4] sm:$0xf]
        %v319 = vld [vmem:[%s1 + $0xe8] sm:$0xf]
        %v320 = vld [vmem:[%s1 + $0xec] sm:$0xf]
        %v321 = vld [vmem:[%s1 + $0xf0] sm:$0xf]
        %v322 = vld [vmem:[%s1 + $0xf4] sm:$0xf]
        %v323 = vld [vmem:[%s1 + $0xf8] sm:$0xf]
        %v324 = vld [vmem:[%s1 + $0xfc] sm:$0xf]
        %v325 = vld [vmem:[%s195 + $0x8] sm:$0xf]
        %v326 = vld [vmem:[%s195 + $0x18] sm:$0xf]
        %v327 = vld [vmem:[%s195 + $0x20] sm:$0x11]
        %v328 = vld [vmem:[%s195 + $0x28] sm:$0x1]
        %v329 = vld [vmem:[%s195 + $0x38] sm:$0xf]
        %v330 = vld [vmem:[%s195 + $0x48] sm:$0xf]
        %v331 = vld [vmem:[%s195 + $0x50] sm:$0x11]
        %v332 = vld [vmem:[%s195 + $0x58] sm:$0x1]
        %v333 = vld [vmem:[%s195 + $0x68] sm:$0xf]
        %v334 = vld [vmem:[%s195 + $0x78] sm:$0xf]
        %v335 = vld [vmem:[%s195 + $0x80] sm:$0x11]
        %v336 = vld [vmem:[%s195 + $0x88] sm:$0x1]
        %v337 = vld [vmem:[%s195 + $0x98] sm:$0xf]
        %v338 = vld [vmem:[%s195 + $0xa8] sm:$0xf]
        %v339 = vld [vmem:[%s195 + $0xb0] sm:$0x11]
        %v340 = vld [vmem:[%s195 + $0xb8] sm:$0x1]
        %v341 = vld [vmem:[%s195 + $0xc8] sm:$0xf]
        %v342 = vld [vmem:[%s195 + $0xd8] sm:$0xf]
        %v343 = vld [vmem:[%s195 + $0xe0] sm:$0x11]
        %v344 = vld [vmem:[%s195 + $0xe8] sm:$0x1]
        %v345 = vld [vmem:[%s195 + $0xf8] sm:$0xf]
        %v346 = vld [vmem:[%s195 + $0x108] sm:$0xf]
        %v347 = vld [vmem:[%s195 + $0x110] sm:$0x11]
        %v348 = vld [vmem:[%s195 + $0x118] sm:$0x1]
        %v349 = vld [vmem:[%s195 + $0x128] sm:$0xf]
        %v350 = vld [vmem:[%s195 + $0x138] sm:$0xf]
        %v351 = vld [vmem:[%s195 + $0x140] sm:$0x11]
        %v352 = vld [vmem:[%s195 + $0x148] sm:$0x1]
        %v353 = vld [vmem:[%s195 + $0x158] sm:$0xf]
        %v354 = vld [vmem:[%s195 + $0x168] sm:$0xf]
        %v355 = vld [vmem:[%s195 + $0x170] sm:$0x11]
        %v356 = vld [vmem:[%s195 + $0x178] sm:$0x1]
        %v357 = vld [vmem:[%s195 + $0x188] sm:$0xf]
        %v358 = vld [vmem:[%s195 + $0x198] sm:$0xf]
        %v359 = vld [vmem:[%s195 + $0x1a0] sm:$0x11]
        %v360 = vld [vmem:[%s195 + $0x1a8] sm:$0x1]
        %v361 = vld [vmem:[%s195 + $0x1b8] sm:$0xf]
        %v362 = vld [vmem:[%s195 + $0x1c8] sm:$0xf]
        %v363 = vld [vmem:[%s195 + $0x1d0] sm:$0x11]
        %v364 = vld [vmem:[%s195 + $0x1d8] sm:$0x1]
        %v365 = vld [vmem:[%s195 + $0x1e8] sm:$0xf]
        %v366 = vld [vmem:[%s195 + $0x1f8] sm:$0xf]
        %v367 = vld [vmem:[%s195 + $0x200] sm:$0x11]
        %v368 = vld [vmem:[%s195 + $0x208] sm:$0x1]
        %v369 = vld [vmem:[%s195 + $0x218] sm:$0xf]
        %v370 = vld [vmem:[%s195 + $0x228] sm:$0xf]
        %v371 = vld [vmem:[%s195 + $0x230] sm:$0x11]
        %v372 = vld [vmem:[%s195 + $0x238] sm:$0x1]
        %v373 = vld [vmem:[%s195 + $0x248] sm:$0xf]
        %v374 = vld [vmem:[%s195 + $0x258] sm:$0xf]
        %v375 = vld [vmem:[%s195 + $0x260] sm:$0x11]
        %v376 = vld [vmem:[%s195 + $0x268] sm:$0x1]
        %v377 = vld [vmem:[%s195 + $0x278] sm:$0xf]
        %v378 = vld [vmem:[%s195 + $0x288] sm:$0xf]
        %v379 = vld [vmem:[%s195 + $0x290] sm:$0x11]
        %v380 = vld [vmem:[%s195 + $0x298] sm:$0x1]
        %v381 = vld [vmem:[%s195 + $0x2a8] sm:$0xf]
        %v382 = vld [vmem:[%s195 + $0x2b8] sm:$0xf]
        %v383 = vld [vmem:[%s195 + $0x2c0] sm:$0x11]
        %v384 = vld [vmem:[%s195 + $0x2c8] sm:$0x1]
        %v385 = vld [vmem:[%s195 + $0x2d8] sm:$0xf]
        %v386 = vld [vmem:[%s195 + $0x2e8] sm:$0xf]
        %v387 = vld [vmem:[%s195 + $0x2f0] sm:$0x11]
        %v388 = vld [vmem:[%s195 + $0x2f8] sm:$0x1]
        %vm389 = vsmask.f32 3328
        %vm390 = vsmask.f32 7440
        %vm391 = vmor %vm389, %vm390
        %v393 = vshrl.u32 %v197, 16
        %v395 = vrot.slane %v393, 4
        %v396 = vshll.u32 %v197, 16
        %v398 = vrot.slane %v396, 5
        %v399 = vor.u32 %v395, %v398
        %v400 = vrot.slane %v399, 4
        %v402 = vshll.u32 %v199, 16
        %v404 = vrot.slane %v402, 5
        %v405 = vsel %vm391, %v400, %v404
        %v407 = vshrl.u32 %v325, 16
        %v409 = vrot.slane %v407, 4
        %v410 = vshll.u32 %v325, 16
        %v412 = vrot.slane %v410, 5
        %v413 = vor.u32 %v409, %v412
        %v414 = vrot.slane %v413, 4
        %v416 = vshll.u32 %v326, 16
        %v418 = vrot.slane %v416, 5
        %v419 = vsel %vm391, %v414, %v418
        %v420 = vshrl.u32 %v199, 16
        %v422 = vrot.slane %v420, 4
        %v423 = vor.u32 %v422, %v404
        %v424 = vrot.slane %v423, 4
        %v426 = vshll.u32 %v327, 16
        %v428 = vrot.slane %v426, 5
        %v429 = vsel %vm391, %v424, %v428
        %v430 = vshrl.u32 %v326, 16
        %v432 = vrot.slane %v430, 4
        %v433 = vor.u32 %v432, %v418
        %v434 = vrot.slane %v433, 4
        %v436 = vshll.u32 %v328, 16
        %v438 = vrot.slane %v436, 5
        %v439 = vsel %vm391, %v434, %v438
        %v441 = vshrl.u32 %v201, 16
        %v443 = vrot.slane %v441, 4
        %v444 = vshll.u32 %v201, 16
        %v446 = vrot.slane %v444, 5
        %v447 = vor.u32 %v443, %v446
        %v448 = vrot.slane %v447, 4
        %v450 = vshll.u32 %v203, 16
        %v452 = vrot.slane %v450, 5
        %v453 = vsel %vm391, %v448, %v452
        %v455 = vshrl.u32 %v329, 16
        %v457 = vrot.slane %v455, 4
        %v458 = vshll.u32 %v329, 16
        %v460 = vrot.slane %v458, 5
        %v461 = vor.u32 %v457, %v460
        %v462 = vrot.slane %v461, 4
        %v464 = vshll.u32 %v330, 16
        %v466 = vrot.slane %v464, 5
        %v467 = vsel %vm391, %v462, %v466
        %v468 = vshrl.u32 %v203, 16
        %v470 = vrot.slane %v468, 4
        %v471 = vor.u32 %v470, %v452
        %v472 = vrot.slane %v471, 4
        %v474 = vshll.u32 %v331, 16
        %v476 = vrot.slane %v474, 5
        %v477 = vsel %vm391, %v472, %v476
        %v478 = vshrl.u32 %v330, 16
        %v480 = vrot.slane %v478, 4
        %v481 = vor.u32 %v480, %v466
        %v482 = vrot.slane %v481, 4
        %v484 = vshll.u32 %v332, 16
        %v486 = vrot.slane %v484, 5
        %v487 = vsel %vm391, %v482, %v486
        %v489 = vshrl.u32 %v205, 16
        %v491 = vrot.slane %v489, 4
        %v492 = vshll.u32 %v205, 16
        %v494 = vrot.slane %v492, 5
        %v495 = vor.u32 %v491, %v494
        %v496 = vrot.slane %v495, 4
        %v498 = vshll.u32 %v207, 16
        %v500 = vrot.slane %v498, 5
        %v501 = vsel %vm391, %v496, %v500
        %v503 = vshrl.u32 %v333, 16
        %v505 = vrot.slane %v503, 4
        %v506 = vshll.u32 %v333, 16
        %v508 = vrot.slane %v506, 5
        %v509 = vor.u32 %v505, %v508
        %v510 = vrot.slane %v509, 4
        %v512 = vshll.u32 %v334, 16
        %v514 = vrot.slane %v512, 5
        %v515 = vsel %vm391, %v510, %v514
        %v516 = vshrl.u32 %v207, 16
        %v518 = vrot.slane %v516, 4
        %v519 = vor.u32 %v518, %v500
        %v520 = vrot.slane %v519, 4
        %v522 = vshll.u32 %v335, 16
        %v524 = vrot.slane %v522, 5
        %v525 = vsel %vm391, %v520, %v524
        %v526 = vshrl.u32 %v334, 16
        %v528 = vrot.slane %v526, 4
        %v529 = vor.u32 %v528, %v514
        %v530 = vrot.slane %v529, 4
        %v532 = vshll.u32 %v336, 16
        %v534 = vrot.slane %v532, 5
        %v535 = vsel %vm391, %v530, %v534
        %v537 = vshrl.u32 %v209, 16
        %v539 = vrot.slane %v537, 4
        %v540 = vshll.u32 %v209, 16
        %v542 = vrot.slane %v540, 5
        %v543 = vor.u32 %v539, %v542
        %v544 = vrot.slane %v543, 4
        %v546 = vshll.u32 %v211, 16
        %v548 = vrot.slane %v546, 5
        %v549 = vsel %vm391, %v544, %v548
        %v551 = vshrl.u32 %v337, 16
        %v553 = vrot.slane %v551, 4
        %v554 = vshll.u32 %v337, 16
        %v556 = vrot.slane %v554, 5
        %v557 = vor.u32 %v553, %v556
        %v558 = vrot.slane %v557, 4
        %v560 = vshll.u32 %v338, 16
        %v562 = vrot.slane %v560, 5
        %v563 = vsel %vm391, %v558, %v562
        %v564 = vshrl.u32 %v211, 16
        %v566 = vrot.slane %v564, 4
        %v567 = vor.u32 %v566, %v548
        %v568 = vrot.slane %v567, 4
        %v570 = vshll.u32 %v339, 16
        %v572 = vrot.slane %v570, 5
        %v573 = vsel %vm391, %v568, %v572
        %v574 = vshrl.u32 %v338, 16
        %v576 = vrot.slane %v574, 4
        %v577 = vor.u32 %v576, %v562
        %v578 = vrot.slane %v577, 4
        %v580 = vshll.u32 %v340, 16
        %v582 = vrot.slane %v580, 5
        %v583 = vsel %vm391, %v578, %v582
        %v585 = vshrl.u32 %v213, 16
        %v587 = vrot.slane %v585, 4
        %v588 = vshll.u32 %v213, 16
        %v590 = vrot.slane %v588, 5
        %v591 = vor.u32 %v587, %v590
        %v592 = vrot.slane %v591, 4
        %v594 = vshll.u32 %v215, 16
        %v596 = vrot.slane %v594, 5
        %v597 = vsel %vm391, %v592, %v596
        %v599 = vshrl.u32 %v341, 16
        %v601 = vrot.slane %v599, 4
        %v602 = vshll.u32 %v341, 16
        %v604 = vrot.slane %v602, 5
        %v605 = vor.u32 %v601, %v604
        %v606 = vrot.slane %v605, 4
        %v608 = vshll.u32 %v342, 16
        %v610 = vrot.slane %v608, 5
        %v611 = vsel %vm391, %v606, %v610
        %v612 = vshrl.u32 %v215, 16
        %v614 = vrot.slane %v612, 4
        %v615 = vor.u32 %v614, %v596
        %v616 = vrot.slane %v615, 4
        %v618 = vshll.u32 %v343, 16
        %v620 = vrot.slane %v618, 5
        %v621 = vsel %vm391, %v616, %v620
        %v622 = vshrl.u32 %v342, 16
        %v624 = vrot.slane %v622, 4
        %v625 = vor.u32 %v624, %v610
        %v626 = vrot.slane %v625, 4
        %v628 = vshll.u32 %v344, 16
        %v630 = vrot.slane %v628, 5
        %v631 = vsel %vm391, %v626, %v630
        %v633 = vshrl.u32 %v217, 16
        %v635 = vrot.slane %v633, 4
        %v636 = vshll.u32 %v217, 16
        %v638 = vrot.slane %v636, 5
        %v639 = vor.u32 %v635, %v638
        %v640 = vrot.slane %v639, 4
        %v642 = vshll.u32 %v219, 16
        %v644 = vrot.slane %v642, 5
        %v645 = vsel %vm391, %v640, %v644
        %v647 = vshrl.u32 %v345, 16
        %v649 = vrot.slane %v647, 4
        %v650 = vshll.u32 %v345, 16
        %v652 = vrot.slane %v650, 5
        %v653 = vor.u32 %v649, %v652
        %v654 = vrot.slane %v653, 4
        %v656 = vshll.u32 %v346, 16
        %v658 = vrot.slane %v656, 5
        %v659 = vsel %vm391, %v654, %v658
        %v660 = vshrl.u32 %v219, 16
        %v662 = vrot.slane %v660, 4
        %v663 = vor.u32 %v662, %v644
        %v664 = vrot.slane %v663, 4
        %v666 = vshll.u32 %v347, 16
        %v668 = vrot.slane %v666, 5
        %v669 = vsel %vm391, %v664, %v668
        %v670 = vshrl.u32 %v346, 16
        %v672 = vrot.slane %v670, 4
        %v673 = vor.u32 %v672, %v658
        %v674 = vrot.slane %v673, 4
        %v676 = vshll.u32 %v348, 16
        %v678 = vrot.slane %v676, 5
        %v679 = vsel %vm391, %v674, %v678
        %v681 = vshrl.u32 %v221, 16
        %v683 = vrot.slane %v681, 4
        %v684 = vshll.u32 %v221, 16
        %v686 = vrot.slane %v684, 5
        %v687 = vor.u32 %v683, %v686
        %v688 = vrot.slane %v687, 4
        %v690 = vshll.u32 %v223, 16
        %v692 = vrot.slane %v690, 5
        %v693 = vsel %vm391, %v688, %v692
        %v695 = vshrl.u32 %v349, 16
        %v697 = vrot.slane %v695, 4
        %v698 = vshll.u32 %v349, 16
        %v700 = vrot.slane %v698, 5
        %v701 = vor.u32 %v697, %v700
        %v702 = vrot.slane %v701, 4
        %v704 = vshll.u32 %v350, 16
        %v706 = vrot.slane %v704, 5
        %v707 = vsel %vm391, %v702, %v706
        %v708 = vshrl.u32 %v223, 16
        %v710 = vrot.slane %v708, 4
        %v711 = vor.u32 %v710, %v692
        %v712 = vrot.slane %v711, 4
        %v714 = vshll.u32 %v351, 16
        %v716 = vrot.slane %v714, 5
        %v717 = vsel %vm391, %v712, %v716
        %v718 = vshrl.u32 %v350, 16
        %v720 = vrot.slane %v718, 4
        %v721 = vor.u32 %v720, %v706
        %v722 = vrot.slane %v721, 4
        %v724 = vshll.u32 %v352, 16
        %v726 = vrot.slane %v724, 5
        %v727 = vsel %vm391, %v722, %v726
        %v729 = vshrl.u32 %v225, 16
        %v731 = vrot.slane %v729, 4
        %v732 = vshll.u32 %v225, 16
        %v734 = vrot.slane %v732, 5
        %v735 = vor.u32 %v731, %v734
        %v736 = vrot.slane %v735, 4
        %v738 = vshll.u32 %v227, 16
        %v740 = vrot.slane %v738, 5
        %v741 = vsel %vm391, %v736, %v740
        %v743 = vshrl.u32 %v353, 16
        %v745 = vrot.slane %v743, 4
        %v746 = vshll.u32 %v353, 16
        %v748 = vrot.slane %v746, 5
        %v749 = vor.u32 %v745, %v748
        %v750 = vrot.slane %v749, 4
        %v752 = vshll.u32 %v354, 16
        %v754 = vrot.slane %v752, 5
        %v755 = vsel %vm391, %v750, %v754
        %v756 = vshrl.u32 %v227, 16
        %v758 = vrot.slane %v756, 4
        %v759 = vor.u32 %v758, %v740
        %v760 = vrot.slane %v759, 4
        %v762 = vshll.u32 %v355, 16
        %v764 = vrot.slane %v762, 5
        %v765 = vsel %vm391, %v760, %v764
        %v766 = vshrl.u32 %v354, 16
        %v768 = vrot.slane %v766, 4
        %v769 = vor.u32 %v768, %v754
        %v770 = vrot.slane %v769, 4
        %v772 = vshll.u32 %v356, 16
        %v774 = vrot.slane %v772, 5
        %v775 = vsel %vm391, %v770, %v774
        %v777 = vshrl.u32 %v229, 16
        %v779 = vrot.slane %v777, 4
        %v780 = vshll.u32 %v229, 16
        %v782 = vrot.slane %v780, 5
        %v783 = vor.u32 %v779, %v782
        %v784 = vrot.slane %v783, 4
        %v786 = vshll.u32 %v231, 16
        %v788 = vrot.slane %v786, 5
        %v789 = vsel %vm391, %v784, %v788
        %v791 = vshrl.u32 %v357, 16
        %v793 = vrot.slane %v791, 4
        %v794 = vshll.u32 %v357, 16
        %v796 = vrot.slane %v794, 5
        %v797 = vor.u32 %v793, %v796
        %v798 = vrot.slane %v797, 4
        %v800 = vshll.u32 %v358, 16
        %v802 = vrot.slane %v800, 5
        %v803 = vsel %vm391, %v798, %v802
        %v804 = vshrl.u32 %v231, 16
        %v806 = vrot.slane %v804, 4
        %v807 = vor.u32 %v806, %v788
        %v808 = vrot.slane %v807, 4
        %v810 = vshll.u32 %v359, 16
        %v812 = vrot.slane %v810, 5
        %v813 = vsel %vm391, %v808, %v812
        %v814 = vshrl.u32 %v358, 16
        %v816 = vrot.slane %v814, 4
        %v817 = vor.u32 %v816, %v802
        %v818 = vrot.slane %v817, 4
        %v820 = vshll.u32 %v360, 16
        %v822 = vrot.slane %v820, 5
        %v823 = vsel %vm391, %v818, %v822
        %v825 = vshrl.u32 %v233, 16
        %v827 = vrot.slane %v825, 4
        %v828 = vshll.u32 %v233, 16
        %v830 = vrot.slane %v828, 5
        %v831 = vor.u32 %v827, %v830
        %v832 = vrot.slane %v831, 4
        %v834 = vshll.u32 %v235, 16
        %v836 = vrot.slane %v834, 5
        %v837 = vsel %vm391, %v832, %v836
        %v839 = vshrl.u32 %v361, 16
        %v841 = vrot.slane %v839, 4
        %v842 = vshll.u32 %v361, 16
        %v844 = vrot.slane %v842, 5
        %v845 = vor.u32 %v841, %v844
        %v846 = vrot.slane %v845, 4
        %v848 = vshll.u32 %v362, 16
        %v850 = vrot.slane %v848, 5
        %v851 = vsel %vm391, %v846, %v850
        %v852 = vshrl.u32 %v235, 16
        %v854 = vrot.slane %v852, 4
        %v855 = vor.u32 %v854, %v836
        %v856 = vrot.slane %v855, 4
        %v858 = vshll.u32 %v363, 16
        %v860 = vrot.slane %v858, 5
        %v861 = vsel %vm391, %v856, %v860
        %v862 = vshrl.u32 %v362, 16
        %v864 = vrot.slane %v862, 4
        %v865 = vor.u32 %v864, %v850
        %v866 = vrot.slane %v865, 4
        %v868 = vshll.u32 %v364, 16
        %v870 = vrot.slane %v868, 5
        %v871 = vsel %vm391, %v866, %v870
        %v873 = vshrl.u32 %v237, 16
        %v875 = vrot.slane %v873, 4
        %v876 = vshll.u32 %v237, 16
        %v878 = vrot.slane %v876, 5
        %v879 = vor.u32 %v875, %v878
        %v880 = vrot.slane %v879, 4
        %v882 = vshll.u32 %v239, 16
        %v884 = vrot.slane %v882, 5
        %v885 = vsel %vm391, %v880, %v884
        %v887 = vshrl.u32 %v365, 16
        %v889 = vrot.slane %v887, 4
        %v890 = vshll.u32 %v365, 16
        %v892 = vrot.slane %v890, 5
        %v893 = vor.u32 %v889, %v892
        %v894 = vrot.slane %v893, 4
        %v896 = vshll.u32 %v366, 16
        %v898 = vrot.slane %v896, 5
        %v899 = vsel %vm391, %v894, %v898
        %v900 = vshrl.u32 %v239, 16
        %v902 = vrot.slane %v900, 4
        %v903 = vor.u32 %v902, %v884
        %v904 = vrot.slane %v903, 4
        %v906 = vshll.u32 %v367, 16
        %v908 = vrot.slane %v906, 5
        %v909 = vsel %vm391, %v904, %v908
        %v910 = vshrl.u32 %v366, 16
        %v912 = vrot.slane %v910, 4
        %v913 = vor.u32 %v912, %v898
        %v914 = vrot.slane %v913, 4
        %v916 = vshll.u32 %v368, 16
        %v918 = vrot.slane %v916, 5
        %v919 = vsel %vm391, %v914, %v918
        %v921 = vshrl.u32 %v241, 16
        %v923 = vrot.slane %v921, 4
        %v924 = vshll.u32 %v241, 16
        %v926 = vrot.slane %v924, 5
        %v927 = vor.u32 %v923, %v926
        %v928 = vrot.slane %v927, 4
        %v930 = vshll.u32 %v243, 16
        %v932 = vrot.slane %v930, 5
        %v933 = vsel %vm391, %v928, %v932
        %v935 = vshrl.u32 %v369, 16
        %v937 = vrot.slane %v935, 4
        %v938 = vshll.u32 %v369, 16
        %v940 = vrot.slane %v938, 5
        %v941 = vor.u32 %v937, %v940
        %v942 = vrot.slane %v941, 4
        %v944 = vshll.u32 %v370, 16
        %v946 = vrot.slane %v944, 5
        %v947 = vsel %vm391, %v942, %v946
        %v948 = vshrl.u32 %v243, 16
        %v950 = vrot.slane %v948, 4
        %v951 = vor.u32 %v950, %v932
        %v952 = vrot.slane %v951, 4
        %v954 = vshll.u32 %v371, 16
        %v956 = vrot.slane %v954, 5
        %v957 = vsel %vm391, %v952, %v956
        %v958 = vshrl.u32 %v370, 16
        %v960 = vrot.slane %v958, 4
        %v961 = vor.u32 %v960, %v946
        %v962 = vrot.slane %v961, 4
        %v964 = vshll.u32 %v372, 16
        %v966 = vrot.slane %v964, 5
        %v967 = vsel %vm391, %v962, %v966
        %v969 = vshrl.u32 %v245, 16
        %v971 = vrot.slane %v969, 4
        %v972 = vshll.u32 %v245, 16
        %v974 = vrot.slane %v972, 5
        %v975 = vor.u32 %v971, %v974
        %v976 = vrot.slane %v975, 4
        %v978 = vshll.u32 %v247, 16
        %v980 = vrot.slane %v978, 5
        %v981 = vsel %vm391, %v976, %v980
        %v983 = vshrl.u32 %v373, 16
        %v985 = vrot.slane %v983, 4
        %v986 = vshll.u32 %v373, 16
        %v988 = vrot.slane %v986, 5
        %v989 = vor.u32 %v985, %v988
        %v990 = vrot.slane %v989, 4
        %v992 = vshll.u32 %v374, 16
        %v994 = vrot.slane %v992, 5
        %v995 = vsel %vm391, %v990, %v994
        %v996 = vshrl.u32 %v247, 16
        %v998 = vrot.slane %v996, 4
        %v999 = vor.u32 %v998, %v980
        %v1000 = vrot.slane %v999, 4
        %v1002 = vshll.u32 %v375, 16
        %v1004 = vrot.slane %v1002, 5
        %v1005 = vsel %vm391, %v1000, %v1004
        %v1006 = vshrl.u32 %v374, 16
        %v1008 = vrot.slane %v1006, 4
        %v1009 = vor.u32 %v1008, %v994
        %v1010 = vrot.slane %v1009, 4
        %v1012 = vshll.u32 %v376, 16
        %v1014 = vrot.slane %v1012, 5
        %v1015 = vsel %vm391, %v1010, %v1014
        %v1017 = vshrl.u32 %v249, 16
        %v1019 = vrot.slane %v1017, 4
        %v1020 = vshll.u32 %v249, 16
        %v1022 = vrot.slane %v1020, 5
        %v1023 = vor.u32 %v1019, %v1022
        %v1024 = vrot.slane %v1023, 4
        %v1026 = vshll.u32 %v251, 16
        %v1028 = vrot.slane %v1026, 5
        %v1029 = vsel %vm391, %v1024, %v1028
        %v1031 = vshrl.u32 %v377, 16
        %v1033 = vrot.slane %v1031, 4
        %v1034 = vshll.u32 %v377, 16
        %v1036 = vrot.slane %v1034, 5
        %v1037 = vor.u32 %v1033, %v1036
        %v1038 = vrot.slane %v1037, 4
        %v1040 = vshll.u32 %v378, 16
        %v1042 = vrot.slane %v1040, 5
        %v1043 = vsel %vm391, %v1038, %v1042
        %v1044 = vshrl.u32 %v251, 16
        %v1046 = vrot.slane %v1044, 4
        %v1047 = vor.u32 %v1046, %v1028
        %v1048 = vrot.slane %v1047, 4
        %v1050 = vshll.u32 %v379, 16
        %v1052 = vrot.slane %v1050, 5
        %v1053 = vsel %vm391, %v1048, %v1052
        %v1054 = vshrl.u32 %v378, 16
        %v1056 = vrot.slane %v1054, 4
        %v1057 = vor.u32 %v1056, %v1042
        %v1058 = vrot.slane %v1057, 4
        %v1060 = vshll.u32 %v380, 16
        %v1062 = vrot.slane %v1060, 5
        %v1063 = vsel %vm391, %v1058, %v1062
        %v1065 = vshrl.u32 %v253, 16
        %v1067 = vrot.slane %v1065, 4
        %v1068 = vshll.u32 %v253, 16
        %v1070 = vrot.slane %v1068, 5
        %v1071 = vor.u32 %v1067, %v1070
        %v1072 = vrot.slane %v1071, 4
        %v1074 = vshll.u32 %v255, 16
        %v1076 = vrot.slane %v1074, 5
        %v1077 = vsel %vm391, %v1072, %v1076
        %v1079 = vshrl.u32 %v381, 16
        %v1081 = vrot.slane %v1079, 4
        %v1082 = vshll.u32 %v381, 16
        %v1084 = vrot.slane %v1082, 5
        %v1085 = vor.u32 %v1081, %v1084
        %v1086 = vrot.slane %v1085, 4
        %v1088 = vshll.u32 %v382, 16
        %v1090 = vrot.slane %v1088, 5
        %v1091 = vsel %vm391, %v1086, %v1090
        %v1092 = vshrl.u32 %v255, 16
        %v1094 = vrot.slane %v1092, 4
        %v1095 = vor.u32 %v1094, %v1076
        %v1096 = vrot.slane %v1095, 4
        %v1098 = vshll.u32 %v383, 16
        %v1100 = vrot.slane %v1098, 5
        %v1101 = vsel %vm391, %v1096, %v1100
        %v1102 = vshrl.u32 %v382, 16
        %v1104 = vrot.slane %v1102, 4
        %v1105 = vor.u32 %v1104, %v1090
        %v1106 = vrot.slane %v1105, 4
        %v1108 = vshll.u32 %v384, 16
        %v1110 = vrot.slane %v1108, 5
        %v1111 = vsel %vm391, %v1106, %v1110
        %v1113 = vshrl.u32 %v257, 16
        %v1115 = vrot.slane %v1113, 4
        %v1116 = vshll.u32 %v257, 16
        %v1118 = vrot.slane %v1116, 5
        %v1119 = vor.u32 %v1115, %v1118
        %v1120 = vrot.slane %v1119, 4
        %v1122 = vshll.u32 %v259, 16
        %v1124 = vrot.slane %v1122, 5
        %v1125 = vsel %vm391, %v1120, %v1124
        %v1127 = vshrl.u32 %v385, 16
        %v1129 = vrot.slane %v1127, 4
        %v1130 = vshll.u32 %v385, 16
        %v1132 = vrot.slane %v1130, 5
        %v1133 = vor.u32 %v1129, %v1132
        %v1134 = vrot.slane %v1133, 4
        %v1136 = vshll.u32 %v386, 16
        %v1138 = vrot.slane %v1136, 5
        %v1139 = vsel %vm391, %v1134, %v1138
        %v1140 = vshrl.u32 %v259, 16
        %v1142 = vrot.slane %v1140, 4
        %v1143 = vor.u32 %v1142, %v1124
        %v1144 = vrot.slane %v1143, 4
        %v1146 = vshll.u32 %v387, 16
        %v1148 = vrot.slane %v1146, 5
        %v1149 = vsel %vm391, %v1144, %v1148
        %v1150 = vshrl.u32 %v386, 16
        %v1152 = vrot.slane %v1150, 4
        %v1153 = vor.u32 %v1152, %v1138
        %v1154 = vrot.slane %v1153, 4
        %v1156 = vshll.u32 %v388, 16
        %v1158 = vrot.slane %v1156, 5
        %v1159 = vsel %vm391, %v1154, %v1158
        %s1160 = scalar_lea.vmem %s1, 256
        %v1161 = vld [vmem:[%s1160] sm:$0xf]
        %v1162 = vld [vmem:[%s1160 + $0x4] sm:$0xf]
        %v1163 = vld [vmem:[%s1160 + $0x8] sm:$0xf]
        %v1164 = vld [vmem:[%s1160 + $0xc] sm:$0xf]
        %v1165 = vld [vmem:[%s1160 + $0x10] sm:$0xf]
        %v1166 = vld [vmem:[%s1160 + $0x14] sm:$0xf]
        %v1167 = vld [vmem:[%s1160 + $0x18] sm:$0xf]
        %v1168 = vld [vmem:[%s1160 + $0x1c] sm:$0xf]
        %v1169 = vld [vmem:[%s1160 + $0x20] sm:$0xf]
        %v1170 = vld [vmem:[%s1160 + $0x24] sm:$0xf]
        %v1171 = vld [vmem:[%s1160 + $0x28] sm:$0xf]
        %v1172 = vld [vmem:[%s1160 + $0x2c] sm:$0xf]
        %v1173 = vld [vmem:[%s1160 + $0x30] sm:$0xf]
        %v1174 = vld [vmem:[%s1160 + $0x34] sm:$0xf]
        %v1175 = vld [vmem:[%s1160 + $0x38] sm:$0xf]
        %v1176 = vld [vmem:[%s1160 + $0x3c] sm:$0xf]
        %v1177 = vld [vmem:[%s1160 + $0x40] sm:$0xf]
        %v1178 = vld [vmem:[%s1160 + $0x44] sm:$0xf]
        %v1179 = vld [vmem:[%s1160 + $0x48] sm:$0xf]
        %v1180 = vld [vmem:[%s1160 + $0x4c] sm:$0xf]
        %v1181 = vld [vmem:[%s1160 + $0x50] sm:$0xf]
        %v1182 = vld [vmem:[%s1160 + $0x54] sm:$0xf]
        %v1183 = vld [vmem:[%s1160 + $0x58] sm:$0xf]
        %v1184 = vld [vmem:[%s1160 + $0x5c] sm:$0xf]
        %v1185 = vld [vmem:[%s1160 + $0x60] sm:$0xf]
        %v1186 = vld [vmem:[%s1160 + $0x64] sm:$0xf]
        %v1187 = vld [vmem:[%s1160 + $0x68] sm:$0xf]
        %v1188 = vld [vmem:[%s1160 + $0x6c] sm:$0xf]
        %v1189 = vld [vmem:[%s1160 + $0x70] sm:$0xf]
        %v1190 = vld [vmem:[%s1160 + $0x74] sm:$0xf]
        %v1191 = vld [vmem:[%s1160 + $0x78] sm:$0xf]
        %v1192 = vld [vmem:[%s1160 + $0x7c] sm:$0xf]
        %v1193 = vld [vmem:[%s1160 + $0x80] sm:$0xf]
        %v1194 = vld [vmem:[%s1160 + $0x84] sm:$0xf]
        %v1195 = vld [vmem:[%s1160 + $0x88] sm:$0xf]
        %v1196 = vld [vmem:[%s1160 + $0x8c] sm:$0xf]
        %v1197 = vld [vmem:[%s1160 + $0x90] sm:$0xf]
        %v1198 = vld [vmem:[%s1160 + $0x94] sm:$0xf]
        %v1199 = vld [vmem:[%s1160 + $0x98] sm:$0xf]
        %v1200 = vld [vmem:[%s1160 + $0x9c] sm:$0xf]
        %v1201 = vld [vmem:[%s1160 + $0xa0] sm:$0xf]
        %v1202 = vld [vmem:[%s1160 + $0xa4] sm:$0xf]
        %v1203 = vld [vmem:[%s1160 + $0xa8] sm:$0xf]
        %v1204 = vld [vmem:[%s1160 + $0xac] sm:$0xf]
        %v1205 = vld [vmem:[%s1160 + $0xb0] sm:$0xf]
        %v1206 = vld [vmem:[%s1160 + $0xb4] sm:$0xf]
        %v1207 = vld [vmem:[%s1160 + $0xb8] sm:$0xf]
        %v1208 = vld [vmem:[%s1160 + $0xbc] sm:$0xf]
        %v1209 = vunpack.c.l.b16 %v405
        %v1210 = vunpack.c.h.b16 %v405
        %v1211 = vunpack.c.l.b16 %v419
        %v1212 = vunpack.c.l.b16 %v429
        %v1213 = vunpack.c.h.b16 %v429
        %v1214 = vunpack.c.l.b16 %v439
        %v1215 = vunpack.c.l.b16 %v453
        %v1216 = vunpack.c.h.b16 %v453
        %v1217 = vunpack.c.l.b16 %v467
        %v1218 = vunpack.c.l.b16 %v477
        %v1219 = vunpack.c.h.b16 %v477
        %v1220 = vunpack.c.l.b16 %v487
        %v1221 = vunpack.c.l.b16 %v501
        %v1222 = vunpack.c.h.b16 %v501
        %v1223 = vunpack.c.l.b16 %v515
        %v1224 = vunpack.c.l.b16 %v525
        %v1225 = vunpack.c.h.b16 %v525
        %v1226 = vunpack.c.l.b16 %v535
        %v1227 = vunpack.c.l.b16 %v549
        %v1228 = vunpack.c.h.b16 %v549
        %v1229 = vunpack.c.l.b16 %v563
        %v1230 = vunpack.c.l.b16 %v573
        %v1231 = vunpack.c.h.b16 %v573
        %v1232 = vunpack.c.l.b16 %v583
        %v1233 = vunpack.c.l.b16 %v597
        %v1234 = vunpack.c.h.b16 %v597
        %v1235 = vunpack.c.l.b16 %v611
        %v1236 = vunpack.c.l.b16 %v621
        %v1237 = vunpack.c.h.b16 %v621
        %v1238 = vunpack.c.l.b16 %v631
        %v1239 = vunpack.c.l.b16 %v645
        %v1240 = vunpack.c.h.b16 %v645
        %v1241 = vunpack.c.l.b16 %v659
        %v1242 = vunpack.c.l.b16 %v669
        %v1243 = vunpack.c.h.b16 %v669
        %v1244 = vunpack.c.l.b16 %v679
        %v1245 = vunpack.c.l.b16 %v693
        %v1246 = vunpack.c.h.b16 %v693
        %v1247 = vunpack.c.l.b16 %v707
        %v1248 = vunpack.c.l.b16 %v717
        %v1249 = vunpack.c.h.b16 %v717
        %v1250 = vunpack.c.l.b16 %v727
        %v1251 = vunpack.c.l.b16 %v741
        %v1252 = vunpack.c.h.b16 %v741
        %v1253 = vunpack.c.l.b16 %v755
        %v1254 = vunpack.c.l.b16 %v765
        %v1255 = vunpack.c.h.b16 %v765
        %v1256 = vunpack.c.l.b16 %v775
        %v1257 = vunpack.c.l.b16 %v789
        %v1258 = vunpack.c.h.b16 %v789
        %v1259 = vunpack.c.l.b16 %v803
        %v1260 = vunpack.c.l.b16 %v813
        %v1261 = vunpack.c.h.b16 %v813
        %v1262 = vunpack.c.l.b16 %v823
        %v1263 = vunpack.c.l.b16 %v837
        %v1264 = vunpack.c.h.b16 %v837
        %v1265 = vunpack.c.l.b16 %v851
        %v1266 = vunpack.c.l.b16 %v861
        %v1267 = vunpack.c.h.b16 %v861
        %v1268 = vunpack.c.l.b16 %v871
        %v1269 = vunpack.c.l.b16 %v885
        %v1270 = vunpack.c.h.b16 %v885
        %v1271 = vunpack.c.l.b16 %v899
        %v1272 = vunpack.c.l.b16 %v909
        %v1273 = vunpack.c.h.b16 %v909
        %v1274 = vunpack.c.l.b16 %v919
        %v1275 = vunpack.c.l.b16 %v933
        %v1276 = vunpack.c.h.b16 %v933
        %v1277 = vunpack.c.l.b16 %v947
        %v1278 = vunpack.c.l.b16 %v957
        %v1279 = vunpack.c.h.b16 %v957
        %v1280 = vunpack.c.l.b16 %v967
        %v1281 = vunpack.c.l.b16 %v981
        %v1282 = vunpack.c.h.b16 %v981
        %v1283 = vunpack.c.l.b16 %v995
        %v1284 = vunpack.c.l.b16 %v1005
        %v1285 = vunpack.c.h.b16 %v1005
        %v1286 = vunpack.c.l.b16 %v1015
        %v1287 = vunpack.c.l.b16 %v1029
        %v1288 = vunpack.c.h.b16 %v1029
        %v1289 = vunpack.c.l.b16 %v1043
        %v1290 = vunpack.c.l.b16 %v1053
        %v1291 = vunpack.c.h.b16 %v1053
        %v1292 = vunpack.c.l.b16 %v1063
        %v1293 = vunpack.c.l.b16 %v1077
        %v1294 = vunpack.c.h.b16 %v1077
        %v1295 = vunpack.c.l.b16 %v1091
        %v1296 = vunpack.c.l.b16 %v1101
        %v1297 = vunpack.c.h.b16 %v1101
        %v1298 = vunpack.c.l.b16 %v1111
        %v1299 = vunpack.c.l.b16 %v1125
        %v1300 = vunpack.c.h.b16 %v1125
        %v1301 = vunpack.c.l.b16 %v1139
        %v1302 = vunpack.c.l.b16 %v1149
        %v1303 = vunpack.c.h.b16 %v1149
        %v1304 = vunpack.c.l.b16 %v1159
        %v1305 = vpack.c.b16 %v1212, %v1209
        %v1306 = vpack.c.b16 %v1213, %v1210
        %v1307 = vpack.c.b16 %v1214, %v1211
        %v1308 = vpack.c.b16 %v1218, %v1215
        %v1309 = vpack.c.b16 %v1219, %v1216
        %v1310 = vpack.c.b16 %v1220, %v1217
        %v1311 = vpack.c.b16 %v1224, %v1221
        %v1312 = vpack.c.b16 %v1225, %v1222
        %v1313 = vpack.c.b16 %v1226, %v1223
        %v1314 = vpack.c.b16 %v1230, %v1227
        %v1315 = vpack.c.b16 %v1231, %v1228
        %v1316 = vpack.c.b16 %v1232, %v1229
        %v1317 = vpack.c.b16 %v1236, %v1233
        %v1318 = vpack.c.b16 %v1237, %v1234
        %v1319 = vpack.c.b16 %v1238, %v1235
        %v1320 = vpack.c.b16 %v1242, %v1239
        %v1321 = vpack.c.b16 %v1243, %v1240
        %v1322 = vpack.c.b16 %v1244, %v1241
        %v1323 = vpack.c.b16 %v1248, %v1245
        %v1324 = vpack.c.b16 %v1249, %v1246
        %v1325 = vpack.c.b16 %v1250, %v1247
        %v1326 = vpack.c.b16 %v1254, %v1251
        %v1327 = vpack.c.b16 %v1255, %v1252
        %v1328 = vpack.c.b16 %v1256, %v1253
        %v1329 = vpack.c.b16 %v1260, %v1257
        %v1330 = vpack.c.b16 %v1261, %v1258
        %v1331 = vpack.c.b16 %v1262, %v1259
        %v1332 = vpack.c.b16 %v1266, %v1263
        %v1333 = vpack.c.b16 %v1267, %v1264
        %v1334 = vpack.c.b16 %v1268, %v1265
        %v1335 = vpack.c.b16 %v1272, %v1269
        %v1336 = vpack.c.b16 %v1273, %v1270
        %v1337 = vpack.c.b16 %v1274, %v1271
        %v1338 = vpack.c.b16 %v1278, %v1275
        %v1339 = vpack.c.b16 %v1279, %v1276
        %v1340 = vpack.c.b16 %v1280, %v1277
        %v1341 = vpack.c.b16 %v1284, %v1281
        %v1342 = vpack.c.b16 %v1285, %v1282
        %v1343 = vpack.c.b16 %v1286, %v1283
        %v1344 = vpack.c.b16 %v1290, %v1287
        %v1345 = vpack.c.b16 %v1291, %v1288
        %v1346 = vpack.c.b16 %v1292, %v1289
        %v1347 = vpack.c.b16 %v1296, %v1293
        %v1348 = vpack.c.b16 %v1297, %v1294
        %v1349 = vpack.c.b16 %v1298, %v1295
        %v1350 = vpack.c.b16 %v1302, %v1299
        %v1351 = vpack.c.b16 %v1303, %v1300
        %v1352 = vpack.c.b16 %v1304, %v1301
        %v1449 = vunpack.c.l.b16 %v1161
        %v1450 = vunpack.c.l.b16 %v1162
        %v1451 = vunpack.c.l.b16 %v1163
        %v1452 = vunpack.c.l.b16 %v1164
        %v1453 = vunpack.c.l.b16 %v1165
        %v1454 = vunpack.c.l.b16 %v1166
        %v1455 = vunpack.c.l.b16 %v1167
        %v1456 = vunpack.c.l.b16 %v1168
        %v1457 = vunpack.c.l.b16 %v1169
        %v1458 = vunpack.c.l.b16 %v1170
        %v1459 = vunpack.c.l.b16 %v1171
        %v1460 = vunpack.c.l.b16 %v1172
        %v1461 = vunpack.c.l.b16 %v1173
        %v1462 = vunpack.c.l.b16 %v1174
        %v1463 = vunpack.c.l.b16 %v1175
        %v1464 = vunpack.c.l.b16 %v1176
        %v1465 = vunpack.c.l.b16 %v1177
        %v1466 = vunpack.c.l.b16 %v1178
        %v1467 = vunpack.c.l.b16 %v1179
        %v1468 = vunpack.c.l.b16 %v1180
        %v1469 = vunpack.c.l.b16 %v1181
        %v1470 = vunpack.c.l.b16 %v1182
        %v1471 = vunpack.c.l.b16 %v1183
        %v1472 = vunpack.c.l.b16 %v1184
        %v1473 = vunpack.c.l.b16 %v1185
        %v1474 = vunpack.c.l.b16 %v1186
        %v1475 = vunpack.c.l.b16 %v1187
        %v1476 = vunpack.c.l.b16 %v1188
        %v1477 = vunpack.c.l.b16 %v1189
        %v1478 = vunpack.c.l.b16 %v1190
        %v1479 = vunpack.c.l.b16 %v1191
        %v1480 = vunpack.c.l.b16 %v1192
        %v1481 = vunpack.c.l.b16 %v1193
        %v1482 = vunpack.c.l.b16 %v1194
        %v1483 = vunpack.c.l.b16 %v1195
        %v1484 = vunpack.c.l.b16 %v1196
        %v1485 = vunpack.c.l.b16 %v1197
        %v1486 = vunpack.c.l.b16 %v1198
        %v1487 = vunpack.c.l.b16 %v1199
        %v1488 = vunpack.c.l.b16 %v1200
        %v1489 = vunpack.c.l.b16 %v1201
        %v1490 = vunpack.c.l.b16 %v1202
        %v1491 = vunpack.c.l.b16 %v1203
        %v1492 = vunpack.c.l.b16 %v1204
        %v1493 = vunpack.c.l.b16 %v1205
        %v1494 = vunpack.c.l.b16 %v1206
        %v1495 = vunpack.c.l.b16 %v1207
        %v1496 = vunpack.c.l.b16 %v1208
        %v1497 = vpack.c.b16 %v1450, %v1449
        %v1498 = vpack.c.b16 %v1452, %v1451
        %v1499 = vpack.c.b16 %v1454, %v1453
        %v1500 = vpack.c.b16 %v1456, %v1455
        %v1501 = vpack.c.b16 %v1458, %v1457
        %v1502 = vpack.c.b16 %v1460, %v1459
        %v1503 = vpack.c.b16 %v1462, %v1461
        %v1504 = vpack.c.b16 %v1464, %v1463
        %v1505 = vpack.c.b16 %v1466, %v1465
        %v1506 = vpack.c.b16 %v1468, %v1467
        %v1507 = vpack.c.b16 %v1470, %v1469
        %v1508 = vpack.c.b16 %v1472, %v1471
        %v1509 = vpack.c.b16 %v1474, %v1473
        %v1510 = vpack.c.b16 %v1476, %v1475
        %v1511 = vpack.c.b16 %v1478, %v1477
        %v1512 = vpack.c.b16 %v1480, %v1479
        %v1513 = vpack.c.b16 %v1482, %v1481
        %v1514 = vpack.c.b16 %v1484, %v1483
        %v1515 = vpack.c.b16 %v1486, %v1485
        %v1516 = vpack.c.b16 %v1488, %v1487
        %v1517 = vpack.c.b16 %v1490, %v1489
        %v1518 = vpack.c.b16 %v1492, %v1491
        %v1519 = vpack.c.b16 %v1494, %v1493
        %v1520 = vpack.c.b16 %v1496, %v1495
        %1545 = vmatprep.subr.bf16.mxu0 0
        %1546 = vmatpush1.bf16.msra.mxu0 %v1504
        %1547 = vmatprep.subr.bf16.mxu0 0
        %1548 = vmatpush1.bf16.msra.mxu0 %v1503
        %1549 = vmatprep.subr.bf16.mxu0 0
        %1550 = vmatpush1.bf16.msra.mxu0 %v1502
        %1551 = vmatprep.subr.bf16.mxu0 0
        %1552 = vmatpush1.bf16.msra.mxu0 %v1501
        %1553 = vmatprep.subr.bf16.mxu0 0
        %1554 = vmatpush1.bf16.msra.mxu0 %v1500
        %1555 = vmatprep.subr.bf16.mxu0 0
        %1556 = vmatpush1.bf16.msra.mxu0 %v1499
        %1557 = vmatprep.subr.bf16.mxu0 0
        %1558 = vmatpush1.bf16.msra.mxu0 %v1498
        %1559 = vmatprep.subr.bf16.mxu0 0
        %1560 = vmatpush1.bf16.msra.mxu0 %v1497
        %1561 = vmatprep.subr.bf16.mxu0 0
        %1562 = vmatpush2.bf16.msra.mxu0 %v1512
        %1563 = vmatprep.subr.bf16.mxu0 0
        %1564 = vmatpush2.bf16.msra.mxu0 %v1511
        %1565 = vmatprep.subr.bf16.mxu0 0
        %1566 = vmatpush2.bf16.msra.mxu0 %v1510
        %1567 = vmatprep.subr.bf16.mxu0 0
        %1568 = vmatpush2.bf16.msra.mxu0 %v1509
        %1569 = vmatprep.subr.bf16.mxu0 0
        %1570 = vmatpush2.bf16.msra.mxu0 %v1508
        %1571 = vmatprep.subr.bf16.mxu0 0
        %1572 = vmatpush2.bf16.msra.mxu0 %v1507
        %1573 = vmatprep.subr.bf16.mxu0 0
        %1574 = vmatpush2.bf16.msra.mxu0 %v1506
        %1575 = vmatprep.subr.bf16.mxu0 0
        %1576 = vmatpush2.bf16.msra.mxu0 %v1505
        %1577 = vmatprep.mubr.bf16.mxu0 %v1306
        %1578 = vmatmul.mubr.bf16.gmra.mxu0 %v1305
        %v1579 = vpop.f32.mrf.mxu0
        %v1580 = vadd.f32 0.0, %v1579
        %v1581 = vpop.f32.mrf.mxu0
        %v1582 = vpop.f32.mrf.mxu0
        %v1583 = vadd.f32 0.0, %v1582
        %v1584 = vpop.f32.mrf.mxu0
        %1585 = vmatprep.mubr.bf16.mxu0 %v1309
        %1586 = vmatmul.mubr.bf16.gmra.mxu0 %v1308
        %v1587 = vpop.f32.mrf.mxu0
        %v1588 = vadd.f32 0.0, %v1587
        %v1589 = vpop.f32.mrf.mxu0
        %v1590 = vpop.f32.mrf.mxu0
        %v1591 = vadd.f32 0.0, %v1590
        %v1592 = vpop.f32.mrf.mxu0
        %1593 = vmatprep.mubr.bf16.mxu0 %v1312
        %1594 = vmatmul.mubr.bf16.gmra.mxu0 %v1311
        %v1595 = vpop.f32.mrf.mxu0
        %v1596 = vadd.f32 0.0, %v1595
        %v1597 = vpop.f32.mrf.mxu0
        %v1598 = vpop.f32.mrf.mxu0
        %v1599 = vadd.f32 0.0, %v1598
        %v1600 = vpop.f32.mrf.mxu0
        %1601 = vmatprep.mubr.bf16.mxu0 %v1315
        %1602 = vmatmul.mubr.bf16.gmra.mxu0 %v1314
        %v1603 = vpop.f32.mrf.mxu0
        %v1604 = vadd.f32 0.0, %v1603
        %v1605 = vpop.f32.mrf.mxu0
        %v1606 = vpop.f32.mrf.mxu0
        %v1607 = vadd.f32 0.0, %v1606
        %v1608 = vpop.f32.mrf.mxu0
        %1609 = vmatprep.mubr.bf16.mxu0 %v1318
        %1610 = vmatmul.mubr.bf16.gmra.mxu0 %v1317
        %v1611 = vpop.f32.mrf.mxu0
        %v1612 = vadd.f32 0.0, %v1611
        %v1613 = vpop.f32.mrf.mxu0
        %v1614 = vpop.f32.mrf.mxu0
        %v1615 = vadd.f32 0.0, %v1614
        %v1616 = vpop.f32.mrf.mxu0
        %1617 = vmatprep.mubr.bf16.mxu0 %v1321
        %1618 = vmatmul.mubr.bf16.gmra.mxu0 %v1320
        %v1619 = vpop.f32.mrf.mxu0
        %v1620 = vadd.f32 0.0, %v1619
        %v1621 = vpop.f32.mrf.mxu0
        %v1622 = vpop.f32.mrf.mxu0
        %v1623 = vadd.f32 0.0, %v1622
        %v1624 = vpop.f32.mrf.mxu0
        %1625 = vmatprep.mubr.bf16.mxu0 %v1324
        %1626 = vmatmul.mubr.bf16.gmra.mxu0 %v1323
        %v1627 = vpop.f32.mrf.mxu0
        %v1628 = vadd.f32 0.0, %v1627
        %v1629 = vpop.f32.mrf.mxu0
        %v1630 = vpop.f32.mrf.mxu0
        %v1631 = vadd.f32 0.0, %v1630
        %v1632 = vpop.f32.mrf.mxu0
        %1633 = vmatprep.mubr.bf16.mxu0 %v1327
        %1634 = vmatmul.mubr.bf16.gmra.mxu0 %v1326
        %v1635 = vpop.f32.mrf.mxu0
        %v1636 = vadd.f32 0.0, %v1635
        %v1637 = vpop.f32.mrf.mxu0
        %v1638 = vpop.f32.mrf.mxu0
        %v1639 = vadd.f32 0.0, %v1638
        %v1640 = vpop.f32.mrf.mxu0
        %1641 = vmatprep.mubr.bf16.mxu0 %v1330
        %1642 = vmatmul.mubr.bf16.gmra.mxu0 %v1329
        %v1643 = vpop.f32.mrf.mxu0
        %v1644 = vadd.f32 0.0, %v1643
        %v1645 = vpop.f32.mrf.mxu0
        %v1646 = vpop.f32.mrf.mxu0
        %v1647 = vadd.f32 0.0, %v1646
        %v1648 = vpop.f32.mrf.mxu0
        %1649 = vmatprep.mubr.bf16.mxu0 %v1333
        %1650 = vmatmul.mubr.bf16.gmra.mxu0 %v1332
        %v1651 = vpop.f32.mrf.mxu0
        %v1652 = vadd.f32 0.0, %v1651
        %v1653 = vpop.f32.mrf.mxu0
        %v1654 = vpop.f32.mrf.mxu0
        %v1655 = vadd.f32 0.0, %v1654
        %v1656 = vpop.f32.mrf.mxu0
        %1657 = vmatprep.mubr.bf16.mxu0 %v1336
        %1658 = vmatmul.mubr.bf16.gmra.mxu0 %v1335
        %v1659 = vpop.f32.mrf.mxu0
        %v1660 = vadd.f32 0.0, %v1659
        %v1661 = vpop.f32.mrf.mxu0
        %v1662 = vpop.f32.mrf.mxu0
        %v1663 = vadd.f32 0.0, %v1662
        %v1664 = vpop.f32.mrf.mxu0
        %1665 = vmatprep.mubr.bf16.mxu0 %v1339
        %1666 = vmatmul.mubr.bf16.gmra.mxu0 %v1338
        %v1667 = vpop.f32.mrf.mxu0
        %v1668 = vadd.f32 0.0, %v1667
        %v1669 = vpop.f32.mrf.mxu0
        %v1670 = vpop.f32.mrf.mxu0
        %v1671 = vadd.f32 0.0, %v1670
        %v1672 = vpop.f32.mrf.mxu0
        %1673 = vmatprep.mubr.bf16.mxu0 %v1342
        %1674 = vmatmul.mubr.bf16.gmra.mxu0 %v1341
        %v1675 = vpop.f32.mrf.mxu0
        %v1676 = vadd.f32 0.0, %v1675
        %v1677 = vpop.f32.mrf.mxu0
        %v1678 = vpop.f32.mrf.mxu0
        %v1679 = vadd.f32 0.0, %v1678
        %v1680 = vpop.f32.mrf.mxu0
        %1681 = vmatprep.mubr.bf16.mxu0 %v1345
        %1682 = vmatmul.mubr.bf16.gmra.mxu0 %v1344
        %v1683 = vpop.f32.mrf.mxu0
        %v1684 = vadd.f32 0.0, %v1683
        %v1685 = vpop.f32.mrf.mxu0
        %v1686 = vpop.f32.mrf.mxu0
        %v1687 = vadd.f32 0.0, %v1686
        %v1688 = vpop.f32.mrf.mxu0
        %1689 = vmatprep.mubr.bf16.mxu0 %v1348
        %1690 = vmatmul.mubr.bf16.gmra.mxu0 %v1347
        %v1691 = vpop.f32.mrf.mxu0
        %v1692 = vadd.f32 0.0, %v1691
        %v1693 = vpop.f32.mrf.mxu0
        %v1694 = vpop.f32.mrf.mxu0
        %v1695 = vadd.f32 0.0, %v1694
        %v1696 = vpop.f32.mrf.mxu0
        %1697 = vmatprep.mubr.bf16.mxu0 %v1351
        %1698 = vmatmul.mubr.bf16.gmra.mxu0 %v1350
        %v1699 = vpop.f32.mrf.mxu0
        %v1700 = vadd.f32 0.0, %v1699
        %v1701 = vpop.f32.mrf.mxu0
        %v1702 = vpop.f32.mrf.mxu0
        %v1703 = vadd.f32 0.0, %v1702
        %v1704 = vpop.f32.mrf.mxu0
        %1705 = vdwg.mxu0
        %1706 = vmatprep.subr.bf16.mxu0 0
        %1707 = vmatpush1.bf16.msra.mxu0 %v1520
        %1708 = vmatprep.subr.bf16.mxu0 0
        %1709 = vmatpush1.bf16.msra.mxu0 %v1519
        %1710 = vmatprep.subr.bf16.mxu0 0
        %1711 = vmatpush1.bf16.msra.mxu0 %v1518
        %1712 = vmatprep.subr.bf16.mxu0 0
        %1713 = vmatpush1.bf16.msra.mxu0 %v1517
        %1714 = vmatprep.subr.bf16.mxu0 0
        %1715 = vmatpush1.bf16.msra.mxu0 %v1516
        %1716 = vmatprep.subr.bf16.mxu0 0
        %1717 = vmatpush1.bf16.msra.mxu0 %v1515
        %1718 = vmatprep.subr.bf16.mxu0 0
        %1719 = vmatpush1.bf16.msra.mxu0 %v1514
        %1720 = vmatprep.subr.bf16.mxu0 0
        %1721 = vmatpush1.bf16.msra.mxu0 %v1513
        %1722 = vmatprep.subr.bf16.mxu0 0
        %1723 = vmatpush2.bf16.msra.mxu0 0
        %1724 = vmatprep.subr.bf16.mxu0 0
        %1725 = vmatpush2.bf16.msra.mxu0 0
        %1726 = vmatprep.subr.bf16.mxu0 0
        %1727 = vmatpush2.bf16.msra.mxu0 0
        %1728 = vmatprep.subr.bf16.mxu0 0
        %1729 = vmatpush2.bf16.msra.mxu0 0
        %1730 = vmatprep.subr.bf16.mxu0 0
        %1731 = vmatpush2.bf16.msra.mxu0 0
        %1732 = vmatprep.subr.bf16.mxu0 0
        %1733 = vmatpush2.bf16.msra.mxu0 0
        %1734 = vmatprep.subr.bf16.mxu0 0
        %1735 = vmatpush2.bf16.msra.mxu0 0
        %1736 = vmatprep.subr.bf16.mxu0 0
        %1737 = vmatpush2.bf16.msra.mxu0 0
        %1738 = vmatprep.mubr.bf16.mxu0 0
        %1739 = vmatmul.mubr.bf16.gmra.mxu0 %v1307
        %v1740 = vpop.f32.mrf.mxu0
        %v1741 = vadd.f32 %v1580, %v1740
        %v1742 = vpop.f32.mrf.mxu0
        %v1743 = vpop.f32.mrf.mxu0
        %v1744 = vadd.f32 %v1583, %v1743
        %v1745 = vpop.f32.mrf.mxu0
        %1746 = vmatprep.mubr.bf16.mxu0 0
        %1747 = vmatmul.mubr.bf16.gmra.mxu0 %v1310
        %v1748 = vpop.f32.mrf.mxu0
        %v1749 = vadd.f32 %v1588, %v1748
        %v1750 = vpop.f32.mrf.mxu0
        %v1751 = vpop.f32.mrf.mxu0
        %v1752 = vadd.f32 %v1591, %v1751
        %v1753 = vpop.f32.mrf.mxu0
        %1754 = vmatprep.mubr.bf16.mxu0 0
        %1755 = vmatmul.mubr.bf16.gmra.mxu0 %v1313
        %v1756 = vpop.f32.mrf.mxu0
        %v1757 = vadd.f32 %v1596, %v1756
        %v1758 = vpop.f32.mrf.mxu0
        %v1759 = vpop.f32.mrf.mxu0
        %v1760 = vadd.f32 %v1599, %v1759
        %v1761 = vpop.f32.mrf.mxu0
        %1762 = vmatprep.mubr.bf16.mxu0 0
        %1763 = vmatmul.mubr.bf16.gmra.mxu0 %v1316
        %v1764 = vpop.f32.mrf.mxu0
        %v1765 = vadd.f32 %v1604, %v1764
        %v1766 = vpop.f32.mrf.mxu0
        %v1767 = vpop.f32.mrf.mxu0
        %v1768 = vadd.f32 %v1607, %v1767
        %v1769 = vpop.f32.mrf.mxu0
        %1770 = vmatprep.mubr.bf16.mxu0 0
        %1771 = vmatmul.mubr.bf16.gmra.mxu0 %v1319
        %v1772 = vpop.f32.mrf.mxu0
        %v1773 = vadd.f32 %v1612, %v1772
        %v1774 = vpop.f32.mrf.mxu0
        %v1775 = vpop.f32.mrf.mxu0
        %v1776 = vadd.f32 %v1615, %v1775
        %v1777 = vpop.f32.mrf.mxu0
        %1778 = vmatprep.mubr.bf16.mxu0 0
        %1779 = vmatmul.mubr.bf16.gmra.mxu0 %v1322
        %v1780 = vpop.f32.mrf.mxu0
        %v1781 = vadd.f32 %v1620, %v1780
        %v1782 = vpop.f32.mrf.mxu0
        %v1783 = vpop.f32.mrf.mxu0
        %v1784 = vadd.f32 %v1623, %v1783
        %v1785 = vpop.f32.mrf.mxu0
        %1786 = vmatprep.mubr.bf16.mxu0 0
        %1787 = vmatmul.mubr.bf16.gmra.mxu0 %v1325
        %v1788 = vpop.f32.mrf.mxu0
        %v1789 = vadd.f32 %v1628, %v1788
        %v1790 = vpop.f32.mrf.mxu0
        %v1791 = vpop.f32.mrf.mxu0
        %v1792 = vadd.f32 %v1631, %v1791
        %v1793 = vpop.f32.mrf.mxu0
        %1794 = vmatprep.mubr.bf16.mxu0 0
        %1795 = vmatmul.mubr.bf16.gmra.mxu0 %v1328
        %v1796 = vpop.f32.mrf.mxu0
        %v1797 = vadd.f32 %v1636, %v1796
        %v1798 = vpop.f32.mrf.mxu0
        %v1799 = vpop.f32.mrf.mxu0
        %v1800 = vadd.f32 %v1639, %v1799
        %v1801 = vpop.f32.mrf.mxu0
        %1802 = vmatprep.mubr.bf16.mxu0 0
        %1803 = vmatmul.mubr.bf16.gmra.mxu0 %v1331
        %v1804 = vpop.f32.mrf.mxu0
        %v1805 = vadd.f32 %v1644, %v1804
        %v1806 = vpop.f32.mrf.mxu0
        %v1807 = vpop.f32.mrf.mxu0
        %v1808 = vadd.f32 %v1647, %v1807
        %v1809 = vpop.f32.mrf.mxu0
        %1810 = vmatprep.mubr.bf16.mxu0 0
        %1811 = vmatmul.mubr.bf16.gmra.mxu0 %v1334
        %v1812 = vpop.f32.mrf.mxu0
        %v1813 = vadd.f32 %v1652, %v1812
        %v1814 = vpop.f32.mrf.mxu0
        %v1815 = vpop.f32.mrf.mxu0
        %v1816 = vadd.f32 %v1655, %v1815
        %v1817 = vpop.f32.mrf.mxu0
        %1818 = vmatprep.mubr.bf16.mxu0 0
        %1819 = vmatmul.mubr.bf16.gmra.mxu0 %v1337
        %v1820 = vpop.f32.mrf.mxu0
        %v1821 = vadd.f32 %v1660, %v1820
        %v1822 = vpop.f32.mrf.mxu0
        %v1823 = vpop.f32.mrf.mxu0
        %v1824 = vadd.f32 %v1663, %v1823
        %v1825 = vpop.f32.mrf.mxu0
        %1826 = vmatprep.mubr.bf16.mxu0 0
        %1827 = vmatmul.mubr.bf16.gmra.mxu0 %v1340
        %v1828 = vpop.f32.mrf.mxu0
        %v1829 = vadd.f32 %v1668, %v1828
        %v1830 = vpop.f32.mrf.mxu0
        %v1831 = vpop.f32.mrf.mxu0
        %v1832 = vadd.f32 %v1671, %v1831
        %v1833 = vpop.f32.mrf.mxu0
        %1834 = vmatprep.mubr.bf16.mxu0 0
        %1835 = vmatmul.mubr.bf16.gmra.mxu0 %v1343
        %v1836 = vpop.f32.mrf.mxu0
        %v1837 = vadd.f32 %v1676, %v1836
        %v1838 = vpop.f32.mrf.mxu0
        %v1839 = vpop.f32.mrf.mxu0
        %v1840 = vadd.f32 %v1679, %v1839
        %v1841 = vpop.f32.mrf.mxu0
        %1842 = vmatprep.mubr.bf16.mxu0 0
        %1843 = vmatmul.mubr.bf16.gmra.mxu0 %v1346
        %v1844 = vpop.f32.mrf.mxu0
        %v1845 = vadd.f32 %v1684, %v1844
        %v1846 = vpop.f32.mrf.mxu0
        %v1847 = vpop.f32.mrf.mxu0
        %v1848 = vadd.f32 %v1687, %v1847
        %v1849 = vpop.f32.mrf.mxu0
        %1850 = vmatprep.mubr.bf16.mxu0 0
        %1851 = vmatmul.mubr.bf16.gmra.mxu0 %v1349
        %v1852 = vpop.f32.mrf.mxu0
        %v1853 = vadd.f32 %v1692, %v1852
        %v1854 = vpop.f32.mrf.mxu0
        %v1855 = vpop.f32.mrf.mxu0
        %v1856 = vadd.f32 %v1695, %v1855
        %v1857 = vpop.f32.mrf.mxu0
        %1858 = vmatprep.mubr.bf16.mxu0 0
        %1859 = vmatmul.mubr.bf16.gmra.mxu0 %v1352
        %v1860 = vpop.f32.mrf.mxu0
        %v1861 = vadd.f32 %v1700, %v1860
        %v1862 = vpop.f32.mrf.mxu0
        %v1863 = vpop.f32.mrf.mxu0
        %v1864 = vadd.f32 %v1703, %v1863
        %v1865 = vpop.f32.mrf.mxu0
        %1866 = vdwg.mxu0
        %v1931 = vunpack.c.l.b16 %v197
        %v1932 = vunpack.c.h.b16 %v197
        %v1933 = vunpack.c.l.b16 %v198
        %v1934 = vunpack.c.h.b16 %v198
        %v1935 = vunpack.c.l.b16 %v199
        %v1936 = vunpack.c.h.b16 %v199
        %v1937 = vunpack.c.l.b16 %v200
        %v1938 = vunpack.c.h.b16 %v200
        %v1939 = vunpack.c.l.b16 %v201
        %v1940 = vunpack.c.h.b16 %v201
        %v1941 = vunpack.c.l.b16 %v202
        %v1942 = vunpack.c.h.b16 %v202
        %v1943 = vunpack.c.l.b16 %v203
        %v1944 = vunpack.c.h.b16 %v203
        %v1945 = vunpack.c.l.b16 %v204
        %v1946 = vunpack.c.h.b16 %v204
        %v1947 = vunpack.c.l.b16 %v205
        %v1948 = vunpack.c.h.b16 %v205
        %v1949 = vunpack.c.l.b16 %v206
        %v1950 = vunpack.c.h.b16 %v206
        %v1951 = vunpack.c.l.b16 %v207
        %v1952 = vunpack.c.h.b16 %v207
        %v1953 = vunpack.c.l.b16 %v208
        %v1954 = vunpack.c.h.b16 %v208
        %v1955 = vunpack.c.l.b16 %v209
        %v1956 = vunpack.c.h.b16 %v209
        %v1957 = vunpack.c.l.b16 %v210
        %v1958 = vunpack.c.h.b16 %v210
        %v1959 = vunpack.c.l.b16 %v211
        %v1960 = vunpack.c.h.b16 %v211
        %v1961 = vunpack.c.l.b16 %v212
        %v1962 = vunpack.c.h.b16 %v212
        %v1963 = vunpack.c.l.b16 %v213
        %v1964 = vunpack.c.h.b16 %v213
        %v1965 = vunpack.c.l.b16 %v214
        %v1966 = vunpack.c.h.b16 %v214
        %v1967 = vunpack.c.l.b16 %v215
        %v1968 = vunpack.c.h.b16 %v215
        %v1969 = vunpack.c.l.b16 %v216
        %v1970 = vunpack.c.h.b16 %v216
        %v1971 = vunpack.c.l.b16 %v217
        %v1972 = vunpack.c.h.b16 %v217
        %v1973 = vunpack.c.l.b16 %v218
        %v1974 = vunpack.c.h.b16 %v218
        %v1975 = vunpack.c.l.b16 %v219
        %v1976 = vunpack.c.h.b16 %v219
        %v1977 = vunpack.c.l.b16 %v220
        %v1978 = vunpack.c.h.b16 %v220
        %v1979 = vunpack.c.l.b16 %v221
        %v1980 = vunpack.c.h.b16 %v221
        %v1981 = vunpack.c.l.b16 %v222
        %v1982 = vunpack.c.h.b16 %v222
        %v1983 = vunpack.c.l.b16 %v223
        %v1984 = vunpack.c.h.b16 %v223
        %v1985 = vunpack.c.l.b16 %v224
        %v1986 = vunpack.c.h.b16 %v224
        %v1987 = vunpack.c.l.b16 %v225
        %v1988 = vunpack.c.h.b16 %v225
        %v1989 = vunpack.c.l.b16 %v226
        %v1990 = vunpack.c.h.b16 %v226
        %v1991 = vunpack.c.l.b16 %v227
        %v1992 = vunpack.c.h.b16 %v227
        %v1993 = vunpack.c.l.b16 %v228
        %v1994 = vunpack.c.h.b16 %v228
        %v1995 = vunpack.c.l.b16 %v229
        %v1996 = vunpack.c.h.b16 %v229
        %v1997 = vunpack.c.l.b16 %v230
        %v1998 = vunpack.c.h.b16 %v230
        %v1999 = vunpack.c.l.b16 %v231
        %v2000 = vunpack.c.h.b16 %v231
        %v2001 = vunpack.c.l.b16 %v232
        %v2002 = vunpack.c.h.b16 %v232
        %v2003 = vunpack.c.l.b16 %v233
        %v2004 = vunpack.c.h.b16 %v233
        %v2005 = vunpack.c.l.b16 %v234
        %v2006 = vunpack.c.h.b16 %v234
        %v2007 = vunpack.c.l.b16 %v235
        %v2008 = vunpack.c.h.b16 %v235
        %v2009 = vunpack.c.l.b16 %v236
        %v2010 = vunpack.c.h.b16 %v236
        %v2011 = vunpack.c.l.b16 %v237
        %v2012 = vunpack.c.h.b16 %v237
        %v2013 = vunpack.c.l.b16 %v238
        %v2014 = vunpack.c.h.b16 %v238
        %v2015 = vunpack.c.l.b16 %v239
        %v2016 = vunpack.c.h.b16 %v239
        %v2017 = vunpack.c.l.b16 %v240
        %v2018 = vunpack.c.h.b16 %v240
        %v2019 = vunpack.c.l.b16 %v241
        %v2020 = vunpack.c.h.b16 %v241
        %v2021 = vunpack.c.l.b16 %v242
        %v2022 = vunpack.c.h.b16 %v242
        %v2023 = vunpack.c.l.b16 %v243
        %v2024 = vunpack.c.h.b16 %v243
        %v2025 = vunpack.c.l.b16 %v244
        %v2026 = vunpack.c.h.b16 %v244
        %v2027 = vunpack.c.l.b16 %v245
        %v2028 = vunpack.c.h.b16 %v245
        %v2029 = vunpack.c.l.b16 %v246
        %v2030 = vunpack.c.h.b16 %v246
        %v2031 = vunpack.c.l.b16 %v247
        %v2032 = vunpack.c.h.b16 %v247
        %v2033 = vunpack.c.l.b16 %v248
        %v2034 = vunpack.c.h.b16 %v248
        %v2035 = vunpack.c.l.b16 %v249
        %v2036 = vunpack.c.h.b16 %v249
        %v2037 = vunpack.c.l.b16 %v250
        %v2038 = vunpack.c.h.b16 %v250
        %v2039 = vunpack.c.l.b16 %v251
        %v2040 = vunpack.c.h.b16 %v251
        %v2041 = vunpack.c.l.b16 %v252
        %v2042 = vunpack.c.h.b16 %v252
        %v2043 = vunpack.c.l.b16 %v253
        %v2044 = vunpack.c.h.b16 %v253
        %v2045 = vunpack.c.l.b16 %v254
        %v2046 = vunpack.c.h.b16 %v254
        %v2047 = vunpack.c.l.b16 %v255
        %v2048 = vunpack.c.h.b16 %v255
        %v2049 = vunpack.c.l.b16 %v256
        %v2050 = vunpack.c.h.b16 %v256
        %v2051 = vunpack.c.l.b16 %v257
        %v2052 = vunpack.c.h.b16 %v257
        %v2053 = vunpack.c.l.b16 %v258
        %v2054 = vunpack.c.h.b16 %v258
        %v2055 = vunpack.c.l.b16 %v259
        %v2056 = vunpack.c.h.b16 %v259
        %v2057 = vunpack.c.l.b16 %v260
        %v2058 = vunpack.c.h.b16 %v260
        %v2059 = vpack.c.b16 %v1935, %v1931
        %v2060 = vpack.c.b16 %v1936, %v1932
        %v2061 = vpack.c.b16 %v1937, %v1933
        %v2062 = vpack.c.b16 %v1938, %v1934
        %v2063 = vpack.c.b16 %v1943, %v1939
        %v2064 = vpack.c.b16 %v1944, %v1940
        %v2065 = vpack.c.b16 %v1945, %v1941
        %v2066 = vpack.c.b16 %v1946, %v1942
        %v2067 = vpack.c.b16 %v1951, %v1947
        %v2068 = vpack.c.b16 %v1952, %v1948
        %v2069 = vpack.c.b16 %v1953, %v1949
        %v2070 = vpack.c.b16 %v1954, %v1950
        %v2071 = vpack.c.b16 %v1959, %v1955
        %v2072 = vpack.c.b16 %v1960, %v1956
        %v2073 = vpack.c.b16 %v1961, %v1957
        %v2074 = vpack.c.b16 %v1962, %v1958
        %v2075 = vpack.c.b16 %v1967, %v1963
        %v2076 = vpack.c.b16 %v1968, %v1964
        %v2077 = vpack.c.b16 %v1969, %v1965
        %v2078 = vpack.c.b16 %v1970, %v1966
        %v2079 = vpack.c.b16 %v1975, %v1971
        %v2080 = vpack.c.b16 %v1976, %v1972
        %v2081 = vpack.c.b16 %v1977, %v1973
        %v2082 = vpack.c.b16 %v1978, %v1974
        %v2083 = vpack.c.b16 %v1983, %v1979
        %v2084 = vpack.c.b16 %v1984, %v1980
        %v2085 = vpack.c.b16 %v1985, %v1981
        %v2086 = vpack.c.b16 %v1986, %v1982
        %v2087 = vpack.c.b16 %v1991, %v1987
        %v2088 = vpack.c.b16 %v1992, %v1988
        %v2089 = vpack.c.b16 %v1993, %v1989
        %v2090 = vpack.c.b16 %v1994, %v1990
        %v2091 = vpack.c.b16 %v1999, %v1995
        %v2092 = vpack.c.b16 %v2000, %v1996
        %v2093 = vpack.c.b16 %v2001, %v1997
        %v2094 = vpack.c.b16 %v2002, %v1998
        %v2095 = vpack.c.b16 %v2007, %v2003
        %v2096 = vpack.c.b16 %v2008, %v2004
        %v2097 = vpack.c.b16 %v2009, %v2005
        %v2098 = vpack.c.b16 %v2010, %v2006
        %v2099 = vpack.c.b16 %v2015, %v2011
        %v2100 = vpack.c.b16 %v2016, %v2012
        %v2101 = vpack.c.b16 %v2017, %v2013
        %v2102 = vpack.c.b16 %v2018, %v2014
        %v2103 = vpack.c.b16 %v2023, %v2019
        %v2104 = vpack.c.b16 %v2024, %v2020
        %v2105 = vpack.c.b16 %v2025, %v2021
        %v2106 = vpack.c.b16 %v2026, %v2022
        %v2107 = vpack.c.b16 %v2031, %v2027
        %v2108 = vpack.c.b16 %v2032, %v2028
        %v2109 = vpack.c.b16 %v2033, %v2029
        %v2110 = vpack.c.b16 %v2034, %v2030
        %v2111 = vpack.c.b16 %v2039, %v2035
        %v2112 = vpack.c.b16 %v2040, %v2036
        %v2113 = vpack.c.b16 %v2041, %v2037
        %v2114 = vpack.c.b16 %v2042, %v2038
        %v2115 = vpack.c.b16 %v2047, %v2043
        %v2116 = vpack.c.b16 %v2048, %v2044
        %v2117 = vpack.c.b16 %v2049, %v2045
        %v2118 = vpack.c.b16 %v2050, %v2046
        %v2119 = vpack.c.b16 %v2055, %v2051
        %v2120 = vpack.c.b16 %v2056, %v2052
        %v2121 = vpack.c.b16 %v2057, %v2053
        %v2122 = vpack.c.b16 %v2058, %v2054
        %v2251 = vunpack.c.l.b16 %v261
        %v2252 = vunpack.c.l.b16 %v262
        %v2253 = vunpack.c.l.b16 %v263
        %v2254 = vunpack.c.l.b16 %v264
        %v2255 = vunpack.c.l.b16 %v265
        %v2256 = vunpack.c.l.b16 %v266
        %v2257 = vunpack.c.l.b16 %v267
        %v2258 = vunpack.c.l.b16 %v268
        %v2259 = vunpack.c.l.b16 %v269
        %v2260 = vunpack.c.l.b16 %v270
        %v2261 = vunpack.c.l.b16 %v271
        %v2262 = vunpack.c.l.b16 %v272
        %v2263 = vunpack.c.l.b16 %v273
        %v2264 = vunpack.c.l.b16 %v274
        %v2265 = vunpack.c.l.b16 %v275
        %v2266 = vunpack.c.l.b16 %v276
        %v2267 = vunpack.c.l.b16 %v277
        %v2268 = vunpack.c.l.b16 %v278
        %v2269 = vunpack.c.l.b16 %v279
        %v2270 = vunpack.c.l.b16 %v280
        %v2271 = vunpack.c.l.b16 %v281
        %v2272 = vunpack.c.l.b16 %v282
        %v2273 = vunpack.c.l.b16 %v283
        %v2274 = vunpack.c.l.b16 %v284
        %v2275 = vunpack.c.l.b16 %v285
        %v2276 = vunpack.c.l.b16 %v286
        %v2277 = vunpack.c.l.b16 %v287
        %v2278 = vunpack.c.l.b16 %v288
        %v2279 = vunpack.c.l.b16 %v289
        %v2280 = vunpack.c.l.b16 %v290
        %v2281 = vunpack.c.l.b16 %v291
        %v2282 = vunpack.c.l.b16 %v292
        %v2283 = vunpack.c.l.b16 %v293
        %v2284 = vunpack.c.l.b16 %v294
        %v2285 = vunpack.c.l.b16 %v295
        %v2286 = vunpack.c.l.b16 %v296
        %v2287 = vunpack.c.l.b16 %v297
        %v2288 = vunpack.c.l.b16 %v298
        %v2289 = vunpack.c.l.b16 %v299
        %v2290 = vunpack.c.l.b16 %v300
        %v2291 = vunpack.c.l.b16 %v301
        %v2292 = vunpack.c.l.b16 %v302
        %v2293 = vunpack.c.l.b16 %v303
        %v2294 = vunpack.c.l.b16 %v304
        %v2295 = vunpack.c.l.b16 %v305
        %v2296 = vunpack.c.l.b16 %v306
        %v2297 = vunpack.c.l.b16 %v307
        %v2298 = vunpack.c.l.b16 %v308
        %v2299 = vunpack.c.l.b16 %v309
        %v2300 = vunpack.c.l.b16 %v310
        %v2301 = vunpack.c.l.b16 %v311
        %v2302 = vunpack.c.l.b16 %v312
        %v2303 = vunpack.c.l.b16 %v313
        %v2304 = vunpack.c.l.b16 %v314
        %v2305 = vunpack.c.l.b16 %v315
        %v2306 = vunpack.c.l.b16 %v316
        %v2307 = vunpack.c.l.b16 %v317
        %v2308 = vunpack.c.l.b16 %v318
        %v2309 = vunpack.c.l.b16 %v319
        %v2310 = vunpack.c.l.b16 %v320
        %v2311 = vunpack.c.l.b16 %v321
        %v2312 = vunpack.c.l.b16 %v322
        %v2313 = vunpack.c.l.b16 %v323
        %v2314 = vunpack.c.l.b16 %v324
        %v2315 = vpack.c.b16 %v2252, %v2251
        %v2316 = vpack.c.b16 %v2254, %v2253
        %v2317 = vpack.c.b16 %v2256, %v2255
        %v2318 = vpack.c.b16 %v2258, %v2257
        %v2319 = vpack.c.b16 %v2260, %v2259
        %v2320 = vpack.c.b16 %v2262, %v2261
        %v2321 = vpack.c.b16 %v2264, %v2263
        %v2322 = vpack.c.b16 %v2266, %v2265
        %v2323 = vpack.c.b16 %v2268, %v2267
        %v2324 = vpack.c.b16 %v2270, %v2269
        %v2325 = vpack.c.b16 %v2272, %v2271
        %v2326 = vpack.c.b16 %v2274, %v2273
        %v2327 = vpack.c.b16 %v2276, %v2275
        %v2328 = vpack.c.b16 %v2278, %v2277
        %v2329 = vpack.c.b16 %v2280, %v2279
        %v2330 = vpack.c.b16 %v2282, %v2281
        %v2331 = vpack.c.b16 %v2284, %v2283
        %v2332 = vpack.c.b16 %v2286, %v2285
        %v2333 = vpack.c.b16 %v2288, %v2287
        %v2334 = vpack.c.b16 %v2290, %v2289
        %v2335 = vpack.c.b16 %v2292, %v2291
        %v2336 = vpack.c.b16 %v2294, %v2293
        %v2337 = vpack.c.b16 %v2296, %v2295
        %v2338 = vpack.c.b16 %v2298, %v2297
        %v2339 = vpack.c.b16 %v2300, %v2299
        %v2340 = vpack.c.b16 %v2302, %v2301
        %v2341 = vpack.c.b16 %v2304, %v2303
        %v2342 = vpack.c.b16 %v2306, %v2305
        %v2343 = vpack.c.b16 %v2308, %v2307
        %v2344 = vpack.c.b16 %v2310, %v2309
        %v2345 = vpack.c.b16 %v2312, %v2311
        %v2346 = vpack.c.b16 %v2314, %v2313
        %2379 = vmatprep.subr.bf16.mxu0 0
        %2380 = vmatpush1.bf16.msra.mxu0 %v2322
        %2381 = vmatprep.subr.bf16.mxu0 0
        %2382 = vmatpush1.bf16.msra.mxu0 %v2321
        %2383 = vmatprep.subr.bf16.mxu0 0
        %2384 = vmatpush1.bf16.msra.mxu0 %v2320
        %2385 = vmatprep.subr.bf16.mxu0 0
        %2386 = vmatpush1.bf16.msra.mxu0 %v2319
        %2387 = vmatprep.subr.bf16.mxu0 0
        %2388 = vmatpush1.bf16.msra.mxu0 %v2318
        %2389 = vmatprep.subr.bf16.mxu0 0
        %2390 = vmatpush1.bf16.msra.mxu0 %v2317
        %2391 = vmatprep.subr.bf16.mxu0 0
        %2392 = vmatpush1.bf16.msra.mxu0 %v2316
        %2393 = vmatprep.subr.bf16.mxu0 0
        %2394 = vmatpush1.bf16.msra.mxu0 %v2315
        %2395 = vmatprep.subr.bf16.mxu0 0
        %2396 = vmatpush2.bf16.msra.mxu0 %v2330
        %2397 = vmatprep.subr.bf16.mxu0 0
        %2398 = vmatpush2.bf16.msra.mxu0 %v2329
        %2399 = vmatprep.subr.bf16.mxu0 0
        %2400 = vmatpush2.bf16.msra.mxu0 %v2328
        %2401 = vmatprep.subr.bf16.mxu0 0
        %2402 = vmatpush2.bf16.msra.mxu0 %v2327
        %2403 = vmatprep.subr.bf16.mxu0 0
        %2404 = vmatpush2.bf16.msra.mxu0 %v2326
        %2405 = vmatprep.subr.bf16.mxu0 0
        %2406 = vmatpush2.bf16.msra.mxu0 %v2325
        %2407 = vmatprep.subr.bf16.mxu0 0
        %2408 = vmatpush2.bf16.msra.mxu0 %v2324
        %2409 = vmatprep.subr.bf16.mxu0 0
        %2410 = vmatpush2.bf16.msra.mxu0 %v2323
        %2411 = vmatprep.mubr.bf16.mxu0 %v2060
        %2412 = vmatmul.mubr.bf16.gmra.mxu0 %v2059
        %v2413 = vpop.f32.mrf.mxu0
        %v2414 = vadd.f32 %v1741, %v2413
        %v2415 = vpop.f32.mrf.mxu0
        %v2416 = vpop.f32.mrf.mxu0
        %v2417 = vadd.f32 %v1744, %v2416
        %v2418 = vpop.f32.mrf.mxu0
        %2419 = vmatprep.mubr.bf16.mxu0 %v2064
        %2420 = vmatmul.mubr.bf16.gmra.mxu0 %v2063
        %v2421 = vpop.f32.mrf.mxu0
        %v2422 = vadd.f32 %v1749, %v2421
        %v2423 = vpop.f32.mrf.mxu0
        %v2424 = vpop.f32.mrf.mxu0
        %v2425 = vadd.f32 %v1752, %v2424
        %v2426 = vpop.f32.mrf.mxu0
        %2427 = vmatprep.mubr.bf16.mxu0 %v2068
        %2428 = vmatmul.mubr.bf16.gmra.mxu0 %v2067
        %v2429 = vpop.f32.mrf.mxu0
        %v2430 = vadd.f32 %v1757, %v2429
        %v2431 = vpop.f32.mrf.mxu0
        %v2432 = vpop.f32.mrf.mxu0
        %v2433 = vadd.f32 %v1760, %v2432
        %v2434 = vpop.f32.mrf.mxu0
        %2435 = vmatprep.mubr.bf16.mxu0 %v2072
        %2436 = vmatmul.mubr.bf16.gmra.mxu0 %v2071
        %v2437 = vpop.f32.mrf.mxu0
        %v2438 = vadd.f32 %v1765, %v2437
        %v2439 = vpop.f32.mrf.mxu0
        %v2440 = vpop.f32.mrf.mxu0
        %v2441 = vadd.f32 %v1768, %v2440
        %v2442 = vpop.f32.mrf.mxu0
        %2443 = vmatprep.mubr.bf16.mxu0 %v2076
        %2444 = vmatmul.mubr.bf16.gmra.mxu0 %v2075
        %v2445 = vpop.f32.mrf.mxu0
        %v2446 = vadd.f32 %v1773, %v2445
        %v2447 = vpop.f32.mrf.mxu0
        %v2448 = vpop.f32.mrf.mxu0
        %v2449 = vadd.f32 %v1776, %v2448
        %v2450 = vpop.f32.mrf.mxu0
        %2451 = vmatprep.mubr.bf16.mxu0 %v2080
        %2452 = vmatmul.mubr.bf16.gmra.mxu0 %v2079
        %v2453 = vpop.f32.mrf.mxu0
        %v2454 = vadd.f32 %v1781, %v2453
        %v2455 = vpop.f32.mrf.mxu0
        %v2456 = vpop.f32.mrf.mxu0
        %v2457 = vadd.f32 %v1784, %v2456
        %v2458 = vpop.f32.mrf.mxu0
        %2459 = vmatprep.mubr.bf16.mxu0 %v2084
        %2460 = vmatmul.mubr.bf16.gmra.mxu0 %v2083
        %v2461 = vpop.f32.mrf.mxu0
        %v2462 = vadd.f32 %v1789, %v2461
        %v2463 = vpop.f32.mrf.mxu0
        %v2464 = vpop.f32.mrf.mxu0
        %v2465 = vadd.f32 %v1792, %v2464
        %v2466 = vpop.f32.mrf.mxu0
        %2467 = vmatprep.mubr.bf16.mxu0 %v2088
        %2468 = vmatmul.mubr.bf16.gmra.mxu0 %v2087
        %v2469 = vpop.f32.mrf.mxu0
        %v2470 = vadd.f32 %v1797, %v2469
        %v2471 = vpop.f32.mrf.mxu0
        %v2472 = vpop.f32.mrf.mxu0
        %v2473 = vadd.f32 %v1800, %v2472
        %v2474 = vpop.f32.mrf.mxu0
        %2475 = vmatprep.mubr.bf16.mxu0 %v2092
        %2476 = vmatmul.mubr.bf16.gmra.mxu0 %v2091
        %v2477 = vpop.f32.mrf.mxu0
        %v2478 = vadd.f32 %v1805, %v2477
        %v2479 = vpop.f32.mrf.mxu0
        %v2480 = vpop.f32.mrf.mxu0
        %v2481 = vadd.f32 %v1808, %v2480
        %v2482 = vpop.f32.mrf.mxu0
        %2483 = vmatprep.mubr.bf16.mxu0 %v2096
        %2484 = vmatmul.mubr.bf16.gmra.mxu0 %v2095
        %v2485 = vpop.f32.mrf.mxu0
        %v2486 = vadd.f32 %v1813, %v2485
        %v2487 = vpop.f32.mrf.mxu0
        %v2488 = vpop.f32.mrf.mxu0
        %v2489 = vadd.f32 %v1816, %v2488
        %v2490 = vpop.f32.mrf.mxu0
        %2491 = vmatprep.mubr.bf16.mxu0 %v2100
        %2492 = vmatmul.mubr.bf16.gmra.mxu0 %v2099
        %v2493 = vpop.f32.mrf.mxu0
        %v2494 = vadd.f32 %v1821, %v2493
        %v2495 = vpop.f32.mrf.mxu0
        %v2496 = vpop.f32.mrf.mxu0
        %v2497 = vadd.f32 %v1824, %v2496
        %v2498 = vpop.f32.mrf.mxu0
        %2499 = vmatprep.mubr.bf16.mxu0 %v2104
        %2500 = vmatmul.mubr.bf16.gmra.mxu0 %v2103
        %v2501 = vpop.f32.mrf.mxu0
        %v2502 = vadd.f32 %v1829, %v2501
        %v2503 = vpop.f32.mrf.mxu0
        %v2504 = vpop.f32.mrf.mxu0
        %v2505 = vadd.f32 %v1832, %v2504
        %v2506 = vpop.f32.mrf.mxu0
        %2507 = vmatprep.mubr.bf16.mxu0 %v2108
        %2508 = vmatmul.mubr.bf16.gmra.mxu0 %v2107
        %v2509 = vpop.f32.mrf.mxu0
        %v2510 = vadd.f32 %v1837, %v2509
        %v2511 = vpop.f32.mrf.mxu0
        %v2512 = vpop.f32.mrf.mxu0
        %v2513 = vadd.f32 %v1840, %v2512
        %v2514 = vpop.f32.mrf.mxu0
        %2515 = vmatprep.mubr.bf16.mxu0 %v2112
        %2516 = vmatmul.mubr.bf16.gmra.mxu0 %v2111
        %v2517 = vpop.f32.mrf.mxu0
        %v2518 = vadd.f32 %v1845, %v2517
        %v2519 = vpop.f32.mrf.mxu0
        %v2520 = vpop.f32.mrf.mxu0
        %v2521 = vadd.f32 %v1848, %v2520
        %v2522 = vpop.f32.mrf.mxu0
        %2523 = vmatprep.mubr.bf16.mxu0 %v2116
        %2524 = vmatmul.mubr.bf16.gmra.mxu0 %v2115
        %v2525 = vpop.f32.mrf.mxu0
        %v2526 = vadd.f32 %v1853, %v2525
        %v2527 = vpop.f32.mrf.mxu0
        %v2528 = vpop.f32.mrf.mxu0
        %v2529 = vadd.f32 %v1856, %v2528
        %v2530 = vpop.f32.mrf.mxu0
        %2531 = vmatprep.mubr.bf16.mxu0 %v2120
        %2532 = vmatmul.mubr.bf16.gmra.mxu0 %v2119
        %v2533 = vpop.f32.mrf.mxu0
        %v2534 = vadd.f32 %v1861, %v2533
        %v2535 = vpop.f32.mrf.mxu0
        %v2536 = vpop.f32.mrf.mxu0
        %v2537 = vadd.f32 %v1864, %v2536
        %v2538 = vpop.f32.mrf.mxu0
        %2539 = vdwg.mxu0
        %2540 = vmatprep.subr.bf16.mxu0 0
        %2541 = vmatpush1.bf16.msra.mxu0 %v2338
        %2542 = vmatprep.subr.bf16.mxu0 0
        %2543 = vmatpush1.bf16.msra.mxu0 %v2337
        %2544 = vmatprep.subr.bf16.mxu0 0
        %2545 = vmatpush1.bf16.msra.mxu0 %v2336
        %2546 = vmatprep.subr.bf16.mxu0 0
        %2547 = vmatpush1.bf16.msra.mxu0 %v2335
        %2548 = vmatprep.subr.bf16.mxu0 0
        %2549 = vmatpush1.bf16.msra.mxu0 %v2334
        %2550 = vmatprep.subr.bf16.mxu0 0
        %2551 = vmatpush1.bf16.msra.mxu0 %v2333
        %2552 = vmatprep.subr.bf16.mxu0 0
        %2553 = vmatpush1.bf16.msra.mxu0 %v2332
        %2554 = vmatprep.subr.bf16.mxu0 0
        %2555 = vmatpush1.bf16.msra.mxu0 %v2331
        %2556 = vmatprep.subr.bf16.mxu0 0
        %2557 = vmatpush2.bf16.msra.mxu0 %v2346
        %2558 = vmatprep.subr.bf16.mxu0 0
        %2559 = vmatpush2.bf16.msra.mxu0 %v2345
        %2560 = vmatprep.subr.bf16.mxu0 0
        %2561 = vmatpush2.bf16.msra.mxu0 %v2344
        %2562 = vmatprep.subr.bf16.mxu0 0
        %2563 = vmatpush2.bf16.msra.mxu0 %v2343
        %2564 = vmatprep.subr.bf16.mxu0 0
        %2565 = vmatpush2.bf16.msra.mxu0 %v2342
        %2566 = vmatprep.subr.bf16.mxu0 0
        %2567 = vmatpush2.bf16.msra.mxu0 %v2341
        %2568 = vmatprep.subr.bf16.mxu0 0
        %2569 = vmatpush2.bf16.msra.mxu0 %v2340
        %2570 = vmatprep.subr.bf16.mxu0 0
        %2571 = vmatpush2.bf16.msra.mxu0 %v2339
        %2572 = vmatprep.mubr.bf16.mxu0 %v2062
        %2573 = vmatmul.mubr.bf16.gmra.mxu0 %v2061
        %v2574 = vpop.f32.mrf.mxu0
        %v2575 = vadd.f32 %v2414, %v2574
        %v2576 = vpop.f32.mrf.mxu0
        %v2577 = vpop.f32.mrf.mxu0
        %v2578 = vadd.f32 %v2417, %v2577
        %v2579 = vpop.f32.mrf.mxu0
        %2580 = vmatprep.mubr.bf16.mxu0 %v2066
        %2581 = vmatmul.mubr.bf16.gmra.mxu0 %v2065
        %v2582 = vpop.f32.mrf.mxu0
        %v2583 = vadd.f32 %v2422, %v2582
        %v2584 = vpop.f32.mrf.mxu0
        %v2585 = vpop.f32.mrf.mxu0
        %v2586 = vadd.f32 %v2425, %v2585
        %v2587 = vpop.f32.mrf.mxu0
        %2588 = vmatprep.mubr.bf16.mxu0 %v2070
        %2589 = vmatmul.mubr.bf16.gmra.mxu0 %v2069
        %v2590 = vpop.f32.mrf.mxu0
        %v2591 = vadd.f32 %v2430, %v2590
        %v2592 = vpop.f32.mrf.mxu0
        %v2593 = vpop.f32.mrf.mxu0
        %v2594 = vadd.f32 %v2433, %v2593
        %v2595 = vpop.f32.mrf.mxu0
        %2596 = vmatprep.mubr.bf16.mxu0 %v2074
        %2597 = vmatmul.mubr.bf16.gmra.mxu0 %v2073
        %v2598 = vpop.f32.mrf.mxu0
        %v2599 = vadd.f32 %v2438, %v2598
        %v2600 = vpop.f32.mrf.mxu0
        %v2601 = vpop.f32.mrf.mxu0
        %v2602 = vadd.f32 %v2441, %v2601
        %v2603 = vpop.f32.mrf.mxu0
        %2604 = vmatprep.mubr.bf16.mxu0 %v2078
        %2605 = vmatmul.mubr.bf16.gmra.mxu0 %v2077
        %v2606 = vpop.f32.mrf.mxu0
        %v2607 = vadd.f32 %v2446, %v2606
        %v2608 = vpop.f32.mrf.mxu0
        %v2609 = vpop.f32.mrf.mxu0
        %v2610 = vadd.f32 %v2449, %v2609
        %v2611 = vpop.f32.mrf.mxu0
        %2612 = vmatprep.mubr.bf16.mxu0 %v2082
        %2613 = vmatmul.mubr.bf16.gmra.mxu0 %v2081
        %v2614 = vpop.f32.mrf.mxu0
        %v2615 = vadd.f32 %v2454, %v2614
        %v2616 = vpop.f32.mrf.mxu0
        %v2617 = vpop.f32.mrf.mxu0
        %v2618 = vadd.f32 %v2457, %v2617
        %v2619 = vpop.f32.mrf.mxu0
        %2620 = vmatprep.mubr.bf16.mxu0 %v2086
        %2621 = vmatmul.mubr.bf16.gmra.mxu0 %v2085
        %v2622 = vpop.f32.mrf.mxu0
        %v2623 = vadd.f32 %v2462, %v2622
        %v2624 = vpop.f32.mrf.mxu0
        %v2625 = vpop.f32.mrf.mxu0
        %v2626 = vadd.f32 %v2465, %v2625
        %v2627 = vpop.f32.mrf.mxu0
        %2628 = vmatprep.mubr.bf16.mxu0 %v2090
        %2629 = vmatmul.mubr.bf16.gmra.mxu0 %v2089
        %v2630 = vpop.f32.mrf.mxu0
        %v2631 = vadd.f32 %v2470, %v2630
        %v2632 = vpop.f32.mrf.mxu0
        %v2633 = vpop.f32.mrf.mxu0
        %v2634 = vadd.f32 %v2473, %v2633
        %v2635 = vpop.f32.mrf.mxu0
        %2636 = vmatprep.mubr.bf16.mxu0 %v2094
        %2637 = vmatmul.mubr.bf16.gmra.mxu0 %v2093
        %v2638 = vpop.f32.mrf.mxu0
        %v2639 = vadd.f32 %v2478, %v2638
        %v2640 = vpop.f32.mrf.mxu0
        %v2641 = vpop.f32.mrf.mxu0
        %v2642 = vadd.f32 %v2481, %v2641
        %v2643 = vpop.f32.mrf.mxu0
        %2644 = vmatprep.mubr.bf16.mxu0 %v2098
        %2645 = vmatmul.mubr.bf16.gmra.mxu0 %v2097
        %v2646 = vpop.f32.mrf.mxu0
        %v2647 = vadd.f32 %v2486, %v2646
        %v2648 = vpop.f32.mrf.mxu0
        %v2649 = vpop.f32.mrf.mxu0
        %v2650 = vadd.f32 %v2489, %v2649
        %v2651 = vpop.f32.mrf.mxu0
        %2652 = vmatprep.mubr.bf16.mxu0 %v2102
        %2653 = vmatmul.mubr.bf16.gmra.mxu0 %v2101
        %v2654 = vpop.f32.mrf.mxu0
        %v2655 = vadd.f32 %v2494, %v2654
        %v2656 = vpop.f32.mrf.mxu0
        %v2657 = vpop.f32.mrf.mxu0
        %v2658 = vadd.f32 %v2497, %v2657
        %v2659 = vpop.f32.mrf.mxu0
        %2660 = vmatprep.mubr.bf16.mxu0 %v2106
        %2661 = vmatmul.mubr.bf16.gmra.mxu0 %v2105
        %v2662 = vpop.f32.mrf.mxu0
        %v2663 = vadd.f32 %v2502, %v2662
        %v2664 = vpop.f32.mrf.mxu0
        %v2665 = vpop.f32.mrf.mxu0
        %v2666 = vadd.f32 %v2505, %v2665
        %v2667 = vpop.f32.mrf.mxu0
        %2668 = vmatprep.mubr.bf16.mxu0 %v2110
        %2669 = vmatmul.mubr.bf16.gmra.mxu0 %v2109
        %v2670 = vpop.f32.mrf.mxu0
        %v2671 = vadd.f32 %v2510, %v2670
        %v2672 = vpop.f32.mrf.mxu0
        %v2673 = vpop.f32.mrf.mxu0
        %v2674 = vadd.f32 %v2513, %v2673
        %v2675 = vpop.f32.mrf.mxu0
        %2676 = vmatprep.mubr.bf16.mxu0 %v2114
        %2677 = vmatmul.mubr.bf16.gmra.mxu0 %v2113
        %v2678 = vpop.f32.mrf.mxu0
        %v2679 = vadd.f32 %v2518, %v2678
        %v2680 = vpop.f32.mrf.mxu0
        %v2681 = vpop.f32.mrf.mxu0
        %v2682 = vadd.f32 %v2521, %v2681
        %v2683 = vpop.f32.mrf.mxu0
        %2684 = vmatprep.mubr.bf16.mxu0 %v2118
        %2685 = vmatmul.mubr.bf16.gmra.mxu0 %v2117
        %v2686 = vpop.f32.mrf.mxu0
        %v2687 = vadd.f32 %v2526, %v2686
        %v2688 = vpop.f32.mrf.mxu0
        %v2689 = vpop.f32.mrf.mxu0
        %v2690 = vadd.f32 %v2529, %v2689
        %v2691 = vpop.f32.mrf.mxu0
        %2692 = vmatprep.mubr.bf16.mxu0 %v2122
        %2693 = vmatmul.mubr.bf16.gmra.mxu0 %v2121
        %v2694 = vpop.f32.mrf.mxu0
        %v2695 = vadd.f32 %v2534, %v2694
        %v2696 = vpop.f32.mrf.mxu0
        %v2697 = vpop.f32.mrf.mxu0
        %v2698 = vadd.f32 %v2537, %v2697
        %v2699 = vpop.f32.mrf.mxu0
        %2700 = vdwg.mxu0
        %s2701 = scalar_lea.vmem %s195, 48
        %v2702 = vld [vmem:[%s2701] sm:$0xff]
        %v2703 = vld [vmem:[%s2701 + $0x10] sm:$0xff]
        %v2704 = vld [vmem:[%s2701 + $0x30] sm:$0xff]
        %v2705 = vld [vmem:[%s2701 + $0x40] sm:$0xff]
        %v2706 = vld [vmem:[%s2701 + $0x60] sm:$0xff]
        %v2707 = vld [vmem:[%s2701 + $0x70] sm:$0xff]
        %v2708 = vld [vmem:[%s2701 + $0x90] sm:$0xff]
        %v2709 = vld [vmem:[%s2701 + $0xa0] sm:$0xff]
        %v2710 = vld [vmem:[%s2701 + $0xc0] sm:$0xff]
        %v2711 = vld [vmem:[%s2701 + $0xd0] sm:$0xff]
        %v2712 = vld [vmem:[%s2701 + $0xf0] sm:$0xff]
        %v2713 = vld [vmem:[%s2701 + $0x100] sm:$0xff]
        %v2714 = vld [vmem:[%s2701 + $0x120] sm:$0xff]
        %v2715 = vld [vmem:[%s2701 + $0x130] sm:$0xff]
        %v2716 = vld [vmem:[%s2701 + $0x150] sm:$0xff]
        %v2717 = vld [vmem:[%s2701 + $0x160] sm:$0xff]
        %v2718 = vld [vmem:[%s2701 + $0x180] sm:$0xff]
        %v2719 = vld [vmem:[%s2701 + $0x190] sm:$0xff]
        %v2720 = vld [vmem:[%s2701 + $0x1b0] sm:$0xff]
        %v2721 = vld [vmem:[%s2701 + $0x1c0] sm:$0xff]
        %v2722 = vld [vmem:[%s2701 + $0x1e0] sm:$0xff]
        %v2723 = vld [vmem:[%s2701 + $0x1f0] sm:$0xff]
        %v2724 = vld [vmem:[%s2701 + $0x210] sm:$0xff]
        %v2725 = vld [vmem:[%s2701 + $0x220] sm:$0xff]
        %v2726 = vld [vmem:[%s2701 + $0x240] sm:$0xff]
        %v2727 = vld [vmem:[%s2701 + $0x250] sm:$0xff]
        %v2728 = vld [vmem:[%s2701 + $0x270] sm:$0xff]
        %v2729 = vld [vmem:[%s2701 + $0x280] sm:$0xff]
        %v2730 = vld [vmem:[%s2701 + $0x2a0] sm:$0xff]
        %v2731 = vld [vmem:[%s2701 + $0x2b0] sm:$0xff]
        %v2732 = vld [vmem:[%s2701 + $0x2d0] sm:$0xff]
        %v2733 = vld [vmem:[%s2701 + $0x2e0] sm:$0xff]
        %s2734 = scalar_lea.vmem %s1, 512
        %v2735 = vld [vmem:[%s2734] sm:$0xf]
        %v2736 = vld [vmem:[%s2734 + $0x4] sm:$0xf]
        %v2737 = vld [vmem:[%s2734 + $0x8] sm:$0xf]
        %v2738 = vld [vmem:[%s2734 + $0xc] sm:$0xf]
        %v2739 = vld [vmem:[%s2734 + $0x10] sm:$0xf]
        %v2740 = vld [vmem:[%s2734 + $0x14] sm:$0xf]
        %v2741 = vld [vmem:[%s2734 + $0x18] sm:$0xf]
        %v2742 = vld [vmem:[%s2734 + $0x1c] sm:$0xf]
        %v2743 = vld [vmem:[%s2734 + $0x20] sm:$0xf]
        %v2744 = vld [vmem:[%s2734 + $0x24] sm:$0xf]
        %v2745 = vld [vmem:[%s2734 + $0x28] sm:$0xf]
        %v2746 = vld [vmem:[%s2734 + $0x2c] sm:$0xf]
        %v2747 = vld [vmem:[%s2734 + $0x30] sm:$0xf]
        %v2748 = vld [vmem:[%s2734 + $0x34] sm:$0xf]
        %v2749 = vld [vmem:[%s2734 + $0x38] sm:$0xf]
        %v2750 = vld [vmem:[%s2734 + $0x3c] sm:$0xf]
        %v2751 = vld [vmem:[%s2734 + $0x40] sm:$0xf]
        %v2752 = vld [vmem:[%s2734 + $0x44] sm:$0xf]
        %v2753 = vld [vmem:[%s2734 + $0x48] sm:$0xf]
        %v2754 = vld [vmem:[%s2734 + $0x4c] sm:$0xf]
        %v2755 = vld [vmem:[%s2734 + $0x50] sm:$0xf]
        %v2756 = vld [vmem:[%s2734 + $0x54] sm:$0xf]
        %v2757 = vld [vmem:[%s2734 + $0x58] sm:$0xf]
        %v2758 = vld [vmem:[%s2734 + $0x5c] sm:$0xf]
        %v2759 = vld [vmem:[%s2734 + $0x60] sm:$0xf]
        %v2760 = vld [vmem:[%s2734 + $0x64] sm:$0xf]
        %v2761 = vld [vmem:[%s2734 + $0x68] sm:$0xf]
        %v2762 = vld [vmem:[%s2734 + $0x6c] sm:$0xf]
        %v2763 = vld [vmem:[%s2734 + $0x70] sm:$0xf]
        %v2764 = vld [vmem:[%s2734 + $0x74] sm:$0xf]
        %v2765 = vld [vmem:[%s2734 + $0x78] sm:$0xf]
        %v2766 = vld [vmem:[%s2734 + $0x7c] sm:$0xf]
        %v2799 = vunpack.c.l.b16 %v2702
        %v2800 = vunpack.c.h.b16 %v2702
        %v2801 = vunpack.c.l.b16 %v2703
        %v2802 = vunpack.c.h.b16 %v2703
        %v2803 = vunpack.c.l.b16 %v2704
        %v2804 = vunpack.c.h.b16 %v2704
        %v2805 = vunpack.c.l.b16 %v2705
        %v2806 = vunpack.c.h.b16 %v2705
        %v2807 = vunpack.c.l.b16 %v2706
        %v2808 = vunpack.c.h.b16 %v2706
        %v2809 = vunpack.c.l.b16 %v2707
        %v2810 = vunpack.c.h.b16 %v2707
        %v2811 = vunpack.c.l.b16 %v2708
        %v2812 = vunpack.c.h.b16 %v2708
        %v2813 = vunpack.c.l.b16 %v2709
        %v2814 = vunpack.c.h.b16 %v2709
        %v2815 = vunpack.c.l.b16 %v2710
        %v2816 = vunpack.c.h.b16 %v2710
        %v2817 = vunpack.c.l.b16 %v2711
        %v2818 = vunpack.c.h.b16 %v2711
        %v2819 = vunpack.c.l.b16 %v2712
        %v2820 = vunpack.c.h.b16 %v2712
        %v2821 = vunpack.c.l.b16 %v2713
        %v2822 = vunpack.c.h.b16 %v2713
        %v2823 = vunpack.c.l.b16 %v2714
        %v2824 = vunpack.c.h.b16 %v2714
        %v2825 = vunpack.c.l.b16 %v2715
        %v2826 = vunpack.c.h.b16 %v2715
        %v2827 = vunpack.c.l.b16 %v2716
        %v2828 = vunpack.c.h.b16 %v2716
        %v2829 = vunpack.c.l.b16 %v2717
        %v2830 = vunpack.c.h.b16 %v2717
        %v2831 = vunpack.c.l.b16 %v2718
        %v2832 = vunpack.c.h.b16 %v2718
        %v2833 = vunpack.c.l.b16 %v2719
        %v2834 = vunpack.c.h.b16 %v2719
        %v2835 = vunpack.c.l.b16 %v2720
        %v2836 = vunpack.c.h.b16 %v2720
        %v2837 = vunpack.c.l.b16 %v2721
        %v2838 = vunpack.c.h.b16 %v2721
        %v2839 = vunpack.c.l.b16 %v2722
        %v2840 = vunpack.c.h.b16 %v2722
        %v2841 = vunpack.c.l.b16 %v2723
        %v2842 = vunpack.c.h.b16 %v2723
        %v2843 = vunpack.c.l.b16 %v2724
        %v2844 = vunpack.c.h.b16 %v2724
        %v2845 = vunpack.c.l.b16 %v2725
        %v2846 = vunpack.c.h.b16 %v2725
        %v2847 = vunpack.c.l.b16 %v2726
        %v2848 = vunpack.c.h.b16 %v2726
        %v2849 = vunpack.c.l.b16 %v2727
        %v2850 = vunpack.c.h.b16 %v2727
        %v2851 = vunpack.c.l.b16 %v2728
        %v2852 = vunpack.c.h.b16 %v2728
        %v2853 = vunpack.c.l.b16 %v2729
        %v2854 = vunpack.c.h.b16 %v2729
        %v2855 = vunpack.c.l.b16 %v2730
        %v2856 = vunpack.c.h.b16 %v2730
        %v2857 = vunpack.c.l.b16 %v2731
        %v2858 = vunpack.c.h.b16 %v2731
        %v2859 = vunpack.c.l.b16 %v2732
        %v2860 = vunpack.c.h.b16 %v2732
        %v2861 = vunpack.c.l.b16 %v2733
        %v2862 = vunpack.c.h.b16 %v2733
        %v2863 = vpack.c.b16 %v2801, %v2799
        %v2864 = vpack.c.b16 %v2802, %v2800
        %v2865 = vpack.c.b16 %v2805, %v2803
        %v2866 = vpack.c.b16 %v2806, %v2804
        %v2867 = vpack.c.b16 %v2809, %v2807
        %v2868 = vpack.c.b16 %v2810, %v2808
        %v2869 = vpack.c.b16 %v2813, %v2811
        %v2870 = vpack.c.b16 %v2814, %v2812
        %v2871 = vpack.c.b16 %v2817, %v2815
        %v2872 = vpack.c.b16 %v2818, %v2816
        %v2873 = vpack.c.b16 %v2821, %v2819
        %v2874 = vpack.c.b16 %v2822, %v2820
        %v2875 = vpack.c.b16 %v2825, %v2823
        %v2876 = vpack.c.b16 %v2826, %v2824
        %v2877 = vpack.c.b16 %v2829, %v2827
        %v2878 = vpack.c.b16 %v2830, %v2828
        %v2879 = vpack.c.b16 %v2833, %v2831
        %v2880 = vpack.c.b16 %v2834, %v2832
        %v2881 = vpack.c.b16 %v2837, %v2835
        %v2882 = vpack.c.b16 %v2838, %v2836
        %v2883 = vpack.c.b16 %v2841, %v2839
        %v2884 = vpack.c.b16 %v2842, %v2840
        %v2885 = vpack.c.b16 %v2845, %v2843
        %v2886 = vpack.c.b16 %v2846, %v2844
        %v2887 = vpack.c.b16 %v2849, %v2847
        %v2888 = vpack.c.b16 %v2850, %v2848
        %v2889 = vpack.c.b16 %v2853, %v2851
        %v2890 = vpack.c.b16 %v2854, %v2852
        %v2891 = vpack.c.b16 %v2857, %v2855
        %v2892 = vpack.c.b16 %v2858, %v2856
        %v2893 = vpack.c.b16 %v2861, %v2859
        %v2894 = vpack.c.b16 %v2862, %v2860
        %v2959 = vunpack.c.l.b16 %v2735
        %v2960 = vunpack.c.l.b16 %v2736
        %v2961 = vunpack.c.l.b16 %v2737
        %v2962 = vunpack.c.l.b16 %v2738
        %v2963 = vunpack.c.l.b16 %v2739
        %v2964 = vunpack.c.l.b16 %v2740
        %v2965 = vunpack.c.l.b16 %v2741
        %v2966 = vunpack.c.l.b16 %v2742
        %v2967 = vunpack.c.l.b16 %v2743
        %v2968 = vunpack.c.l.b16 %v2744
        %v2969 = vunpack.c.l.b16 %v2745
        %v2970 = vunpack.c.l.b16 %v2746
        %v2971 = vunpack.c.l.b16 %v2747
        %v2972 = vunpack.c.l.b16 %v2748
        %v2973 = vunpack.c.l.b16 %v2749
        %v2974 = vunpack.c.l.b16 %v2750
        %v2975 = vunpack.c.l.b16 %v2751
        %v2976 = vunpack.c.l.b16 %v2752
        %v2977 = vunpack.c.l.b16 %v2753
        %v2978 = vunpack.c.l.b16 %v2754
        %v2979 = vunpack.c.l.b16 %v2755
        %v2980 = vunpack.c.l.b16 %v2756
        %v2981 = vunpack.c.l.b16 %v2757
        %v2982 = vunpack.c.l.b16 %v2758
        %v2983 = vunpack.c.l.b16 %v2759
        %v2984 = vunpack.c.l.b16 %v2760
        %v2985 = vunpack.c.l.b16 %v2761
        %v2986 = vunpack.c.l.b16 %v2762
        %v2987 = vunpack.c.l.b16 %v2763
        %v2988 = vunpack.c.l.b16 %v2764
        %v2989 = vunpack.c.l.b16 %v2765
        %v2990 = vunpack.c.l.b16 %v2766
        %v2991 = vpack.c.b16 %v2960, %v2959
        %v2992 = vpack.c.b16 %v2962, %v2961
        %v2993 = vpack.c.b16 %v2964, %v2963
        %v2994 = vpack.c.b16 %v2966, %v2965
        %v2995 = vpack.c.b16 %v2968, %v2967
        %v2996 = vpack.c.b16 %v2970, %v2969
        %v2997 = vpack.c.b16 %v2972, %v2971
        %v2998 = vpack.c.b16 %v2974, %v2973
        %v2999 = vpack.c.b16 %v2976, %v2975
        %v3000 = vpack.c.b16 %v2978, %v2977
        %v3001 = vpack.c.b16 %v2980, %v2979
        %v3002 = vpack.c.b16 %v2982, %v2981
        %v3003 = vpack.c.b16 %v2984, %v2983
        %v3004 = vpack.c.b16 %v2986, %v2985
        %v3005 = vpack.c.b16 %v2988, %v2987
        %v3006 = vpack.c.b16 %v2990, %v2989
        %3023 = vmatprep.subr.bf16.mxu0 0
        %3024 = vmatpush1.bf16.msra.mxu0 %v2998
        %3025 = vmatprep.subr.bf16.mxu0 0
        %3026 = vmatpush1.bf16.msra.mxu0 %v2997
        %3027 = vmatprep.subr.bf16.mxu0 0
        %3028 = vmatpush1.bf16.msra.mxu0 %v2996
        %3029 = vmatprep.subr.bf16.mxu0 0
        %3030 = vmatpush1.bf16.msra.mxu0 %v2995
        %3031 = vmatprep.subr.bf16.mxu0 0
        %3032 = vmatpush1.bf16.msra.mxu0 %v2994
        %3033 = vmatprep.subr.bf16.mxu0 0
        %3034 = vmatpush1.bf16.msra.mxu0 %v2993
        %3035 = vmatprep.subr.bf16.mxu0 0
        %3036 = vmatpush1.bf16.msra.mxu0 %v2992
        %3037 = vmatprep.subr.bf16.mxu0 0
        %3038 = vmatpush1.bf16.msra.mxu0 %v2991
        %3039 = vmatprep.subr.bf16.mxu0 0
        %3040 = vmatpush2.bf16.msra.mxu0 %v3006
        %3041 = vmatprep.subr.bf16.mxu0 0
        %3042 = vmatpush2.bf16.msra.mxu0 %v3005
        %3043 = vmatprep.subr.bf16.mxu0 0
        %3044 = vmatpush2.bf16.msra.mxu0 %v3004
        %3045 = vmatprep.subr.bf16.mxu0 0
        %3046 = vmatpush2.bf16.msra.mxu0 %v3003
        %3047 = vmatprep.subr.bf16.mxu0 0
        %3048 = vmatpush2.bf16.msra.mxu0 %v3002
        %3049 = vmatprep.subr.bf16.mxu0 0
        %3050 = vmatpush2.bf16.msra.mxu0 %v3001
        %3051 = vmatprep.subr.bf16.mxu0 0
        %3052 = vmatpush2.bf16.msra.mxu0 %v3000
        %3053 = vmatprep.subr.bf16.mxu0 0
        %3054 = vmatpush2.bf16.msra.mxu0 %v2999
        %3055 = vmatprep.mubr.bf16.mxu0 %v2864
        %3056 = vmatmul.mubr.bf16.gmra.mxu0 %v2863
        %v3057 = vpop.f32.mrf.mxu0
        %v3058 = vadd.f32 0.0, %v3057
        %v3059 = vpop.f32.mrf.mxu0
        %v3060 = vpop.f32.mrf.mxu0
        %v3061 = vadd.f32 0.0, %v3060
        %v3062 = vpop.f32.mrf.mxu0
        %3063 = vmatprep.mubr.bf16.mxu0 %v2866
        %3064 = vmatmul.mubr.bf16.gmra.mxu0 %v2865
        %v3065 = vpop.f32.mrf.mxu0
        %v3066 = vadd.f32 0.0, %v3065
        %v3067 = vpop.f32.mrf.mxu0
        %v3068 = vpop.f32.mrf.mxu0
        %v3069 = vadd.f32 0.0, %v3068
        %v3070 = vpop.f32.mrf.mxu0
        %3071 = vmatprep.mubr.bf16.mxu0 %v2868
        %3072 = vmatmul.mubr.bf16.gmra.mxu0 %v2867
        %v3073 = vpop.f32.mrf.mxu0
        %v3074 = vadd.f32 0.0, %v3073
        %v3075 = vpop.f32.mrf.mxu0
        %v3076 = vpop.f32.mrf.mxu0
        %v3077 = vadd.f32 0.0, %v3076
        %v3078 = vpop.f32.mrf.mxu0
        %3079 = vmatprep.mubr.bf16.mxu0 %v2870
        %3080 = vmatmul.mubr.bf16.gmra.mxu0 %v2869
        %v3081 = vpop.f32.mrf.mxu0
        %v3082 = vadd.f32 0.0, %v3081
        %v3083 = vpop.f32.mrf.mxu0
        %v3084 = vpop.f32.mrf.mxu0
        %v3085 = vadd.f32 0.0, %v3084
        %v3086 = vpop.f32.mrf.mxu0
        %3087 = vmatprep.mubr.bf16.mxu0 %v2872
        %3088 = vmatmul.mubr.bf16.gmra.mxu0 %v2871
        %v3089 = vpop.f32.mrf.mxu0
        %v3090 = vadd.f32 0.0, %v3089
        %v3091 = vpop.f32.mrf.mxu0
        %v3092 = vpop.f32.mrf.mxu0
        %v3093 = vadd.f32 0.0, %v3092
        %v3094 = vpop.f32.mrf.mxu0
        %3095 = vmatprep.mubr.bf16.mxu0 %v2874
        %3096 = vmatmul.mubr.bf16.gmra.mxu0 %v2873
        %v3097 = vpop.f32.mrf.mxu0
        %v3098 = vadd.f32 0.0, %v3097
        %v3099 = vpop.f32.mrf.mxu0
        %v3100 = vpop.f32.mrf.mxu0
        %v3101 = vadd.f32 0.0, %v3100
        %v3102 = vpop.f32.mrf.mxu0
        %3103 = vmatprep.mubr.bf16.mxu0 %v2876
        %3104 = vmatmul.mubr.bf16.gmra.mxu0 %v2875
        %v3105 = vpop.f32.mrf.mxu0
        %v3106 = vadd.f32 0.0, %v3105
        %v3107 = vpop.f32.mrf.mxu0
        %v3108 = vpop.f32.mrf.mxu0
        %v3109 = vadd.f32 0.0, %v3108
        %v3110 = vpop.f32.mrf.mxu0
        %3111 = vmatprep.mubr.bf16.mxu0 %v2878
        %3112 = vmatmul.mubr.bf16.gmra.mxu0 %v2877
        %v3113 = vpop.f32.mrf.mxu0
        %v3114 = vadd.f32 0.0, %v3113
        %v3115 = vpop.f32.mrf.mxu0
        %v3116 = vpop.f32.mrf.mxu0
        %v3117 = vadd.f32 0.0, %v3116
        %v3118 = vpop.f32.mrf.mxu0
        %3119 = vmatprep.mubr.bf16.mxu0 %v2880
        %3120 = vmatmul.mubr.bf16.gmra.mxu0 %v2879
        %v3121 = vpop.f32.mrf.mxu0
        %v3122 = vadd.f32 0.0, %v3121
        %v3123 = vpop.f32.mrf.mxu0
        %v3124 = vpop.f32.mrf.mxu0
        %v3125 = vadd.f32 0.0, %v3124
        %v3126 = vpop.f32.mrf.mxu0
        %3127 = vmatprep.mubr.bf16.mxu0 %v2882
        %3128 = vmatmul.mubr.bf16.gmra.mxu0 %v2881
        %v3129 = vpop.f32.mrf.mxu0
        %v3130 = vadd.f32 0.0, %v3129
        %v3131 = vpop.f32.mrf.mxu0
        %v3132 = vpop.f32.mrf.mxu0
        %v3133 = vadd.f32 0.0, %v3132
        %v3134 = vpop.f32.mrf.mxu0
        %3135 = vmatprep.mubr.bf16.mxu0 %v2884
        %3136 = vmatmul.mubr.bf16.gmra.mxu0 %v2883
        %v3137 = vpop.f32.mrf.mxu0
        %v3138 = vadd.f32 0.0, %v3137
        %v3139 = vpop.f32.mrf.mxu0
        %v3140 = vpop.f32.mrf.mxu0
        %v3141 = vadd.f32 0.0, %v3140
        %v3142 = vpop.f32.mrf.mxu0
        %3143 = vmatprep.mubr.bf16.mxu0 %v2886
        %3144 = vmatmul.mubr.bf16.gmra.mxu0 %v2885
        %v3145 = vpop.f32.mrf.mxu0
        %v3146 = vadd.f32 0.0, %v3145
        %v3147 = vpop.f32.mrf.mxu0
        %v3148 = vpop.f32.mrf.mxu0
        %v3149 = vadd.f32 0.0, %v3148
        %v3150 = vpop.f32.mrf.mxu0
        %3151 = vmatprep.mubr.bf16.mxu0 %v2888
        %3152 = vmatmul.mubr.bf16.gmra.mxu0 %v2887
        %v3153 = vpop.f32.mrf.mxu0
        %v3154 = vadd.f32 0.0, %v3153
        %v3155 = vpop.f32.mrf.mxu0
        %v3156 = vpop.f32.mrf.mxu0
        %v3157 = vadd.f32 0.0, %v3156
        %v3158 = vpop.f32.mrf.mxu0
        %3159 = vmatprep.mubr.bf16.mxu0 %v2890
        %3160 = vmatmul.mubr.bf16.gmra.mxu0 %v2889
        %v3161 = vpop.f32.mrf.mxu0
        %v3162 = vadd.f32 0.0, %v3161
        %v3163 = vpop.f32.mrf.mxu0
        %v3164 = vpop.f32.mrf.mxu0
        %v3165 = vadd.f32 0.0, %v3164
        %v3166 = vpop.f32.mrf.mxu0
        %3167 = vmatprep.mubr.bf16.mxu0 %v2892
        %3168 = vmatmul.mubr.bf16.gmra.mxu0 %v2891
        %v3169 = vpop.f32.mrf.mxu0
        %v3170 = vadd.f32 0.0, %v3169
        %v3171 = vpop.f32.mrf.mxu0
        %v3172 = vpop.f32.mrf.mxu0
        %v3173 = vadd.f32 0.0, %v3172
        %v3174 = vpop.f32.mrf.mxu0
        %3175 = vmatprep.mubr.bf16.mxu0 %v2894
        %3176 = vmatmul.mubr.bf16.gmra.mxu0 %v2893
        %v3177 = vpop.f32.mrf.mxu0
        %v3178 = vadd.f32 0.0, %v3177
        %v3179 = vpop.f32.mrf.mxu0
        %v3180 = vpop.f32.mrf.mxu0
        %v3181 = vadd.f32 0.0, %v3180
        %v3182 = vpop.f32.mrf.mxu0
        %3183 = vdwg.mxu0
        %v3184 = vadd.f32 %v2575, %v3058
        %v3185 = vadd.f32 %v2578, %v3061
        %v3186 = vadd.f32 %v2583, %v3066
        %v3187 = vadd.f32 %v2586, %v3069
        %v3188 = vadd.f32 %v2591, %v3074
        %v3189 = vadd.f32 %v2594, %v3077
        %v3190 = vadd.f32 %v2599, %v3082
        %v3191 = vadd.f32 %v2602, %v3085
        %v3192 = vadd.f32 %v2607, %v3090
        %v3193 = vadd.f32 %v2610, %v3093
        %v3194 = vadd.f32 %v2615, %v3098
        %v3195 = vadd.f32 %v2618, %v3101
        %v3196 = vadd.f32 %v2623, %v3106
        %v3197 = vadd.f32 %v2626, %v3109
        %v3198 = vadd.f32 %v2631, %v3114
        %v3199 = vadd.f32 %v2634, %v3117
        %v3200 = vadd.f32 %v2639, %v3122
        %v3201 = vadd.f32 %v2642, %v3125
        %v3202 = vadd.f32 %v2647, %v3130
        %v3203 = vadd.f32 %v2650, %v3133
        %v3204 = vadd.f32 %v2655, %v3138
        %v3205 = vadd.f32 %v2658, %v3141
        %v3206 = vadd.f32 %v2663, %v3146
        %v3207 = vadd.f32 %v2666, %v3149
        %v3208 = vadd.f32 %v2671, %v3154
        %v3209 = vadd.f32 %v2674, %v3157
        %v3210 = vadd.f32 %v2679, %v3162
        %v3211 = vadd.f32 %v2682, %v3165
        %v3212 = vadd.f32 %v2687, %v3170
        %v3213 = vadd.f32 %v2690, %v3173
        %v3214 = vadd.f32 %v2695, %v3178
        %v3215 = vadd.f32 %v2698, %v3181
        %v3216 = vld [vmem:[%s2701] sm:$0xf]
        %v3217 = vld [vmem:[%s2701 + $0x10] sm:$0xf]
        %v3218 = vld [vmem:[%s2701 + $0x20] sm:$0x1]
        %v3219 = vld [vmem:[%s2701 + $0x30] sm:$0xf]
        %v3220 = vld [vmem:[%s2701 + $0x40] sm:$0xf]
        %v3221 = vld [vmem:[%s2701 + $0x50] sm:$0x1]
        %v3222 = vld [vmem:[%s2701 + $0x60] sm:$0xf]
        %v3223 = vld [vmem:[%s2701 + $0x70] sm:$0xf]
        %v3224 = vld [vmem:[%s2701 + $0x80] sm:$0x1]
        %v3225 = vld [vmem:[%s2701 + $0x90] sm:$0xf]
        %v3226 = vld [vmem:[%s2701 + $0xa0] sm:$0xf]
        %v3227 = vld [vmem:[%s2701 + $0xb0] sm:$0x1]
        %v3228 = vld [vmem:[%s2701 + $0xc0] sm:$0xf]
        %v3229 = vld [vmem:[%s2701 + $0xd0] sm:$0xf]
        %v3230 = vld [vmem:[%s2701 + $0xe0] sm:$0x1]
        %v3231 = vld [vmem:[%s2701 + $0xf0] sm:$0xf]
        %v3232 = vld [vmem:[%s2701 + $0x100] sm:$0xf]
        %v3233 = vld [vmem:[%s2701 + $0x110] sm:$0x1]
        %v3234 = vld [vmem:[%s2701 + $0x120] sm:$0xf]
        %v3235 = vld [vmem:[%s2701 + $0x130] sm:$0xf]
        %v3236 = vld [vmem:[%s2701 + $0x140] sm:$0x1]
        %v3237 = vld [vmem:[%s2701 + $0x150] sm:$0xf]
        %v3238 = vld [vmem:[%s2701 + $0x160] sm:$0xf]
        %v3239 = vld [vmem:[%s2701 + $0x170] sm:$0x1]
        %v3240 = vld [vmem:[%s2701 + $0x180] sm:$0xf]
        %v3241 = vld [vmem:[%s2701 + $0x190] sm:$0xf]
        %v3242 = vld [vmem:[%s2701 + $0x1a0] sm:$0x1]
        %v3243 = vld [vmem:[%s2701 + $0x1b0] sm:$0xf]
        %v3244 = vld [vmem:[%s2701 + $0x1c0] sm:$0xf]
        %v3245 = vld [vmem:[%s2701 + $0x1d0] sm:$0x1]
        %v3246 = vld [vmem:[%s2701 + $0x1e0] sm:$0xf]
        %v3247 = vld [vmem:[%s2701 + $0x1f0] sm:$0xf]
        %v3248 = vld [vmem:[%s2701 + $0x200] sm:$0x1]
        %v3249 = vld [vmem:[%s2701 + $0x210] sm:$0xf]
        %v3250 = vld [vmem:[%s2701 + $0x220] sm:$0xf]
        %v3251 = vld [vmem:[%s2701 + $0x230] sm:$0x1]
        %v3252 = vld [vmem:[%s2701 + $0x240] sm:$0xf]
        %v3253 = vld [vmem:[%s2701 + $0x250] sm:$0xf]
        %v3254 = vld [vmem:[%s2701 + $0x260] sm:$0x1]
        %v3255 = vld [vmem:[%s2701 + $0x270] sm:$0xf]
        %v3256 = vld [vmem:[%s2701 + $0x280] sm:$0xf]
        %v3257 = vld [vmem:[%s2701 + $0x290] sm:$0x1]
        %v3258 = vld [vmem:[%s2701 + $0x2a0] sm:$0xf]
        %v3259 = vld [vmem:[%s2701 + $0x2b0] sm:$0xf]
        %v3260 = vld [vmem:[%s2701 + $0x2c0] sm:$0x1]
        %v3261 = vld [vmem:[%s2701 + $0x2d0] sm:$0xf]
        %v3262 = vld [vmem:[%s2701 + $0x2e0] sm:$0xf]
        %v3263 = vld [vmem:[%s2701 + $0x2f0] sm:$0x1]
        %v3265 = vshrl.u32 %v3216, 16
        %v3267 = vrot.slane %v3265, 4
        %v3268 = vshll.u32 %v3216, 16
        %v3270 = vrot.slane %v3268, 5
        %v3271 = vor.u32 %v3267, %v3270
        %v3272 = vrot.slane %v3271, 4
        %v3274 = vshll.u32 %v3217, 16
        %v3276 = vrot.slane %v3274, 5
        %v3277 = vsel %vm391, %v3272, %v3276
        %v3278 = vshrl.u32 %v3217, 16
        %v3280 = vrot.slane %v3278, 4
        %v3281 = vor.u32 %v3280, %v3276
        %v3282 = vrot.slane %v3281, 4
        %v3284 = vshll.u32 %v3218, 16
        %v3286 = vrot.slane %v3284, 5
        %v3287 = vsel %vm391, %v3282, %v3286
        %v3289 = vshrl.u32 %v3219, 16
        %v3291 = vrot.slane %v3289, 4
        %v3292 = vshll.u32 %v3219, 16
        %v3294 = vrot.slane %v3292, 5
        %v3295 = vor.u32 %v3291, %v3294
        %v3296 = vrot.slane %v3295, 4
        %v3298 = vshll.u32 %v3220, 16
        %v3300 = vrot.slane %v3298, 5
        %v3301 = vsel %vm391, %v3296, %v3300
        %v3302 = vshrl.u32 %v3220, 16
        %v3304 = vrot.slane %v3302, 4
        %v3305 = vor.u32 %v3304, %v3300
        %v3306 = vrot.slane %v3305, 4
        %v3308 = vshll.u32 %v3221, 16
        %v3310 = vrot.slane %v3308, 5
        %v3311 = vsel %vm391, %v3306, %v3310
        %v3313 = vshrl.u32 %v3222, 16
        %v3315 = vrot.slane %v3313, 4
        %v3316 = vshll.u32 %v3222, 16
        %v3318 = vrot.slane %v3316, 5
        %v3319 = vor.u32 %v3315, %v3318
        %v3320 = vrot.slane %v3319, 4
        %v3322 = vshll.u32 %v3223, 16
        %v3324 = vrot.slane %v3322, 5
        %v3325 = vsel %vm391, %v3320, %v3324
        %v3326 = vshrl.u32 %v3223, 16
        %v3328 = vrot.slane %v3326, 4
        %v3329 = vor.u32 %v3328, %v3324
        %v3330 = vrot.slane %v3329, 4
        %v3332 = vshll.u32 %v3224, 16
        %v3334 = vrot.slane %v3332, 5
        %v3335 = vsel %vm391, %v3330, %v3334
        %v3337 = vshrl.u32 %v3225, 16
        %v3339 = vrot.slane %v3337, 4
        %v3340 = vshll.u32 %v3225, 16
        %v3342 = vrot.slane %v3340, 5
        %v3343 = vor.u32 %v3339, %v3342
        %v3344 = vrot.slane %v3343, 4
        %v3346 = vshll.u32 %v3226, 16
        %v3348 = vrot.slane %v3346, 5
        %v3349 = vsel %vm391, %v3344, %v3348
        %v3350 = vshrl.u32 %v3226, 16
        %v3352 = vrot.slane %v3350, 4
        %v3353 = vor.u32 %v3352, %v3348
        %v3354 = vrot.slane %v3353, 4
        %v3356 = vshll.u32 %v3227, 16
        %v3358 = vrot.slane %v3356, 5
        %v3359 = vsel %vm391, %v3354, %v3358
        %v3361 = vshrl.u32 %v3228, 16
        %v3363 = vrot.slane %v3361, 4
        %v3364 = vshll.u32 %v3228, 16
        %v3366 = vrot.slane %v3364, 5
        %v3367 = vor.u32 %v3363, %v3366
        %v3368 = vrot.slane %v3367, 4
        %v3370 = vshll.u32 %v3229, 16
        %v3372 = vrot.slane %v3370, 5
        %v3373 = vsel %vm391, %v3368, %v3372
        %v3374 = vshrl.u32 %v3229, 16
        %v3376 = vrot.slane %v3374, 4
        %v3377 = vor.u32 %v3376, %v3372
        %v3378 = vrot.slane %v3377, 4
        %v3380 = vshll.u32 %v3230, 16
        %v3382 = vrot.slane %v3380, 5
        %v3383 = vsel %vm391, %v3378, %v3382
        %v3385 = vshrl.u32 %v3231, 16
        %v3387 = vrot.slane %v3385, 4
        %v3388 = vshll.u32 %v3231, 16
        %v3390 = vrot.slane %v3388, 5
        %v3391 = vor.u32 %v3387, %v3390
        %v3392 = vrot.slane %v3391, 4
        %v3394 = vshll.u32 %v3232, 16
        %v3396 = vrot.slane %v3394, 5
        %v3397 = vsel %vm391, %v3392, %v3396
        %v3398 = vshrl.u32 %v3232, 16
        %v3400 = vrot.slane %v3398, 4
        %v3401 = vor.u32 %v3400, %v3396
        %v3402 = vrot.slane %v3401, 4
        %v3404 = vshll.u32 %v3233, 16
        %v3406 = vrot.slane %v3404, 5
        %v3407 = vsel %vm391, %v3402, %v3406
        %v3409 = vshrl.u32 %v3234, 16
        %v3411 = vrot.slane %v3409, 4
        %v3412 = vshll.u32 %v3234, 16
        %v3414 = vrot.slane %v3412, 5
        %v3415 = vor.u32 %v3411, %v3414
        %v3416 = vrot.slane %v3415, 4
        %v3418 = vshll.u32 %v3235, 16
        %v3420 = vrot.slane %v3418, 5
        %v3421 = vsel %vm391, %v3416, %v3420
        %v3422 = vshrl.u32 %v3235, 16
        %v3424 = vrot.slane %v3422, 4
        %v3425 = vor.u32 %v3424, %v3420
        %v3426 = vrot.slane %v3425, 4
        %v3428 = vshll.u32 %v3236, 16
        %v3430 = vrot.slane %v3428, 5
        %v3431 = vsel %vm391, %v3426, %v3430
        %v3433 = vshrl.u32 %v3237, 16
        %v3435 = vrot.slane %v3433, 4
        %v3436 = vshll.u32 %v3237, 16
        %v3438 = vrot.slane %v3436, 5
        %v3439 = vor.u32 %v3435, %v3438
        %v3440 = vrot.slane %v3439, 4
        %v3442 = vshll.u32 %v3238, 16
        %v3444 = vrot.slane %v3442, 5
        %v3445 = vsel %vm391, %v3440, %v3444
        %v3446 = vshrl.u32 %v3238, 16
        %v3448 = vrot.slane %v3446, 4
        %v3449 = vor.u32 %v3448, %v3444
        %v3450 = vrot.slane %v3449, 4
        %v3452 = vshll.u32 %v3239, 16
        %v3454 = vrot.slane %v3452, 5
        %v3455 = vsel %vm391, %v3450, %v3454
        %v3457 = vshrl.u32 %v3240, 16
        %v3459 = vrot.slane %v3457, 4
        %v3460 = vshll.u32 %v3240, 16
        %v3462 = vrot.slane %v3460, 5
        %v3463 = vor.u32 %v3459, %v3462
        %v3464 = vrot.slane %v3463, 4
        %v3466 = vshll.u32 %v3241, 16
        %v3468 = vrot.slane %v3466, 5
        %v3469 = vsel %vm391, %v3464, %v3468
        %v3470 = vshrl.u32 %v3241, 16
        %v3472 = vrot.slane %v3470, 4
        %v3473 = vor.u32 %v3472, %v3468
        %v3474 = vrot.slane %v3473, 4
        %v3476 = vshll.u32 %v3242, 16
        %v3478 = vrot.slane %v3476, 5
        %v3479 = vsel %vm391, %v3474, %v3478
        %v3481 = vshrl.u32 %v3243, 16
        %v3483 = vrot.slane %v3481, 4
        %v3484 = vshll.u32 %v3243, 16
        %v3486 = vrot.slane %v3484, 5
        %v3487 = vor.u32 %v3483, %v3486
        %v3488 = vrot.slane %v3487, 4
        %v3490 = vshll.u32 %v3244, 16
        %v3492 = vrot.slane %v3490, 5
        %v3493 = vsel %vm391, %v3488, %v3492
        %v3494 = vshrl.u32 %v3244, 16
        %v3496 = vrot.slane %v3494, 4
        %v3497 = vor.u32 %v3496, %v3492
        %v3498 = vrot.slane %v3497, 4
        %v3500 = vshll.u32 %v3245, 16
        %v3502 = vrot.slane %v3500, 5
        %v3503 = vsel %vm391, %v3498, %v3502
        %v3505 = vshrl.u32 %v3246, 16
        %v3507 = vrot.slane %v3505, 4
        %v3508 = vshll.u32 %v3246, 16
        %v3510 = vrot.slane %v3508, 5
        %v3511 = vor.u32 %v3507, %v3510
        %v3512 = vrot.slane %v3511, 4
        %v3514 = vshll.u32 %v3247, 16
        %v3516 = vrot.slane %v3514, 5
        %v3517 = vsel %vm391, %v3512, %v3516
        %v3518 = vshrl.u32 %v3247, 16
        %v3520 = vrot.slane %v3518, 4
        %v3521 = vor.u32 %v3520, %v3516
        %v3522 = vrot.slane %v3521, 4
        %v3524 = vshll.u32 %v3248, 16
        %v3526 = vrot.slane %v3524, 5
        %v3527 = vsel %vm391, %v3522, %v3526
        %v3529 = vshrl.u32 %v3249, 16
        %v3531 = vrot.slane %v3529, 4
        %v3532 = vshll.u32 %v3249, 16
        %v3534 = vrot.slane %v3532, 5
        %v3535 = vor.u32 %v3531, %v3534
        %v3536 = vrot.slane %v3535, 4
        %v3538 = vshll.u32 %v3250, 16
        %v3540 = vrot.slane %v3538, 5
        %v3541 = vsel %vm391, %v3536, %v3540
        %v3542 = vshrl.u32 %v3250, 16
        %v3544 = vrot.slane %v3542, 4
        %v3545 = vor.u32 %v3544, %v3540
        %v3546 = vrot.slane %v3545, 4
        %v3548 = vshll.u32 %v3251, 16
        %v3550 = vrot.slane %v3548, 5
        %v3551 = vsel %vm391, %v3546, %v3550
        %v3553 = vshrl.u32 %v3252, 16
        %v3555 = vrot.slane %v3553, 4
        %v3556 = vshll.u32 %v3252, 16
        %v3558 = vrot.slane %v3556, 5
        %v3559 = vor.u32 %v3555, %v3558
        %v3560 = vrot.slane %v3559, 4
        %v3562 = vshll.u32 %v3253, 16
        %v3564 = vrot.slane %v3562, 5
        %v3565 = vsel %vm391, %v3560, %v3564
        %v3566 = vshrl.u32 %v3253, 16
        %v3568 = vrot.slane %v3566, 4
        %v3569 = vor.u32 %v3568, %v3564
        %v3570 = vrot.slane %v3569, 4
        %v3572 = vshll.u32 %v3254, 16
        %v3574 = vrot.slane %v3572, 5
        %v3575 = vsel %vm391, %v3570, %v3574
        %v3577 = vshrl.u32 %v3255, 16
        %v3579 = vrot.slane %v3577, 4
        %v3580 = vshll.u32 %v3255, 16
        %v3582 = vrot.slane %v3580, 5
        %v3583 = vor.u32 %v3579, %v3582
        %v3584 = vrot.slane %v3583, 4
        %v3586 = vshll.u32 %v3256, 16
        %v3588 = vrot.slane %v3586, 5
        %v3589 = vsel %vm391, %v3584, %v3588
        %v3590 = vshrl.u32 %v3256, 16
        %v3592 = vrot.slane %v3590, 4
        %v3593 = vor.u32 %v3592, %v3588
        %v3594 = vrot.slane %v3593, 4
        %v3596 = vshll.u32 %v3257, 16
        %v3598 = vrot.slane %v3596, 5
        %v3599 = vsel %vm391, %v3594, %v3598
        %v3601 = vshrl.u32 %v3258, 16
        %v3603 = vrot.slane %v3601, 4
        %v3604 = vshll.u32 %v3258, 16
        %v3606 = vrot.slane %v3604, 5
        %v3607 = vor.u32 %v3603, %v3606
        %v3608 = vrot.slane %v3607, 4
        %v3610 = vshll.u32 %v3259, 16
        %v3612 = vrot.slane %v3610, 5
        %v3613 = vsel %vm391, %v3608, %v3612
        %v3614 = vshrl.u32 %v3259, 16
        %v3616 = vrot.slane %v3614, 4
        %v3617 = vor.u32 %v3616, %v3612
        %v3618 = vrot.slane %v3617, 4
        %v3620 = vshll.u32 %v3260, 16
        %v3622 = vrot.slane %v3620, 5
        %v3623 = vsel %vm391, %v3618, %v3622
        %v3625 = vshrl.u32 %v3261, 16
        %v3627 = vrot.slane %v3625, 4
        %v3628 = vshll.u32 %v3261, 16
        %v3630 = vrot.slane %v3628, 5
        %v3631 = vor.u32 %v3627, %v3630
        %v3632 = vrot.slane %v3631, 4
        %v3634 = vshll.u32 %v3262, 16
        %v3636 = vrot.slane %v3634, 5
        %v3637 = vsel %vm391, %v3632, %v3636
        %v3638 = vshrl.u32 %v3262, 16
        %v3640 = vrot.slane %v3638, 4
        %v3641 = vor.u32 %v3640, %v3636
        %v3642 = vrot.slane %v3641, 4
        %v3644 = vshll.u32 %v3263, 16
        %v3646 = vrot.slane %v3644, 5
        %v3647 = vsel %vm391, %v3642, %v3646
        %s3648 = scalar_lea.vmem %s1, 768
        %v3649 = vld [vmem:[%s3648] sm:$0xf]
        %v3650 = vld [vmem:[%s3648 + $0x4] sm:$0xf]
        %v3651 = vld [vmem:[%s3648 + $0x8] sm:$0xf]
        %v3652 = vld [vmem:[%s3648 + $0xc] sm:$0xf]
        %v3653 = vld [vmem:[%s3648 + $0x10] sm:$0xf]
        %v3654 = vld [vmem:[%s3648 + $0x14] sm:$0xf]
        %v3655 = vld [vmem:[%s3648 + $0x18] sm:$0xf]
        %v3656 = vld [vmem:[%s3648 + $0x1c] sm:$0xf]
        %v3657 = vld [vmem:[%s3648 + $0x20] sm:$0xf]
        %v3658 = vld [vmem:[%s3648 + $0x24] sm:$0xf]
        %v3659 = vld [vmem:[%s3648 + $0x28] sm:$0xf]
        %v3660 = vld [vmem:[%s3648 + $0x2c] sm:$0xf]
        %v3661 = vld [vmem:[%s3648 + $0x30] sm:$0xf]
        %v3662 = vld [vmem:[%s3648 + $0x34] sm:$0xf]
        %v3663 = vld [vmem:[%s3648 + $0x38] sm:$0xf]
        %v3664 = vld [vmem:[%s3648 + $0x3c] sm:$0xf]
        %v3665 = vunpack.c.l.b16 %v3277
        %v3666 = vunpack.c.l.b16 %v3287
        %v3667 = vunpack.c.l.b16 %v3301
        %v3668 = vunpack.c.l.b16 %v3311
        %v3669 = vunpack.c.l.b16 %v3325
        %v3670 = vunpack.c.l.b16 %v3335
        %v3671 = vunpack.c.l.b16 %v3349
        %v3672 = vunpack.c.l.b16 %v3359
        %v3673 = vunpack.c.l.b16 %v3373
        %v3674 = vunpack.c.l.b16 %v3383
        %v3675 = vunpack.c.l.b16 %v3397
        %v3676 = vunpack.c.l.b16 %v3407
        %v3677 = vunpack.c.l.b16 %v3421
        %v3678 = vunpack.c.l.b16 %v3431
        %v3679 = vunpack.c.l.b16 %v3445
        %v3680 = vunpack.c.l.b16 %v3455
        %v3681 = vunpack.c.l.b16 %v3469
        %v3682 = vunpack.c.l.b16 %v3479
        %v3683 = vunpack.c.l.b16 %v3493
        %v3684 = vunpack.c.l.b16 %v3503
        %v3685 = vunpack.c.l.b16 %v3517
        %v3686 = vunpack.c.l.b16 %v3527
        %v3687 = vunpack.c.l.b16 %v3541
        %v3688 = vunpack.c.l.b16 %v3551
        %v3689 = vunpack.c.l.b16 %v3565
        %v3690 = vunpack.c.l.b16 %v3575
        %v3691 = vunpack.c.l.b16 %v3589
        %v3692 = vunpack.c.l.b16 %v3599
        %v3693 = vunpack.c.l.b16 %v3613
        %v3694 = vunpack.c.l.b16 %v3623
        %v3695 = vunpack.c.l.b16 %v3637
        %v3696 = vunpack.c.l.b16 %v3647
        %v3697 = vpack.c.b16 %v3666, %v3665
        %v3698 = vpack.c.b16 %v3668, %v3667
        %v3699 = vpack.c.b16 %v3670, %v3669
        %v3700 = vpack.c.b16 %v3672, %v3671
        %v3701 = vpack.c.b16 %v3674, %v3673
        %v3702 = vpack.c.b16 %v3676, %v3675
        %v3703 = vpack.c.b16 %v3678, %v3677
        %v3704 = vpack.c.b16 %v3680, %v3679
        %v3705 = vpack.c.b16 %v3682, %v3681
        %v3706 = vpack.c.b16 %v3684, %v3683
        %v3707 = vpack.c.b16 %v3686, %v3685
        %v3708 = vpack.c.b16 %v3688, %v3687
        %v3709 = vpack.c.b16 %v3690, %v3689
        %v3710 = vpack.c.b16 %v3692, %v3691
        %v3711 = vpack.c.b16 %v3694, %v3693
        %v3712 = vpack.c.b16 %v3696, %v3695
        %v3745 = vunpack.c.l.b16 %v3649
        %v3746 = vunpack.c.l.b16 %v3650
        %v3747 = vunpack.c.l.b16 %v3651
        %v3748 = vunpack.c.l.b16 %v3652
        %v3749 = vunpack.c.l.b16 %v3653
        %v3750 = vunpack.c.l.b16 %v3654
        %v3751 = vunpack.c.l.b16 %v3655
        %v3752 = vunpack.c.l.b16 %v3656
        %v3753 = vunpack.c.l.b16 %v3657
        %v3754 = vunpack.c.l.b16 %v3658
        %v3755 = vunpack.c.l.b16 %v3659
        %v3756 = vunpack.c.l.b16 %v3660
        %v3757 = vunpack.c.l.b16 %v3661
        %v3758 = vunpack.c.l.b16 %v3662
        %v3759 = vunpack.c.l.b16 %v3663
        %v3760 = vunpack.c.l.b16 %v3664
        %v3761 = vpack.c.b16 %v3746, %v3745
        %v3762 = vpack.c.b16 %v3748, %v3747
        %v3763 = vpack.c.b16 %v3750, %v3749
        %v3764 = vpack.c.b16 %v3752, %v3751
        %v3765 = vpack.c.b16 %v3754, %v3753
        %v3766 = vpack.c.b16 %v3756, %v3755
        %v3767 = vpack.c.b16 %v3758, %v3757
        %v3768 = vpack.c.b16 %v3760, %v3759
        %3777 = vmatprep.subr.bf16.mxu0 0
        %3778 = vmatpush1.bf16.msra.mxu0 %v3768
        %3779 = vmatprep.subr.bf16.mxu0 0
        %3780 = vmatpush1.bf16.msra.mxu0 %v3767
        %3781 = vmatprep.subr.bf16.mxu0 0
        %3782 = vmatpush1.bf16.msra.mxu0 %v3766
        %3783 = vmatprep.subr.bf16.mxu0 0
        %3784 = vmatpush1.bf16.msra.mxu0 %v3765
        %3785 = vmatprep.subr.bf16.mxu0 0
        %3786 = vmatpush1.bf16.msra.mxu0 %v3764
        %3787 = vmatprep.subr.bf16.mxu0 0
        %3788 = vmatpush1.bf16.msra.mxu0 %v3763
        %3789 = vmatprep.subr.bf16.mxu0 0
        %3790 = vmatpush1.bf16.msra.mxu0 %v3762
        %3791 = vmatprep.subr.bf16.mxu0 0
        %3792 = vmatpush1.bf16.msra.mxu0 %v3761
        %3793 = vmatprep.subr.bf16.mxu0 0
        %3794 = vmatpush2.bf16.msra.mxu0 0
        %3795 = vmatprep.subr.bf16.mxu0 0
        %3796 = vmatpush2.bf16.msra.mxu0 0
        %3797 = vmatprep.subr.bf16.mxu0 0
        %3798 = vmatpush2.bf16.msra.mxu0 0
        %3799 = vmatprep.subr.bf16.mxu0 0
        %3800 = vmatpush2.bf16.msra.mxu0 0
        %3801 = vmatprep.subr.bf16.mxu0 0
        %3802 = vmatpush2.bf16.msra.mxu0 0
        %3803 = vmatprep.subr.bf16.mxu0 0
        %3804 = vmatpush2.bf16.msra.mxu0 0
        %3805 = vmatprep.subr.bf16.mxu0 0
        %3806 = vmatpush2.bf16.msra.mxu0 0
        %3807 = vmatprep.subr.bf16.mxu0 0
        %3808 = vmatpush2.bf16.msra.mxu0 0
        %3809 = vmatprep.mubr.bf16.mxu0 0
        %3810 = vmatmul.mubr.bf16.gmra.mxu0 %v3697
        %v3811 = vpop.f32.mrf.mxu0
        %v3812 = vadd.f32 0.0, %v3811
        %v3813 = vpop.f32.mrf.mxu0
        %v3814 = vpop.f32.mrf.mxu0
        %v3815 = vadd.f32 0.0, %v3814
        %v3816 = vpop.f32.mrf.mxu0
        %3817 = vmatprep.mubr.bf16.mxu0 0
        %3818 = vmatmul.mubr.bf16.gmra.mxu0 %v3698
        %v3819 = vpop.f32.mrf.mxu0
        %v3820 = vadd.f32 0.0, %v3819
        %v3821 = vpop.f32.mrf.mxu0
        %v3822 = vpop.f32.mrf.mxu0
        %v3823 = vadd.f32 0.0, %v3822
        %v3824 = vpop.f32.mrf.mxu0
        %3825 = vmatprep.mubr.bf16.mxu0 0
        %3826 = vmatmul.mubr.bf16.gmra.mxu0 %v3699
        %v3827 = vpop.f32.mrf.mxu0
        %v3828 = vadd.f32 0.0, %v3827
        %v3829 = vpop.f32.mrf.mxu0
        %v3830 = vpop.f32.mrf.mxu0
        %v3831 = vadd.f32 0.0, %v3830
        %v3832 = vpop.f32.mrf.mxu0
        %3833 = vmatprep.mubr.bf16.mxu0 0
        %3834 = vmatmul.mubr.bf16.gmra.mxu0 %v3700
        %v3835 = vpop.f32.mrf.mxu0
        %v3836 = vadd.f32 0.0, %v3835
        %v3837 = vpop.f32.mrf.mxu0
        %v3838 = vpop.f32.mrf.mxu0
        %v3839 = vadd.f32 0.0, %v3838
        %v3840 = vpop.f32.mrf.mxu0
        %3841 = vmatprep.mubr.bf16.mxu0 0
        %3842 = vmatmul.mubr.bf16.gmra.mxu0 %v3701
        %v3843 = vpop.f32.mrf.mxu0
        %v3844 = vadd.f32 0.0, %v3843
        %v3845 = vpop.f32.mrf.mxu0
        %v3846 = vpop.f32.mrf.mxu0
        %v3847 = vadd.f32 0.0, %v3846
        %v3848 = vpop.f32.mrf.mxu0
        %3849 = vmatprep.mubr.bf16.mxu0 0
        %3850 = vmatmul.mubr.bf16.gmra.mxu0 %v3702
        %v3851 = vpop.f32.mrf.mxu0
        %v3852 = vadd.f32 0.0, %v3851
        %v3853 = vpop.f32.mrf.mxu0
        %v3854 = vpop.f32.mrf.mxu0
        %v3855 = vadd.f32 0.0, %v3854
        %v3856 = vpop.f32.mrf.mxu0
        %3857 = vmatprep.mubr.bf16.mxu0 0
        %3858 = vmatmul.mubr.bf16.gmra.mxu0 %v3703
        %v3859 = vpop.f32.mrf.mxu0
        %v3860 = vadd.f32 0.0, %v3859
        %v3861 = vpop.f32.mrf.mxu0
        %v3862 = vpop.f32.mrf.mxu0
        %v3863 = vadd.f32 0.0, %v3862
        %v3864 = vpop.f32.mrf.mxu0
        %3865 = vmatprep.mubr.bf16.mxu0 0
        %3866 = vmatmul.mubr.bf16.gmra.mxu0 %v3704
        %v3867 = vpop.f32.mrf.mxu0
        %v3868 = vadd.f32 0.0, %v3867
        %v3869 = vpop.f32.mrf.mxu0
        %v3870 = vpop.f32.mrf.mxu0
        %v3871 = vadd.f32 0.0, %v3870
        %v3872 = vpop.f32.mrf.mxu0
        %3873 = vmatprep.mubr.bf16.mxu0 0
        %3874 = vmatmul.mubr.bf16.gmra.mxu0 %v3705
        %v3875 = vpop.f32.mrf.mxu0
        %v3876 = vadd.f32 0.0, %v3875
        %v3877 = vpop.f32.mrf.mxu0
        %v3878 = vpop.f32.mrf.mxu0
        %v3879 = vadd.f32 0.0, %v3878
        %v3880 = vpop.f32.mrf.mxu0
        %3881 = vmatprep.mubr.bf16.mxu0 0
        %3882 = vmatmul.mubr.bf16.gmra.mxu0 %v3706
        %v3883 = vpop.f32.mrf.mxu0
        %v3884 = vadd.f32 0.0, %v3883
        %v3885 = vpop.f32.mrf.mxu0
        %v3886 = vpop.f32.mrf.mxu0
        %v3887 = vadd.f32 0.0, %v3886
        %v3888 = vpop.f32.mrf.mxu0
        %3889 = vmatprep.mubr.bf16.mxu0 0
        %3890 = vmatmul.mubr.bf16.gmra.mxu0 %v3707
        %v3891 = vpop.f32.mrf.mxu0
        %v3892 = vadd.f32 0.0, %v3891
        %v3893 = vpop.f32.mrf.mxu0
        %v3894 = vpop.f32.mrf.mxu0
        %v3895 = vadd.f32 0.0, %v3894
        %v3896 = vpop.f32.mrf.mxu0
        %3897 = vmatprep.mubr.bf16.mxu0 0
        %3898 = vmatmul.mubr.bf16.gmra.mxu0 %v3708
        %v3899 = vpop.f32.mrf.mxu0
        %v3900 = vadd.f32 0.0, %v3899
        %v3901 = vpop.f32.mrf.mxu0
        %v3902 = vpop.f32.mrf.mxu0
        %v3903 = vadd.f32 0.0, %v3902
        %v3904 = vpop.f32.mrf.mxu0
        %3905 = vmatprep.mubr.bf16.mxu0 0
        %3906 = vmatmul.mubr.bf16.gmra.mxu0 %v3709
        %v3907 = vpop.f32.mrf.mxu0
        %v3908 = vadd.f32 0.0, %v3907
        %v3909 = vpop.f32.mrf.mxu0
        %v3910 = vpop.f32.mrf.mxu0
        %v3911 = vadd.f32 0.0, %v3910
        %v3912 = vpop.f32.mrf.mxu0
        %3913 = vmatprep.mubr.bf16.mxu0 0
        %3914 = vmatmul.mubr.bf16.gmra.mxu0 %v3710
        %v3915 = vpop.f32.mrf.mxu0
        %v3916 = vadd.f32 0.0, %v3915
        %v3917 = vpop.f32.mrf.mxu0
        %v3918 = vpop.f32.mrf.mxu0
        %v3919 = vadd.f32 0.0, %v3918
        %v3920 = vpop.f32.mrf.mxu0
        %3921 = vmatprep.mubr.bf16.mxu0 0
        %3922 = vmatmul.mubr.bf16.gmra.mxu0 %v3711
        %v3923 = vpop.f32.mrf.mxu0
        %v3924 = vadd.f32 0.0, %v3923
        %v3925 = vpop.f32.mrf.mxu0
        %v3926 = vpop.f32.mrf.mxu0
        %v3927 = vadd.f32 0.0, %v3926
        %v3928 = vpop.f32.mrf.mxu0
        %3929 = vmatprep.mubr.bf16.mxu0 0
        %3930 = vmatmul.mubr.bf16.gmra.mxu0 %v3712
        %v3931 = vpop.f32.mrf.mxu0
        %v3932 = vadd.f32 0.0, %v3931
        %v3933 = vpop.f32.mrf.mxu0
        %v3934 = vpop.f32.mrf.mxu0
        %v3935 = vadd.f32 0.0, %v3934
        %v3936 = vpop.f32.mrf.mxu0
        %3937 = vdwg.mxu0
        %v3938 = vadd.f32 %v3184, %v3812
        %v3939 = vadd.f32 %v3185, %v3815
        %v3940 = vadd.f32 %v3186, %v3820
        %v3941 = vadd.f32 %v3187, %v3823
        %v3942 = vadd.f32 %v3188, %v3828
        %v3943 = vadd.f32 %v3189, %v3831
        %v3944 = vadd.f32 %v3190, %v3836
        %v3945 = vadd.f32 %v3191, %v3839
        %v3946 = vadd.f32 %v3192, %v3844
        %v3947 = vadd.f32 %v3193, %v3847
        %v3948 = vadd.f32 %v3194, %v3852
        %v3949 = vadd.f32 %v3195, %v3855
        %v3950 = vadd.f32 %v3196, %v3860
        %v3951 = vadd.f32 %v3197, %v3863
        %v3952 = vadd.f32 %v3198, %v3868
        %v3953 = vadd.f32 %v3199, %v3871
        %v3954 = vadd.f32 %v3200, %v3876
        %v3955 = vadd.f32 %v3201, %v3879
        %v3956 = vadd.f32 %v3202, %v3884
        %v3957 = vadd.f32 %v3203, %v3887
        %v3958 = vadd.f32 %v3204, %v3892
        %v3959 = vadd.f32 %v3205, %v3895
        %v3960 = vadd.f32 %v3206, %v3900
        %v3961 = vadd.f32 %v3207, %v3903
        %v3962 = vadd.f32 %v3208, %v3908
        %v3963 = vadd.f32 %v3209, %v3911
        %v3964 = vadd.f32 %v3210, %v3916
        %v3965 = vadd.f32 %v3211, %v3919
        %v3966 = vadd.f32 %v3212, %v3924
        %v3967 = vadd.f32 %v3213, %v3927
        %v3968 = vadd.f32 %v3214, %v3932
        %v3969 = vadd.f32 %v3215, %v3935
        %v3970 = vld [vmem:[%s2] sm:$0x1]
        %v3972 = vlaneseq
        %v3973 = vshrl.u32 %v3972, 7
        %v3974 = vsub.s32 0, %v3973
        %v3975 = vrot.slane %v3970, %v3974
        %v3977 = vmul.f32 %v3938, %v3975
        %v3978 = vmul.f32 %v3939, %v3975
        %v3979 = vmul.f32 %v3940, %v3975
        %v3980 = vmul.f32 %v3941, %v3975
        %v3981 = vmul.f32 %v3942, %v3975
        %v3982 = vmul.f32 %v3943, %v3975
        %v3983 = vmul.f32 %v3944, %v3975
        %v3984 = vmul.f32 %v3945, %v3975
        %v3985 = vmul.f32 %v3946, %v3975
        %v3986 = vmul.f32 %v3947, %v3975
        %v3987 = vmul.f32 %v3948, %v3975
        %v3988 = vmul.f32 %v3949, %v3975
        %v3989 = vmul.f32 %v3950, %v3975
        %v3990 = vmul.f32 %v3951, %v3975
        %v3991 = vmul.f32 %v3952, %v3975
        %v3992 = vmul.f32 %v3953, %v3975
        %v3993 = vmul.f32 %v3954, %v3975
        %v3994 = vmul.f32 %v3955, %v3975
        %v3995 = vmul.f32 %v3956, %v3975
        %v3996 = vmul.f32 %v3957, %v3975
        %v3997 = vmul.f32 %v3958, %v3975
        %v3998 = vmul.f32 %v3959, %v3975
        %v3999 = vmul.f32 %v3960, %v3975
        %v4000 = vmul.f32 %v3961, %v3975
        %v4001 = vmul.f32 %v3962, %v3975
        %v4002 = vmul.f32 %v3963, %v3975
        %v4003 = vmul.f32 %v3964, %v3975
        %v4004 = vmul.f32 %v3965, %v3975
        %v4005 = vmul.f32 %v3966, %v3975
        %v4006 = vmul.f32 %v3967, %v3975
        %v4007 = vmul.f32 %v3968, %v3975
        %v4008 = vmul.f32 %v3969, %v3975
        %v4009 = vld [vmem:[%s3] sm:$0x1]
        %v4011 = vlaneseq
        %v4012 = vshrl.u32 %v4011, 7
        %v4013 = vsub.s32 0, %v4012
        %v4014 = vrot.slane %v4009, %v4013
        %v4016 = vadd.f32 %v3977, %v4014
        %v4017 = vadd.f32 %v3978, %v4014
        %v4018 = vadd.f32 %v3979, %v4014
        %v4019 = vadd.f32 %v3980, %v4014
        %v4020 = vadd.f32 %v3981, %v4014
        %v4021 = vadd.f32 %v3982, %v4014
        %v4022 = vadd.f32 %v3983, %v4014
        %v4023 = vadd.f32 %v3984, %v4014
        %v4024 = vadd.f32 %v3985, %v4014
        %v4025 = vadd.f32 %v3986, %v4014
        %v4026 = vadd.f32 %v3987, %v4014
        %v4027 = vadd.f32 %v3988, %v4014
        %v4028 = vadd.f32 %v3989, %v4014
        %v4029 = vadd.f32 %v3990, %v4014
        %v4030 = vadd.f32 %v3991, %v4014
        %v4031 = vadd.f32 %v3992, %v4014
        %v4032 = vadd.f32 %v3993, %v4014
        %v4033 = vadd.f32 %v3994, %v4014
        %v4034 = vadd.f32 %v3995, %v4014
        %v4035 = vadd.f32 %v3996, %v4014
        %v4036 = vadd.f32 %v3997, %v4014
        %v4037 = vadd.f32 %v3998, %v4014
        %v4038 = vadd.f32 %v3999, %v4014
        %v4039 = vadd.f32 %v4000, %v4014
        %v4040 = vadd.f32 %v4001, %v4014
        %v4041 = vadd.f32 %v4002, %v4014
        %v4042 = vadd.f32 %v4003, %v4014
        %v4043 = vadd.f32 %v4004, %v4014
        %v4044 = vadd.f32 %v4005, %v4014
        %v4045 = vadd.f32 %v4006, %v4014
        %v4046 = vadd.f32 %v4007, %v4014
        %v4047 = vadd.f32 %v4008, %v4014
        %v4048 = vxor.u32 %v4016, 2147483648
        %v4049 = vxor.u32 %v4017, 2147483648
        %v4050 = vxor.u32 %v4018, 2147483648
        %v4051 = vxor.u32 %v4019, 2147483648
        %v4052 = vxor.u32 %v4020, 2147483648
        %v4053 = vxor.u32 %v4021, 2147483648
        %v4054 = vxor.u32 %v4022, 2147483648
        %v4055 = vxor.u32 %v4023, 2147483648
        %v4056 = vxor.u32 %v4024, 2147483648
        %v4057 = vxor.u32 %v4025, 2147483648
        %v4058 = vxor.u32 %v4026, 2147483648
        %v4059 = vxor.u32 %v4027, 2147483648
        %v4060 = vxor.u32 %v4028, 2147483648
        %v4061 = vxor.u32 %v4029, 2147483648
        %v4062 = vxor.u32 %v4030, 2147483648
        %v4063 = vxor.u32 %v4031, 2147483648
        %v4064 = vxor.u32 %v4032, 2147483648
        %v4065 = vxor.u32 %v4033, 2147483648
        %v4066 = vxor.u32 %v4034, 2147483648
        %v4067 = vxor.u32 %v4035, 2147483648
        %v4068 = vxor.u32 %v4036, 2147483648
        %v4069 = vxor.u32 %v4037, 2147483648
        %v4070 = vxor.u32 %v4038, 2147483648
        %v4071 = vxor.u32 %v4039, 2147483648
        %v4072 = vxor.u32 %v4040, 2147483648
        %v4073 = vxor.u32 %v4041, 2147483648
        %v4074 = vxor.u32 %v4042, 2147483648
        %v4075 = vxor.u32 %v4043, 2147483648
        %v4076 = vxor.u32 %v4044, 2147483648
        %v4077 = vxor.u32 %v4045, 2147483648
        %v4078 = vxor.u32 %v4046, 2147483648
        %v4079 = vxor.u32 %v4047, 2147483648
        %v4080 = vmul.f32 %v4048, 1.442695
        %v4081 = vpow.pop %v4080
        %v4082 = vmul.f32 %v4049, 1.442695
        %v4083 = vpow.pop %v4082
        %v4084 = vmul.f32 %v4050, 1.442695
        %v4085 = vpow.pop %v4084
        %v4086 = vmul.f32 %v4051, 1.442695
        %v4087 = vpow.pop %v4086
        %v4088 = vmul.f32 %v4052, 1.442695
        %v4089 = vpow.pop %v4088
        %v4090 = vmul.f32 %v4053, 1.442695
        %v4091 = vpow.pop %v4090
        %v4092 = vmul.f32 %v4054, 1.442695
        %v4093 = vpow.pop %v4092
        %v4094 = vmul.f32 %v4055, 1.442695
        %v4095 = vpow.pop %v4094
        %v4096 = vmul.f32 %v4056, 1.442695
        %v4097 = vpow.pop %v4096
        %v4098 = vmul.f32 %v4057, 1.442695
        %v4099 = vpow.pop %v4098
        %v4100 = vmul.f32 %v4058, 1.442695
        %v4101 = vpow.pop %v4100
        %v4102 = vmul.f32 %v4059, 1.442695
        %v4103 = vpow.pop %v4102
        %v4104 = vmul.f32 %v4060, 1.442695
        %v4105 = vpow.pop %v4104
        %v4106 = vmul.f32 %v4061, 1.442695
        %v4107 = vpow.pop %v4106
        %v4108 = vmul.f32 %v4062, 1.442695
        %v4109 = vpow.pop %v4108
        %v4110 = vmul.f32 %v4063, 1.442695
        %v4111 = vpow.pop %v4110
        %v4112 = vmul.f32 %v4064, 1.442695
        %v4113 = vpow.pop %v4112
        %v4114 = vmul.f32 %v4065, 1.442695
        %v4115 = vpow.pop %v4114
        %v4116 = vmul.f32 %v4066, 1.442695
        %v4117 = vpow.pop %v4116
        %v4118 = vmul.f32 %v4067, 1.442695
        %v4119 = vpow.pop %v4118
        %v4120 = vmul.f32 %v4068, 1.442695
        %v4121 = vpow.pop %v4120
        %v4122 = vmul.f32 %v4069, 1.442695
        %v4123 = vpow.pop %v4122
        %v4124 = vmul.f32 %v4070, 1.442695
        %v4125 = vpow.pop %v4124
        %v4126 = vmul.f32 %v4071, 1.442695
        %v4127 = vpow.pop %v4126
        %v4128 = vmul.f32 %v4072, 1.442695
        %v4129 = vpow.pop %v4128
        %v4130 = vmul.f32 %v4073, 1.442695
        %v4131 = vpow.pop %v4130
        %v4132 = vmul.f32 %v4074, 1.442695
        %v4133 = vpow.pop %v4132
        %v4134 = vmul.f32 %v4075, 1.442695
        %v4135 = vpow.pop %v4134
        %v4136 = vmul.f32 %v4076, 1.442695
        %v4137 = vpow.pop %v4136
        %v4138 = vmul.f32 %v4077, 1.442695
        %v4139 = vpow.pop %v4138
        %v4140 = vmul.f32 %v4078, 1.442695
        %v4141 = vpow.pop %v4140
        %v4142 = vmul.f32 %v4079, 1.442695
        %v4143 = vpow.pop %v4142
        %v4144 = vadd.f32 %v4081, 1.0
        %v4145 = vadd.f32 %v4083, 1.0
        %v4146 = vadd.f32 %v4085, 1.0
        %v4147 = vadd.f32 %v4087, 1.0
        %v4148 = vadd.f32 %v4089, 1.0
        %v4149 = vadd.f32 %v4091, 1.0
        %v4150 = vadd.f32 %v4093, 1.0
        %v4151 = vadd.f32 %v4095, 1.0
        %v4152 = vadd.f32 %v4097, 1.0
        %v4153 = vadd.f32 %v4099, 1.0
        %v4154 = vadd.f32 %v4101, 1.0
        %v4155 = vadd.f32 %v4103, 1.0
        %v4156 = vadd.f32 %v4105, 1.0
        %v4157 = vadd.f32 %v4107, 1.0
        %v4158 = vadd.f32 %v4109, 1.0
        %v4159 = vadd.f32 %v4111, 1.0
        %v4160 = vadd.f32 %v4113, 1.0
        %v4161 = vadd.f32 %v4115, 1.0
        %v4162 = vadd.f32 %v4117, 1.0
        %v4163 = vadd.f32 %v4119, 1.0
        %v4164 = vadd.f32 %v4121, 1.0
        %v4165 = vadd.f32 %v4123, 1.0
        %v4166 = vadd.f32 %v4125, 1.0
        %v4167 = vadd.f32 %v4127, 1.0
        %v4168 = vadd.f32 %v4129, 1.0
        %v4169 = vadd.f32 %v4131, 1.0
        %v4170 = vadd.f32 %v4133, 1.0
        %v4171 = vadd.f32 %v4135, 1.0
        %v4172 = vadd.f32 %v4137, 1.0
        %v4173 = vadd.f32 %v4139, 1.0
        %v4174 = vadd.f32 %v4141, 1.0
        %v4175 = vadd.f32 %v4143, 1.0
        %v4176 = vrcp.pop %v4144
        %v4177 = vmul.f32 1.0, %v4176
        %v4178 = vrcp.pop %v4145
        %v4179 = vmul.f32 1.0, %v4178
        %v4180 = vrcp.pop %v4146
        %v4181 = vmul.f32 1.0, %v4180
        %v4182 = vrcp.pop %v4147
        %v4183 = vmul.f32 1.0, %v4182
        %v4184 = vrcp.pop %v4148
        %v4185 = vmul.f32 1.0, %v4184
        %v4186 = vrcp.pop %v4149
        %v4187 = vmul.f32 1.0, %v4186
        %v4188 = vrcp.pop %v4150
        %v4189 = vmul.f32 1.0, %v4188
        %v4190 = vrcp.pop %v4151
        %v4191 = vmul.f32 1.0, %v4190
        %v4192 = vrcp.pop %v4152
        %v4193 = vmul.f32 1.0, %v4192
        %v4194 = vrcp.pop %v4153
        %v4195 = vmul.f32 1.0, %v4194
        %v4196 = vrcp.pop %v4154
        %v4197 = vmul.f32 1.0, %v4196
        %v4198 = vrcp.pop %v4155
        %v4199 = vmul.f32 1.0, %v4198
        %v4200 = vrcp.pop %v4156
        %v4201 = vmul.f32 1.0, %v4200
        %v4202 = vrcp.pop %v4157
        %v4203 = vmul.f32 1.0, %v4202
        %v4204 = vrcp.pop %v4158
        %v4205 = vmul.f32 1.0, %v4204
        %v4206 = vrcp.pop %v4159
        %v4207 = vmul.f32 1.0, %v4206
        %v4208 = vrcp.pop %v4160
        %v4209 = vmul.f32 1.0, %v4208
        %v4210 = vrcp.pop %v4161
        %v4211 = vmul.f32 1.0, %v4210
        %v4212 = vrcp.pop %v4162
        %v4213 = vmul.f32 1.0, %v4212
        %v4214 = vrcp.pop %v4163
        %v4215 = vmul.f32 1.0, %v4214
        %v4216 = vrcp.pop %v4164
        %v4217 = vmul.f32 1.0, %v4216
        %v4218 = vrcp.pop %v4165
        %v4219 = vmul.f32 1.0, %v4218
        %v4220 = vrcp.pop %v4166
        %v4221 = vmul.f32 1.0, %v4220
        %v4222 = vrcp.pop %v4167
        %v4223 = vmul.f32 1.0, %v4222
        %v4224 = vrcp.pop %v4168
        %v4225 = vmul.f32 1.0, %v4224
        %v4226 = vrcp.pop %v4169
        %v4227 = vmul.f32 1.0, %v4226
        %v4228 = vrcp.pop %v4170
        %v4229 = vmul.f32 1.0, %v4228
        %v4230 = vrcp.pop %v4171
        %v4231 = vmul.f32 1.0, %v4230
        %v4232 = vrcp.pop %v4172
        %v4233 = vmul.f32 1.0, %v4232
        %v4234 = vrcp.pop %v4173
        %v4235 = vmul.f32 1.0, %v4234
        %v4236 = vrcp.pop %v4174
        %v4237 = vmul.f32 1.0, %v4236
        %v4238 = vrcp.pop %v4175
        %v4239 = vmul.f32 1.0, %v4238
        %v4240 = vmul.f32 %v4016, %v4177
        %v4241 = vmul.f32 %v4017, %v4179
        %v4242 = vmul.f32 %v4018, %v4181
        %v4243 = vmul.f32 %v4019, %v4183
        %v4244 = vmul.f32 %v4020, %v4185
        %v4245 = vmul.f32 %v4021, %v4187
        %v4246 = vmul.f32 %v4022, %v4189
        %v4247 = vmul.f32 %v4023, %v4191
        %v4248 = vmul.f32 %v4024, %v4193
        %v4249 = vmul.f32 %v4025, %v4195
        %v4250 = vmul.f32 %v4026, %v4197
        %v4251 = vmul.f32 %v4027, %v4199
        %v4252 = vmul.f32 %v4028, %v4201
        %v4253 = vmul.f32 %v4029, %v4203
        %v4254 = vmul.f32 %v4030, %v4205
        %v4255 = vmul.f32 %v4031, %v4207
        %v4256 = vmul.f32 %v4032, %v4209
        %v4257 = vmul.f32 %v4033, %v4211
        %v4258 = vmul.f32 %v4034, %v4213
        %v4259 = vmul.f32 %v4035, %v4215
        %v4260 = vmul.f32 %v4036, %v4217
        %v4261 = vmul.f32 %v4037, %v4219
        %v4262 = vmul.f32 %v4038, %v4221
        %v4263 = vmul.f32 %v4039, %v4223
        %v4264 = vmul.f32 %v4040, %v4225
        %v4265 = vmul.f32 %v4041, %v4227
        %v4266 = vmul.f32 %v4042, %v4229
        %v4267 = vmul.f32 %v4043, %v4231
        %v4268 = vmul.f32 %v4044, %v4233
        %v4269 = vmul.f32 %v4045, %v4235
        %v4270 = vmul.f32 %v4046, %v4237
        %v4271 = vmul.f32 %v4047, %v4239
        %v4272 = vpack.c.bf16 %v4241, %v4240
        %v4273 = vpack.c.bf16 %v4243, %v4242
        %v4274 = vpack.c.bf16 %v4245, %v4244
        %v4275 = vpack.c.bf16 %v4247, %v4246
        %v4276 = vpack.c.bf16 %v4249, %v4248
        %v4277 = vpack.c.bf16 %v4251, %v4250
        %v4278 = vpack.c.bf16 %v4253, %v4252
        %v4279 = vpack.c.bf16 %v4255, %v4254
        %v4280 = vpack.c.bf16 %v4257, %v4256
        %v4281 = vpack.c.bf16 %v4259, %v4258
        %v4282 = vpack.c.bf16 %v4261, %v4260
        %v4283 = vpack.c.bf16 %v4263, %v4262
        %v4284 = vpack.c.bf16 %v4265, %v4264
        %v4285 = vpack.c.bf16 %v4267, %v4266
        %v4286 = vpack.c.bf16 %v4269, %v4268
        %v4287 = vpack.c.bf16 %v4271, %v4270
        %v4304 = vunpack.c.l.b16 %v4272
        %v4305 = vunpack.c.h.b16 %v4272
        %v4306 = vunpack.c.l.b16 %v4273
        %v4307 = vunpack.c.h.b16 %v4273
        %v4308 = vunpack.c.l.b16 %v4274
        %v4309 = vunpack.c.h.b16 %v4274
        %v4310 = vunpack.c.l.b16 %v4275
        %v4311 = vunpack.c.h.b16 %v4275
        %v4312 = vunpack.c.l.b16 %v4276
        %v4313 = vunpack.c.h.b16 %v4276
        %v4314 = vunpack.c.l.b16 %v4277
        %v4315 = vunpack.c.h.b16 %v4277
        %v4316 = vunpack.c.l.b16 %v4278
        %v4317 = vunpack.c.h.b16 %v4278
        %v4318 = vunpack.c.l.b16 %v4279
        %v4319 = vunpack.c.h.b16 %v4279
        %v4320 = vunpack.c.l.b16 %v4280
        %v4321 = vunpack.c.h.b16 %v4280
        %v4322 = vunpack.c.l.b16 %v4281
        %v4323 = vunpack.c.h.b16 %v4281
        %v4324 = vunpack.c.l.b16 %v4282
        %v4325 = vunpack.c.h.b16 %v4282
        %v4326 = vunpack.c.l.b16 %v4283
        %v4327 = vunpack.c.h.b16 %v4283
        %v4328 = vunpack.c.l.b16 %v4284
        %v4329 = vunpack.c.h.b16 %v4284
        %v4330 = vunpack.c.l.b16 %v4285
        %v4331 = vunpack.c.h.b16 %v4285
        %v4332 = vunpack.c.l.b16 %v4286
        %v4333 = vunpack.c.h.b16 %v4286
        %v4334 = vunpack.c.l.b16 %v4287
        %v4335 = vunpack.c.h.b16 %v4287
        %v4336 = vpack.c.b16 %v4304, %v4304
        %v4337 = vpack.c.b16 %v4305, %v4305
        %v4338 = vpack.c.b16 %v4306, %v4306
        %v4339 = vpack.c.b16 %v4307, %v4307
        %v4340 = vpack.c.b16 %v4308, %v4308
        %v4341 = vpack.c.b16 %v4309, %v4309
        %v4342 = vpack.c.b16 %v4310, %v4310
        %v4343 = vpack.c.b16 %v4311, %v4311
        %v4344 = vpack.c.b16 %v4312, %v4312
        %v4345 = vpack.c.b16 %v4313, %v4313
        %v4346 = vpack.c.b16 %v4314, %v4314
        %v4347 = vpack.c.b16 %v4315, %v4315
        %v4348 = vpack.c.b16 %v4316, %v4316
        %v4349 = vpack.c.b16 %v4317, %v4317
        %v4350 = vpack.c.b16 %v4318, %v4318
        %v4351 = vpack.c.b16 %v4319, %v4319
        %v4352 = vpack.c.b16 %v4320, %v4320
        %v4353 = vpack.c.b16 %v4321, %v4321
        %v4354 = vpack.c.b16 %v4322, %v4322
        %v4355 = vpack.c.b16 %v4323, %v4323
        %v4356 = vpack.c.b16 %v4324, %v4324
        %v4357 = vpack.c.b16 %v4325, %v4325
        %v4358 = vpack.c.b16 %v4326, %v4326
        %v4359 = vpack.c.b16 %v4327, %v4327
        %v4360 = vpack.c.b16 %v4328, %v4328
        %v4361 = vpack.c.b16 %v4329, %v4329
        %v4362 = vpack.c.b16 %v4330, %v4330
        %v4363 = vpack.c.b16 %v4331, %v4331
        %v4364 = vpack.c.b16 %v4332, %v4332
        %v4365 = vpack.c.b16 %v4333, %v4333
        %v4366 = vpack.c.b16 %v4334, %v4334
        %v4367 = vpack.c.b16 %v4335, %v4335
        %4400 = vst [vmem:[%s190] sm:$0xf] %v4336
        %4401 = vst [vmem:[%s190 + $0x4] sm:$0xf] %v4337
        %4402 = vst [vmem:[%s190 + $0x8] sm:$0xf] %v4338
        %4403 = vst [vmem:[%s190 + $0xc] sm:$0xf] %v4339
        %4404 = vst [vmem:[%s190 + $0x10] sm:$0xf] %v4340
        %4405 = vst [vmem:[%s190 + $0x14] sm:$0xf] %v4341
        %4406 = vst [vmem:[%s190 + $0x18] sm:$0xf] %v4342
        %4407 = vst [vmem:[%s190 + $0x1c] sm:$0xf] %v4343
        %4408 = vst [vmem:[%s190 + $0x20] sm:$0xf] %v4344
        %4409 = vst [vmem:[%s190 + $0x24] sm:$0xf] %v4345
        %4410 = vst [vmem:[%s190 + $0x28] sm:$0xf] %v4346
        %4411 = vst [vmem:[%s190 + $0x2c] sm:$0xf] %v4347
        %4412 = vst [vmem:[%s190 + $0x30] sm:$0xf] %v4348
        %4413 = vst [vmem:[%s190 + $0x34] sm:$0xf] %v4349
        %4414 = vst [vmem:[%s190 + $0x38] sm:$0xf] %v4350
        %4415 = vst [vmem:[%s190 + $0x3c] sm:$0xf] %v4351
        %4416 = vst [vmem:[%s190 + $0x40] sm:$0xf] %v4352
        %4417 = vst [vmem:[%s190 + $0x44] sm:$0xf] %v4353
        %4418 = vst [vmem:[%s190 + $0x48] sm:$0xf] %v4354
        %4419 = vst [vmem:[%s190 + $0x4c] sm:$0xf] %v4355
        %4420 = vst [vmem:[%s190 + $0x50] sm:$0xf] %v4356
        %4421 = vst [vmem:[%s190 + $0x54] sm:$0xf] %v4357
        %4422 = vst [vmem:[%s190 + $0x58] sm:$0xf] %v4358
        %4423 = vst [vmem:[%s190 + $0x5c] sm:$0xf] %v4359
        %4424 = vst [vmem:[%s190 + $0x60] sm:$0xf] %v4360
        %4425 = vst [vmem:[%s190 + $0x64] sm:$0xf] %v4361
        %4426 = vst [vmem:[%s190 + $0x68] sm:$0xf] %v4362
        %4427 = vst [vmem:[%s190 + $0x6c] sm:$0xf] %v4363
        %4428 = vst [vmem:[%s190 + $0x70] sm:$0xf] %v4364
        %4429 = vst [vmem:[%s190 + $0x74] sm:$0xf] %v4365
        %4430 = vst [vmem:[%s190 + $0x78] sm:$0xf] %v4366
        %4431 = vst [vmem:[%s190 + $0x7c] sm:$0xf] %v4367
        %s4432 = sand.u32 %s115, 1
        %s4433 = scalar_lea.sflag [#allocation3], %s4432
        %s4434 = sand.u32 %s115, 1
        %s4435 = smul.addr %s4434, 128
        %s4436 = scalar_lea.vmem [#allocation2], %s4435
        // Predicated region
        $region37: #{tpu_custom_call.1} parent=35 // pred_check
          %p4437 = pneg %p125
        $region38: #{tpu_custom_call.1} parent=35 // pred_check_branch
          %4439 = sbr.rel (%p4437) target = $region40
        $region39: #{tpu_custom_call.1} parent=35 // pred_region
          %s4441 = ssub.s32 2048, 2048
          %4442 = vsyncadd %s4433, %s4441
          %s4443 = smul.addr %s18, 32
          %s4444 = smul.addr %s4443, 64
          %s4445 = scalar_lea.hbm %s4, %s4444
          %s4446 = sshll.u32 %s4436, 4
          %s4447 = int_to_ptr.vmem [resolvable:$true] %s4446
          %4452 = dma.vmem_to_hbm [thread:$0]  %s4447, 2048, %s4445, %s4433, 64, 64, 4
        $region40: #{tpu_custom_call.1} parent=35 // pred_fallthru
          _
      $region36: #{tpu_custom_call.1} parent=5 // pred_fallthru
        _
      %p4453 = scmp.le.s32.totalorder 2, %s13
      // Predicated region
      $region41: #{tpu_custom_call.1} parent=5 // pred_check
        %p4454 = pneg %p4453
      $region42: #{tpu_custom_call.1} parent=5 // pred_check_branch
        %4456 = sbr.rel (%p4454) target = $region44
      $region43: #{tpu_custom_call.1} parent=5 // pred_region
        %s4457 = ssub.s32 %s13, 2
        // Predicated region
        $region45: #{tpu_custom_call.1} parent=43 // pred_check
          %p4458 = pneg %p131
        $region46: #{tpu_custom_call.1} parent=43 // pred_check_branch
          %4460 = sbr.rel (%p4458) target = $region48
        $region47: #{tpu_custom_call.1} parent=43 // pred_region
          %s4461 = sand.u32 %s116, 1
          %s4462 = scalar_lea.sflag [#allocation3], %s4461
          %s4463 = sand.u32 %s116, 1
          %s4464 = smul.addr %s4463, 128
          %s4465 = scalar_lea.vmem [#allocation2], %s4464
          %4466 = dma.done %s4462, 2048
        $region48: #{tpu_custom_call.1} parent=43 // pred_fallthru
          _
      $region44: #{tpu_custom_call.1} parent=5 // pred_fallthru
        _
    $region6: #{tpu_custom_call.1} parent=1 // loop_footer
      %s17 = sadd.s32 1, %s13
    $region7: #{tpu_custom_call.1} parent=1 // loop_footer_branch
      %12 = sbr.rel target = $region3
    $region8: #{tpu_custom_call.1} parent=1 // loop_exit
      _
    %4467 = vsyncpa [#allocation3], 1
    %s4468 = scalar_lea.sflag [#allocation3], 1
    %4469 = vsyncpa %s4468, 1

</llo_original>
